<compile_context>
chip_gen: v7x
topology: tpu7x:2x2x1
jax: 0.10.0
libtpu: 0.0.40
codegen_flags: <defaults>
</compile_context>

<pallas_src>
import jax
import jax.numpy as jnp
from jax import lax
from jax.experimental import pallas as pl
from jax.experimental.pallas import tpu as pltpu

NUM_CLASS = 3


def _conv3x3_pool_relu_kernel(x_ref, w_ref, b_ref, out_ref,
                              sh_ref, tmat_ref, smat_ref):
    """Fused 3x3 'same' conv + bias + 2x2 max-pool + ReLU for one batch element.

    x_ref   : (Cin, H+2, W)    row-padded input planes (VMEM, lane-dense W)
    w_ref   : (Cout*Cin*9,)    flattened conv weights  (SMEM, scalar reads)
    b_ref   : (Cout,)          bias                    (SMEM)
    out_ref : (Cout, H//2, W//2)
    sh_ref  : (Cin*2, H+2, W)  column-shifted planes   (VMEM scratch)
    tmat_ref: (2, RB//2, RB)   row-pool 0/1 selection  (VMEM scratch)
    smat_ref: (2, W, W//2)     col-pool 0/1 selection  (VMEM scratch)
    """
    cin, hp, W = x_ref.shape
    H = hp - 2
    cout, Ho, Wo = out_ref.shape
    RB = tmat_ref.shape[2]            # row-block height (divides H, even)
    n_rb = H // RB
    RHo = RB // 2

    # ---- per-grid-step precompute (cheap; no cross-step state, so it is safe
    #      with a "parallel" batch axis) ----
    # Exact 0/1 column-shift matrices, applied on the MXU:
    #   (p @ m_right)[:, w] = p[:, w-1]   (zero at w = 0)
    #   (p @ m_left )[:, w] = p[:, w+1]   (zero at w = W-1)
    ki = lax.broadcasted_iota(jnp.int32, (W, W), 0)
    kj = lax.broadcasted_iota(jnp.int32, (W, W), 1)
    m_right = (ki == kj - 1).astype(jnp.float32)
    m_left = (ki == kj + 1).astype(jnp.float32)
    for ci in range(cin):
        p = x_ref[ci]                                            # (H+2, W)
        sh_ref[2 * ci] = jnp.dot(p, m_right, preferred_element_type=jnp.float32)
        sh_ref[2 * ci + 1] = jnp.dot(p, m_left, preferred_element_type=jnp.float32)

    # Exact 0/1 selection matrices for the stride-2 downsample of the 2x2 pool
    # (selection-by-matmul is exact in f32 and runs on the idle MXU).
    ti = lax.broadcasted_iota(jnp.int32, (RHo, RB), 0)
    tr = lax.broadcasted_iota(jnp.int32, (RHo, RB), 1)
    tmat_ref[0] = (tr == 2 * ti).astype(jnp.float32)             # rows 0,2,4,...
    tmat_ref[1] = (tr == 2 * ti + 1).astype(jnp.float32)         # rows 1,3,5,...
    sr = lax.broadcasted_iota(jnp.int32, (W, Wo), 0)
    sj = lax.broadcasted_iota(jnp.int32, (W, Wo), 1)
    smat_ref[0] = (sr == 2 * sj).astype(jnp.float32)             # cols 0,2,4,...
    smat_ref[1] = (sr == 2 * sj + 1).astype(jnp.float32)         # cols 1,3,5,...

    # ---- main loop over output channels (register accumulation per channel) ----
    def co_body(co, carry):
        pooled_blocks = []
        for rb in range(n_rb):                       # static row blocks
            acc = jnp.zeros((RB, W), jnp.float32)    # lives in vregs
            for ci in range(cin):                    # fully unrolled
                for dy in range(3):                  # fully unrolled
                    base = (co * cin + ci) * 9 + dy * 3
                    r0 = rb * RB + dy                # static start
                    left = sh_ref[2 * ci, pl.ds(r0, RB), :]       # dx = 0 tap
                    center = x_ref[ci, pl.ds(r0, RB), :]          # dx = 1 tap
                    right = sh_ref[2 * ci + 1, pl.ds(r0, RB), :]  # dx = 2 tap
                    acc = (acc
                           + w_ref[base] * left
                           + w_ref[base + 1] * center
                           + w_ref[base + 2] * right)
            rows = jnp.maximum(
                jnp.dot(tmat_ref[0], acc, preferred_element_type=jnp.float32),
                jnp.dot(tmat_ref[1], acc, preferred_element_type=jnp.float32))
            pooled = jnp.maximum(
                jnp.dot(rows, smat_ref[0], preferred_element_type=jnp.float32),
                jnp.dot(rows, smat_ref[1], preferred_element_type=jnp.float32))
            pooled_blocks.append(pooled)
        full = (pooled_blocks[0] if n_rb == 1
                else jnp.concatenate(pooled_blocks, axis=0))      # (Ho, Wo)
        out_ref[co] = jnp.maximum(full + b_ref[co], 0.0)          # relu(pool(conv)+b)
        return carry

    lax.fori_loop(0, cout, co_body, 0)


def conv3x3_pool_relu(x, w, b, *, row_block=64):
    """x: (B, Cin, H, W), w: (Cout, Cin, 3, 3), b: (Cout,) -> (B, Cout, H//2, W//2)."""
    B, Cin, H, W = x.shape
    Cout = w.shape[0]
    Ho, Wo = H // 2, W // 2
    RB = min(H, row_block)
    assert H % RB == 0 and RB % 2 == 0 and W % 2 == 0

    xp = jnp.pad(x, ((0, 0), (0, 0), (1, 1), (0, 0)))   # pad rows only; lanes stay dense
    w_flat = w.reshape(-1)

    flops = 2 * B * Cout * Cin * 9 * H * W
    bytes_accessed = 4 * (B * Cin * (H + 2) * W + B * Cout * Ho * Wo
                          + w_flat.size + b.size)

    return pl.pallas_call(
        _conv3x3_pool_relu_kernel,
        grid=(B,),
        in_specs=[
            pl.BlockSpec((None, Cin, H + 2, W), lambda bb: (bb, 0, 0, 0)),
            pl.BlockSpec(memory_space=pltpu.MemorySpace.SMEM),
            pl.BlockSpec(memory_space=pltpu.MemorySpace.SMEM),
        ],
        out_specs=pl.BlockSpec((None, Cout, Ho, Wo), lambda bb: (bb, 0, 0, 0)),
        out_shape=jax.ShapeDtypeStruct((B, Cout, Ho, Wo), jnp.float32),
        scratch_shapes=[
            pltpu.VMEM((Cin * 2, H + 2, W), jnp.float32),   # column-shifted planes
            pltpu.VMEM((2, RB // 2, RB), jnp.float32),      # row-pool selection
            pltpu.VMEM((2, W, Wo), jnp.float32),            # col-pool selection
        ],
        cost_estimate=pl.CostEstimate(
            flops=flops, transcendentals=0, bytes_accessed=bytes_accessed),
        compiler_params=pltpu.CompilerParams(
            dimension_semantics=("parallel",)),
    )(xp, w_flat, b)


def _linear_logsoftmax_kernel(x_ref, wt_ref, b_ref, o_ref):
    """Single-step lane-dense matmul (contract K on the lane axis) + bias + log_softmax."""
    logits = lax.dot_general(
        x_ref[...], wt_ref[...],
        dimension_numbers=(((1,), (1,)), ((), ())),   # x @ wt.T, K on lanes of both
        preferred_element_type=jnp.float32) + b_ref[...]
    m = jnp.max(logits, axis=1, keepdims=True)
    lse = m + jnp.log(jnp.sum(jnp.exp(logits - m), axis=1, keepdims=True))
    o_ref[...] = logits - lse


def linear_logsoftmax(x, w, b):
    """x: (B, K), w: (K, N), b: (N,) -> log_softmax(x @ w + b, axis=1)."""
    B, K = x.shape
    N = w.shape[1]
    wt = jnp.transpose(w)                   # (N, K): lanes run along K
    flops = 2 * B * K * N
    bytes_accessed = 4 * (B * K + N * K + N + B * N)
    return pl.pallas_call(
        _linear_logsoftmax_kernel,
        grid=(1,),
        in_specs=[
            pl.BlockSpec((B, K), lambda i: (0, 0)),
            pl.BlockSpec((N, K), lambda i: (0, 0)),
            pl.BlockSpec((1, N), lambda i: (0, 0)),
        ],
        out_specs=pl.BlockSpec((B, N), lambda i: (0, 0)),
        out_shape=jax.ShapeDtypeStruct((B, N), jnp.float32),
        cost_estimate=pl.CostEstimate(
            flops=flops, transcendentals=2 * B * N, bytes_accessed=bytes_accessed),
    )(x, wt, b.reshape(1, N))


def net_forward(x, params):
    w1, b1, w2, b2, wl, bl = params
    h = conv3x3_pool_relu(x, w1, b1)        # (B, 12, 64, 64)
    h = conv3x3_pool_relu(h, w2, b2)        # (B, 24, 32, 32)
    h = h.reshape(x.shape[0], -1)           # (B, 24*32*32) -- NCHW flatten, same as torch .view
    return linear_logsoftmax(h, wl, bl)     # (B, NUM_CLASS) log-probs


def net_reference(x, params):
    """Pure-JAX reference mirroring the PyTorch forward."""
    w1, b1, w2, b2, wl, bl = params

    def conv(x, w, b):
        y = lax.conv_general_dilated(
            x, w, window_strides=(1, 1), padding=((1, 1), (1, 1)),
            dimension_numbers=("NCHW", "OIHW", "NCHW"))
        return y + b[None, :, None, None]

    def pool(x):
        return lax.reduce_window(x, -jnp.inf, lax.max,
                                 (1, 1, 2, 2), (1, 1, 2, 2), "VALID")

    h = jnp.maximum(pool(conv(x, w1, b1)), 0.0)
    h = jnp.maximum(pool(conv(h, w2, b2)), 0.0)
    h = h.reshape(x.shape[0], -1)
    logits = h @ wl + bl
    return jax.nn.log_softmax(logits, axis=1)


if __name__ == "__main__":
    key = jax.random.PRNGKey(0)
    kx, k1, k2, k3, k4, k5, k6 = jax.random.split(key, 7)

    # The Linear layer fixes in_features = 32*32*24 -> spatial size must be
    # 128x128 (two 2x2 pools: 128 -> 64 -> 32).  Keep batch small.
    B = 2
    x = jax.random.normal(kx, (B, 3, 128, 128), jnp.float32)

    # Deterministic synthetic parameters (shapes from Net.__init__).
    w1 = 0.05 * jax.random.normal(k1, (12, 3, 3, 3), jnp.float32)
    b1 = 0.05 * jax.random.normal(k2, (12,), jnp.float32)
    w2 = 0.05 * jax.random.normal(k3, (24, 12, 3, 3), jnp.float32)
    b2 = 0.05 * jax.random.normal(k4, (24,), jnp.float32)
    wl = 0.01 * jax.random.normal(k5, (24 * 32 * 32, NUM_CLASS), jnp.float32)  # (in, out)
    bl = 0.01 * jax.random.normal(k6, (NUM_CLASS,), jnp.float32)
    params = (w1, b1, w2, b2, wl, bl)

    out = net_forward(x, params)
    out = jax.block_until_ready(out)
    assert out.shape == (B, NUM_CLASS)

    ref = net_reference(x, params)
    max_err = float(jnp.max(jnp.abs(out - ref)))
    if max_err > 2e-3:
        raise RuntimeError(f"mismatch vs reference, max abs err = {max_err}")

    print("KERNEL_OK")
</pallas_src>

<mosaic_0001>
module attributes {stable_mosaic.version = 11 : i64} {
  func.func @_conv3x3_pool_relu_kernel(%arg0: i32, %arg1: memref<1x3x130x128xf32, #tpu.memory_space<vmem>>, %arg2: memref<324xf32, #tpu.memory_space<smem>>, %arg3: memref<12xf32, #tpu.memory_space<smem>>, %arg4: memref<1x12x64x64xf32, #tpu.memory_space<vmem>>, %arg5: memref<6x130x128xf32, #tpu.memory_space<vmem>>, %arg6: memref<2x32x64xf32, #tpu.memory_space<vmem>>, %arg7: memref<2x128x64xf32, #tpu.memory_space<vmem>>) attributes {dimension_semantics = [#tpu.dimension_semantics<parallel>], iteration_bounds = array<i64: 2>, scalar_prefetch = 0 : i64, scratch_operands = 3 : i64, tpu.core_type = #tpu.core_type<tc>, window_params = [{transform_indices = @transform_0, window_bounds = array<i64: 1, 3, 130, 128>}, {transform_indices = @transform_1, window_bounds = array<i64: 324>}, {transform_indices = @transform_2, window_bounds = array<i64: 12>}, {transform_indices = @transform_3, window_bounds = array<i64: 1, 12, 64, 64>}]} {
    %0 = tpu.iota {dimensions = array<i32: 0>} : vector<128x128xi32>
    %1 = tpu.iota {dimensions = array<i32: 1>} : vector<128x128xi32>
    %c1_i32 = arith.constant 1 : i32
    %2 = vector.broadcast %c1_i32 : i32 to vector<128x128xi32>
    %3 = arith.subi %1, %2 : vector<128x128xi32>
    %4 = arith.cmpi eq, %0, %3 : vector<128x128xi32>
    %5 = arith.extui %4 : vector<128x128xi1> to vector<128x128xi32>
    %6 = arith.sitofp %5 : vector<128x128xi32> to vector<128x128xf32>
    %c1_i32_0 = arith.constant 1 : i32
    %7 = vector.broadcast %c1_i32_0 : i32 to vector<128x128xi32>
    %8 = arith.addi %1, %7 : vector<128x128xi32>
    %9 = arith.cmpi eq, %0, %8 : vector<128x128xi32>
    %10 = arith.extui %9 : vector<128x128xi1> to vector<128x128xi32>
    %11 = arith.sitofp %10 : vector<128x128xi32> to vector<128x128xf32>
    %c0 = arith.constant 0 : index
    %c0_1 = arith.constant 0 : index
    %c0_2 = arith.constant 0 : index
    %c0_3 = arith.constant 0 : index
    %12 = vector.load %arg1[%c0, %c0_1, %c0_2, %c0_3] : memref<1x3x130x128xf32, #tpu.memory_space<vmem>>, vector<1x1x130x128xf32>
    %13 = vector.shape_cast %12 : vector<1x1x130x128xf32> to vector<130x128xf32>
    %cst = arith.constant dense<0.000000e+00> : vector<130x128xf32>
    %14 = tpu.matmul %13, %6, %cst {dimension_numbers = #tpu.dot_dimension_numbers<[1], [0], [0], [1], [0, 0, 1, 1], [], []>} : vector<130x128xf32>, vector<128x128xf32>, vector<130x128xf32> -> vector<130x128xf32>
    %c0_4 = arith.constant 0 : index
    %c0_5 = arith.constant 0 : index
    %c0_6 = arith.constant 0 : index
    %15 = vector.load %arg5[%c0_4, %c0_5, %c0_6] : memref<6x130x128xf32, #tpu.memory_space<vmem>>, vector<1x130x128xf32>
    %16 = vector.shape_cast %15 : vector<1x130x128xf32> to vector<130x128xf32>
    %17 = vector.shape_cast %14 : vector<130x128xf32> to vector<1x130x128xf32>
    tpu.vector_store %arg5[%c0_4, %c0_5, %c0_6], %17 {strides = array<i32>} : memref<6x130x128xf32, #tpu.memory_space<vmem>>, vector<1x130x128xf32>,
    %cst_7 = arith.constant dense<0.000000e+00> : vector<130x128xf32>
    %18 = tpu.matmul %13, %11, %cst_7 {dimension_numbers = #tpu.dot_dimension_numbers<[1], [0], [0], [1], [0, 0, 1, 1], [], []>} : vector<130x128xf32>, vector<128x128xf32>, vector<130x128xf32> -> vector<130x128xf32>
    %c1 = arith.constant 1 : index
    %c0_8 = arith.constant 0 : index
    %c0_9 = arith.constant 0 : index
    %19 = vector.load %arg5[%c1, %c0_8, %c0_9] : memref<6x130x128xf32, #tpu.memory_space<vmem>>, vector<1x130x128xf32>
    %20 = vector.shape_cast %19 : vector<1x130x128xf32> to vector<130x128xf32>
    %21 = vector.shape_cast %18 : vector<130x128xf32> to vector<1x130x128xf32>
    tpu.vector_store %arg5[%c1, %c0_8, %c0_9], %21 {strides = array<i32>} : memref<6x130x128xf32, #tpu.memory_space<vmem>>, vector<1x130x128xf32>,
    %c0_10 = arith.constant 0 : index
    %c1_11 = arith.constant 1 : index
    %c0_12 = arith.constant 0 : index
    %c0_13 = arith.constant 0 : index
    %22 = vector.load %arg1[%c0_10, %c1_11, %c0_12, %c0_13] : memref<1x3x130x128xf32, #tpu.memory_space<vmem>>, vector<1x1x130x128xf32>
    %23 = vector.shape_cast %22 : vector<1x1x130x128xf32> to vector<130x128xf32>
    %cst_14 = arith.constant dense<0.000000e+00> : vector<130x128xf32>
    %24 = tpu.matmul %23, %6, %cst_14 {dimension_numbers = #tpu.dot_dimension_numbers<[1], [0], [0], [1], [0, 0, 1, 1], [], []>} : vector<130x128xf32>, vector<128x128xf32>, vector<130x128xf32> -> vector<130x128xf32>
    %c2 = arith.constant 2 : index
    %c0_15 = arith.constant 0 : index
    %c0_16 = arith.constant 0 : index
    %25 = vector.load %arg5[%c2, %c0_15, %c0_16] : memref<6x130x128xf32, #tpu.memory_space<vmem>>, vector<1x130x128xf32>
    %26 = vector.shape_cast %25 : vector<1x130x128xf32> to vector<130x128xf32>
    %27 = vector.shape_cast %24 : vector<130x128xf32> to vector<1x130x128xf32>
    tpu.vector_store %arg5[%c2, %c0_15, %c0_16], %27 {strides = array<i32>} : memref<6x130x128xf32, #tpu.memory_space<vmem>>, vector<1x130x128xf32>,
    %cst_17 = arith.constant dense<0.000000e+00> : vector<130x128xf32>
    %28 = tpu.matmul %23, %11, %cst_17 {dimension_numbers = #tpu.dot_dimension_numbers<[1], [0], [0], [1], [0, 0, 1, 1], [], []>} : vector<130x128xf32>, vector<128x128xf32>, vector<130x128xf32> -> vector<130x128xf32>
    %c3 = arith.constant 3 : index
    %c0_18 = arith.constant 0 : index
    %c0_19 = arith.constant 0 : index
    %29 = vector.load %arg5[%c3, %c0_18, %c0_19] : memref<6x130x128xf32, #tpu.memory_space<vmem>>, vector<1x130x128xf32>
    %30 = vector.shape_cast %29 : vector<1x130x128xf32> to vector<130x128xf32>
    %31 = vector.shape_cast %28 : vector<130x128xf32> to vector<1x130x128xf32>
    tpu.vector_store %arg5[%c3, %c0_18, %c0_19], %31 {strides = array<i32>} : memref<6x130x128xf32, #tpu.memory_space<vmem>>, vector<1x130x128xf32>,
    %c0_20 = arith.constant 0 : index
    %c2_21 = arith.constant 2 : index
    %c0_22 = arith.constant 0 : index
    %c0_23 = arith.constant 0 : index
    %32 = vector.load %arg1[%c0_20, %c2_21, %c0_22, %c0_23] : memref<1x3x130x128xf32, #tpu.memory_space<vmem>>, vector<1x1x130x128xf32>
    %33 = vector.shape_cast %32 : vector<1x1x130x128xf32> to vector<130x128xf32>
    %cst_24 = arith.constant dense<0.000000e+00> : vector<130x128xf32>
    %34 = tpu.matmul %33, %6, %cst_24 {dimension_numbers = #tpu.dot_dimension_numbers<[1], [0], [0], [1], [0, 0, 1, 1], [], []>} : vector<130x128xf32>, vector<128x128xf32>, vector<130x128xf32> -> vector<130x128xf32>
    %c4 = arith.constant 4 : index
    %c0_25 = arith.constant 0 : index
    %c0_26 = arith.constant 0 : index
    %35 = vector.load %arg5[%c4, %c0_25, %c0_26] : memref<6x130x128xf32, #tpu.memory_space<vmem>>, vector<1x130x128xf32>
    %36 = vector.shape_cast %35 : vector<1x130x128xf32> to vector<130x128xf32>
    %37 = vector.shape_cast %34 : vector<130x128xf32> to vector<1x130x128xf32>
    tpu.vector_store %arg5[%c4, %c0_25, %c0_26], %37 {strides = array<i32>} : memref<6x130x128xf32, #tpu.memory_space<vmem>>, vector<1x130x128xf32>,
    %cst_27 = arith.constant dense<0.000000e+00> : vector<130x128xf32>
    %38 = tpu.matmul %33, %11, %cst_27 {dimension_numbers = #tpu.dot_dimension_numbers<[1], [0], [0], [1], [0, 0, 1, 1], [], []>} : vector<130x128xf32>, vector<128x128xf32>, vector<130x128xf32> -> vector<130x128xf32>
    %c5 = arith.constant 5 : index
    %c0_28 = arith.constant 0 : index
    %c0_29 = arith.constant 0 : index
    %39 = vector.load %arg5[%c5, %c0_28, %c0_29] : memref<6x130x128xf32, #tpu.memory_space<vmem>>, vector<1x130x128xf32>
    %40 = vector.shape_cast %39 : vector<1x130x128xf32> to vector<130x128xf32>
    %41 = vector.shape_cast %38 : vector<130x128xf32> to vector<1x130x128xf32>
    tpu.vector_store %arg5[%c5, %c0_28, %c0_29], %41 {strides = array<i32>} : memref<6x130x128xf32, #tpu.memory_space<vmem>>, vector<1x130x128xf32>,
    %42 = tpu.iota {dimensions = array<i32: 0>} : vector<32x64xi32>
    %43 = tpu.iota {dimensions = array<i32: 1>} : vector<32x64xi32>
    %c2_i32 = arith.constant 2 : i32
    %44 = vector.broadcast %c2_i32 : i32 to vector<32x64xi32>
    %45 = arith.muli %44, %42 : vector<32x64xi32>
    %46 = arith.cmpi eq, %43, %45 : vector<32x64xi32>
    %47 = arith.extui %46 : vector<32x64xi1> to vector<32x64xi32>
    %48 = arith.sitofp %47 : vector<32x64xi32> to vector<32x64xf32>
    %c0_30 = arith.constant 0 : index
    %c0_31 = arith.constant 0 : index
    %c0_32 = arith.constant 0 : index
    %49 = vector.load %arg6[%c0_30, %c0_31, %c0_32] : memref<2x32x64xf32, #tpu.memory_space<vmem>>, vector<1x32x64xf32>
    %50 = vector.shape_cast %49 : vector<1x32x64xf32> to vector<32x64xf32>
    %51 = vector.shape_cast %48 : vector<32x64xf32> to vector<1x32x64xf32>
    tpu.vector_store %arg6[%c0_30, %c0_31, %c0_32], %51 {strides = array<i32>} : memref<2x32x64xf32, #tpu.memory_space<vmem>>, vector<1x32x64xf32>,
    %c2_i32_33 = arith.constant 2 : i32
    %52 = vector.broadcast %c2_i32_33 : i32 to vector<32x64xi32>
    %53 = arith.muli %52, %42 : vector<32x64xi32>
    %c1_i32_34 = arith.constant 1 : i32
    %54 = vector.broadcast %c1_i32_34 : i32 to vector<32x64xi32>
    %55 = arith.addi %53, %54 : vector<32x64xi32>
    %56 = arith.cmpi eq, %43, %55 : vector<32x64xi32>
    %57 = arith.extui %56 : vector<32x64xi1> to vector<32x64xi32>
    %58 = arith.sitofp %57 : vector<32x64xi32> to vector<32x64xf32>
    %c1_35 = arith.constant 1 : index
    %c0_36 = arith.constant 0 : index
    %c0_37 = arith.constant 0 : index
    %59 = vector.load %arg6[%c1_35, %c0_36, %c0_37] : memref<2x32x64xf32, #tpu.memory_space<vmem>>, vector<1x32x64xf32>
    %60 = vector.shape_cast %59 : vector<1x32x64xf32> to vector<32x64xf32>
    %61 = vector.shape_cast %58 : vector<32x64xf32> to vector<1x32x64xf32>
    tpu.vector_store %arg6[%c1_35, %c0_36, %c0_37], %61 {strides = array<i32>} : memref<2x32x64xf32, #tpu.memory_space<vmem>>, vector<1x32x64xf32>,
    %62 = tpu.iota {dimensions = array<i32: 0>} : vector<128x64xi32>
    %63 = tpu.iota {dimensions = array<i32: 1>} : vector<128x64xi32>
    %c2_i32_38 = arith.constant 2 : i32
    %64 = vector.broadcast %c2_i32_38 : i32 to vector<128x64xi32>
    %65 = arith.muli %64, %63 : vector<128x64xi32>
    %66 = arith.cmpi eq, %62, %65 : vector<128x64xi32>
    %67 = arith.extui %66 : vector<128x64xi1> to vector<128x64xi32>
    %68 = arith.sitofp %67 : vector<128x64xi32> to vector<128x64xf32>
    %c0_39 = arith.constant 0 : index
    %c0_40 = arith.constant 0 : index
    %c0_41 = arith.constant 0 : index
    %69 = vector.load %arg7[%c0_39, %c0_40, %c0_41] : memref<2x128x64xf32, #tpu.memory_space<vmem>>, vector<1x128x64xf32>
    %70 = vector.shape_cast %69 : vector<1x128x64xf32> to vector<128x64xf32>
    %71 = vector.shape_cast %68 : vector<128x64xf32> to vector<1x128x64xf32>
    tpu.vector_store %arg7[%c0_39, %c0_40, %c0_41], %71 {strides = array<i32>} : memref<2x128x64xf32, #tpu.memory_space<vmem>>, vector<1x128x64xf32>,
    %c2_i32_42 = arith.constant 2 : i32
    %72 = vector.broadcast %c2_i32_42 : i32 to vector<128x64xi32>
    %73 = arith.muli %72, %63 : vector<128x64xi32>
    %c1_i32_43 = arith.constant 1 : i32
    %74 = vector.broadcast %c1_i32_43 : i32 to vector<128x64xi32>
    %75 = arith.addi %73, %74 : vector<128x64xi32>
    %76 = arith.cmpi eq, %62, %75 : vector<128x64xi32>
    %77 = arith.extui %76 : vector<128x64xi1> to vector<128x64xi32>
    %78 = arith.sitofp %77 : vector<128x64xi32> to vector<128x64xf32>
    %c1_44 = arith.constant 1 : index
    %c0_45 = arith.constant 0 : index
    %c0_46 = arith.constant 0 : index
    %79 = vector.load %arg7[%c1_44, %c0_45, %c0_46] : memref<2x128x64xf32, #tpu.memory_space<vmem>>, vector<1x128x64xf32>
    %80 = vector.shape_cast %79 : vector<1x128x64xf32> to vector<128x64xf32>
    %81 = vector.shape_cast %78 : vector<128x64xf32> to vector<1x128x64xf32>
    tpu.vector_store %arg7[%c1_44, %c0_45, %c0_46], %81 {strides = array<i32>} : memref<2x128x64xf32, #tpu.memory_space<vmem>>, vector<1x128x64xf32>,
    %c0_i32 = arith.constant 0 : i32
    %c12_i32 = arith.constant 12 : i32
    %82 = arith.addi %c0_i32, %c12_i32 : i32
    %c1_i32_47 = arith.constant 1 : i32
    scf.for %arg8 = %c0_i32 to %82 step %c1_i32_47  : i32 {
      %cst_49 = arith.constant 0.000000e+00 : f32
      %83 = vector.broadcast %cst_49 : f32 to vector<64x128xf32>
      %c3_i32 = arith.constant 3 : i32
      %84 = arith.muli %arg8, %c3_i32 : i32
      %c0_i32_50 = arith.constant 0 : i32
      %85 = arith.addi %84, %c0_i32_50 : i32
      %c9_i32 = arith.constant 9 : i32
      %86 = arith.muli %85, %c9_i32 : i32
      %c0_i32_51 = arith.constant 0 : i32
      %87 = arith.addi %86, %c0_i32_51 : i32
      %c0_52 = arith.constant 0 : index
      %c0_53 = arith.constant 0 : index
      %c0_54 = arith.constant 0 : index
      %88 = vector.load %arg5[%c0_52, %c0_53, %c0_54] : memref<6x130x128xf32, #tpu.memory_space<vmem>>, vector<1x64x128xf32>
      %89 = vector.shape_cast %88 : vector<1x64x128xf32> to vector<64x128xf32>
      %c0_55 = arith.constant 0 : index
      %c0_56 = arith.constant 0 : index
      %c0_57 = arith.constant 0 : index
      %c0_58 = arith.constant 0 : index
      %90 = vector.load %arg1[%c0_55, %c0_56, %c0_57, %c0_58] : memref<1x3x130x128xf32, #tpu.memory_space<vmem>>, vector<1x1x64x128xf32>
      %91 = vector.shape_cast %90 : vector<1x1x64x128xf32> to vector<64x128xf32>
      %c1_59 = arith.constant 1 : index
      %c0_60 = arith.constant 0 : index
      %c0_61 = arith.constant 0 : index
      %92 = vector.load %arg5[%c1_59, %c0_60, %c0_61] : memref<6x130x128xf32, #tpu.memory_space<vmem>>, vector<1x64x128xf32>
      %93 = vector.shape_cast %92 : vector<1x64x128xf32> to vector<64x128xf32>
      %94 = arith.index_cast %87 : i32 to index
      %95 = memref.load %arg2[%94] : memref<324xf32, #tpu.memory_space<smem>>
      %96 = vector.broadcast %95 : f32 to vector<64x128xf32>
      %97 = arith.mulf %96, %89 : vector<64x128xf32>
      %98 = arith.addf %83, %97 : vector<64x128xf32>
      %c1_i32_62 = arith.constant 1 : i32
      %99 = arith.addi %87, %c1_i32_62 : i32
      %100 = arith.index_cast %99 : i32 to index
      %101 = memref.load %arg2[%100] : memref<324xf32, #tpu.memory_space<smem>>
      %102 = vector.broadcast %101 : f32 to vector<64x128xf32>
      %103 = arith.mulf %102, %91 : vector<64x128xf32>
      %104 = arith.addf %98, %103 : vector<64x128xf32>
      %c2_i32_63 = arith.constant 2 : i32
      %105 = arith.addi %87, %c2_i32_63 : i32
      %106 = arith.index_cast %105 : i32 to index
      %107 = memref.load %arg2[%106] : memref<324xf32, #tpu.memory_space<smem>>
      %108 = vector.broadcast %107 : f32 to vector<64x128xf32>
      %109 = arith.mulf %108, %93 : vector<64x128xf32>
      %110 = arith.addf %104, %109 : vector<64x128xf32>
      %c3_i32_64 = arith.constant 3 : i32
      %111 = arith.muli %arg8, %c3_i32_64 : i32
      %c0_i32_65 = arith.constant 0 : i32
      %112 = arith.addi %111, %c0_i32_65 : i32
      %c9_i32_66 = arith.constant 9 : i32
      %113 = arith.muli %112, %c9_i32_66 : i32
      %c3_i32_67 = arith.constant 3 : i32
      %114 = arith.addi %113, %c3_i32_67 : i32
      %c0_68 = arith.constant 0 : index
      %c1_69 = arith.constant 1 : index
      %c0_70 = arith.constant 0 : index
      %115 = vector.load %arg5[%c0_68, %c1_69, %c0_70] : memref<6x130x128xf32, #tpu.memory_space<vmem>>, vector<1x64x128xf32>
      %116 = vector.shape_cast %115 : vector<1x64x128xf32> to vector<64x128xf32>
      %c0_71 = arith.constant 0 : index
      %c0_72 = arith.constant 0 : index
      %c1_73 = arith.constant 1 : index
      %c0_74 = arith.constant 0 : index
      %117 = vector.load %arg1[%c0_71, %c0_72, %c1_73, %c0_74] : memref<1x3x130x128xf32, #tpu.memory_space<vmem>>, vector<1x1x64x128xf32>
      %118 = vector.shape_cast %117 : vector<1x1x64x128xf32> to vector<64x128xf32>
      %c1_75 = arith.constant 1 : index
      %c1_76 = arith.constant 1 : index
      %c0_77 = arith.constant 0 : index
      %119 = vector.load %arg5[%c1_75, %c1_76, %c0_77] : memref<6x130x128xf32, #tpu.memory_space<vmem>>, vector<1x64x128xf32>
      %120 = vector.shape_cast %119 : vector<1x64x128xf32> to vector<64x128xf32>
      %121 = arith.index_cast %114 : i32 to index
      %122 = memref.load %arg2[%121] : memref<324xf32, #tpu.memory_space<smem>>
      %123 = vector.broadcast %122 : f32 to vector<64x128xf32>
      %124 = arith.mulf %123, %116 : vector<64x128xf32>
      %125 = arith.addf %110, %124 : vector<64x128xf32>
      %c1_i32_78 = arith.constant 1 : i32
      %126 = arith.addi %114, %c1_i32_78 : i32
      %127 = arith.index_cast %126 : i32 to index
      %128 = memref.load %arg2[%127] : memref<324xf32, #tpu.memory_space<smem>>
      %129 = vector.broadcast %128 : f32 to vector<64x128xf32>
      %130 = arith.mulf %129, %118 : vector<64x128xf32>
      %131 = arith.addf %125, %130 : vector<64x128xf32>
      %c2_i32_79 = arith.constant 2 : i32
      %132 = arith.addi %114, %c2_i32_79 : i32
      %133 = arith.index_cast %132 : i32 to index
      %134 = memref.load %arg2[%133] : memref<324xf32, #tpu.memory_space<smem>>
      %135 = vector.broadcast %134 : f32 to vector<64x128xf32>
      %136 = arith.mulf %135, %120 : vector<64x128xf32>
      %137 = arith.addf %131, %136 : vector<64x128xf32>
      %c3_i32_80 = arith.constant 3 : i32
      %138 = arith.muli %arg8, %c3_i32_80 : i32
      %c0_i32_81 = arith.constant 0 : i32
      %139 = arith.addi %138, %c0_i32_81 : i32
      %c9_i32_82 = arith.constant 9 : i32
      %140 = arith.muli %139, %c9_i32_82 : i32
      %c6_i32 = arith.constant 6 : i32
      %141 = arith.addi %140, %c6_i32 : i32
      %c0_83 = arith.constant 0 : index
      %c2_84 = arith.constant 2 : index
      %c0_85 = arith.constant 0 : index
      %142 = vector.load %arg5[%c0_83, %c2_84, %c0_85] : memref<6x130x128xf32, #tpu.memory_space<vmem>>, vector<1x64x128xf32>
      %143 = vector.shape_cast %142 : vector<1x64x128xf32> to vector<64x128xf32>
      %c0_86 = arith.constant 0 : index
      %c0_87 = arith.constant 0 : index
      %c2_88 = arith.constant 2 : index
      %c0_89 = arith.constant 0 : index
      %144 = vector.load %arg1[%c0_86, %c0_87, %c2_88, %c0_89] : memref<1x3x130x128xf32, #tpu.memory_space<vmem>>, vector<1x1x64x128xf32>
      %145 = vector.shape_cast %144 : vector<1x1x64x128xf32> to vector<64x128xf32>
      %c1_90 = arith.constant 1 : index
      %c2_91 = arith.constant 2 : index
      %c0_92 = arith.constant 0 : index
      %146 = vector.load %arg5[%c1_90, %c2_91, %c0_92] : memref<6x130x128xf32, #tpu.memory_space<vmem>>, vector<1x64x128xf32>
      %147 = vector.shape_cast %146 : vector<1x64x128xf32> to vector<64x128xf32>
      %148 = arith.index_cast %141 : i32 to index
      %149 = memref.load %arg2[%148] : memref<324xf32, #tpu.memory_space<smem>>
      %150 = vector.broadcast %149 : f32 to vector<64x128xf32>
      %151 = arith.mulf %150, %143 : vector<64x128xf32>
      %152 = arith.addf %137, %151 : vector<64x128xf32>
      %c1_i32_93 = arith.constant 1 : i32
      %153 = arith.addi %141, %c1_i32_93 : i32
      %154 = arith.index_cast %153 : i32 to index
      %155 = memref.load %arg2[%154] : memref<324xf32, #tpu.memory_space<smem>>
      %156 = vector.broadcast %155 : f32 to vector<64x128xf32>
      %157 = arith.mulf %156, %145 : vector<64x128xf32>
      %158 = arith.addf %152, %157 : vector<64x128xf32>
      %c2_i32_94 = arith.constant 2 : i32
      %159 = arith.addi %141, %c2_i32_94 : i32
      %160 = arith.index_cast %159 : i32 to index
      %161 = memref.load %arg2[%160] : memref<324xf32, #tpu.memory_space<smem>>
      %162 = vector.broadcast %161 : f32 to vector<64x128xf32>
      %163 = arith.mulf %162, %147 : vector<64x128xf32>
      %164 = arith.addf %158, %163 : vector<64x128xf32>
      %c3_i32_95 = arith.constant 3 : i32
      %165 = arith.muli %arg8, %c3_i32_95 : i32
      %c1_i32_96 = arith.constant 1 : i32
      %166 = arith.addi %165, %c1_i32_96 : i32
      %c9_i32_97 = arith.constant 9 : i32
      %167 = arith.muli %166, %c9_i32_97 : i32
      %c0_i32_98 = arith.constant 0 : i32
      %168 = arith.addi %167, %c0_i32_98 : i32
      %c2_99 = arith.constant 2 : index
      %c0_100 = arith.constant 0 : index
      %c0_101 = arith.constant 0 : index
      %169 = vector.load %arg5[%c2_99, %c0_100, %c0_101] : memref<6x130x128xf32, #tpu.memory_space<vmem>>, vector<1x64x128xf32>
      %170 = vector.shape_cast %169 : vector<1x64x128xf32> to vector<64x128xf32>
      %c0_102 = arith.constant 0 : index
      %c1_103 = arith.constant 1 : index
      %c0_104 = arith.constant 0 : index
      %c0_105 = arith.constant 0 : index
      %171 = vector.load %arg1[%c0_102, %c1_103, %c0_104, %c0_105] : memref<1x3x130x128xf32, #tpu.memory_space<vmem>>, vector<1x1x64x128xf32>
      %172 = vector.shape_cast %171 : vector<1x1x64x128xf32> to vector<64x128xf32>
      %c3_106 = arith.constant 3 : index
      %c0_107 = arith.constant 0 : index
      %c0_108 = arith.constant 0 : index
      %173 = vector.load %arg5[%c3_106, %c0_107, %c0_108] : memref<6x130x128xf32, #tpu.memory_space<vmem>>, vector<1x64x128xf32>
      %174 = vector.shape_cast %173 : vector<1x64x128xf32> to vector<64x128xf32>
      %175 = arith.index_cast %168 : i32 to index
      %176 = memref.load %arg2[%175] : memref<324xf32, #tpu.memory_space<smem>>
      %177 = vector.broadcast %176 : f32 to vector<64x128xf32>
      %178 = arith.mulf %177, %170 : vector<64x128xf32>
      %179 = arith.addf %164, %178 : vector<64x128xf32>
      %c1_i32_109 = arith.constant 1 : i32
      %180 = arith.addi %168, %c1_i32_109 : i32
      %181 = arith.index_cast %180 : i32 to index
      %182 = memref.load %arg2[%181] : memref<324xf32, #tpu.memory_space<smem>>
      %183 = vector.broadcast %182 : f32 to vector<64x128xf32>
      %184 = arith.mulf %183, %172 : vector<64x128xf32>
      %185 = arith.addf %179, %184 : vector<64x128xf32>
      %c2_i32_110 = arith.constant 2 : i32
      %186 = arith.addi %168, %c2_i32_110 : i32
      %187 = arith.index_cast %186 : i32 to index
      %188 = memref.load %arg2[%187] : memref<324xf32, #tpu.memory_space<smem>>
      %189 = vector.broadcast %188 : f32 to vector<64x128xf32>
      %190 = arith.mulf %189, %174 : vector<64x128xf32>
      %191 = arith.addf %185, %190 : vector<64x128xf32>
      %c3_i32_111 = arith.constant 3 : i32
      %192 = arith.muli %arg8, %c3_i32_111 : i32
      %c1_i32_112 = arith.constant 1 : i32
      %193 = arith.addi %192, %c1_i32_112 : i32
      %c9_i32_113 = arith.constant 9 : i32
      %194 = arith.muli %193, %c9_i32_113 : i32
      %c3_i32_114 = arith.constant 3 : i32
      %195 = arith.addi %194, %c3_i32_114 : i32
      %c2_115 = arith.constant 2 : index
      %c1_116 = arith.constant 1 : index
      %c0_117 = arith.constant 0 : index
      %196 = vector.load %arg5[%c2_115, %c1_116, %c0_117] : memref<6x130x128xf32, #tpu.memory_space<vmem>>, vector<1x64x128xf32>
      %197 = vector.shape_cast %196 : vector<1x64x128xf32> to vector<64x128xf32>
      %c0_118 = arith.constant 0 : index
      %c1_119 = arith.constant 1 : index
      %c1_120 = arith.constant 1 : index
      %c0_121 = arith.constant 0 : index
      %198 = vector.load %arg1[%c0_118, %c1_119, %c1_120, %c0_121] : memref<1x3x130x128xf32, #tpu.memory_space<vmem>>, vector<1x1x64x128xf32>
      %199 = vector.shape_cast %198 : vector<1x1x64x128xf32> to vector<64x128xf32>
      %c3_122 = arith.constant 3 : index
      %c1_123 = arith.constant 1 : index
      %c0_124 = arith.constant 0 : index
      %200 = vector.load %arg5[%c3_122, %c1_123, %c0_124] : memref<6x130x128xf32, #tpu.memory_space<vmem>>, vector<1x64x128xf32>
      %201 = vector.shape_cast %200 : vector<1x64x128xf32> to vector<64x128xf32>
      %202 = arith.index_cast %195 : i32 to index
      %203 = memref.load %arg2[%202] : memref<324xf32, #tpu.memory_space<smem>>
      %204 = vector.broadcast %203 : f32 to vector<64x128xf32>
      %205 = arith.mulf %204, %197 : vector<64x128xf32>
      %206 = arith.addf %191, %205 : vector<64x128xf32>
      %c1_i32_125 = arith.constant 1 : i32
      %207 = arith.addi %195, %c1_i32_125 : i32
      %208 = arith.index_cast %207 : i32 to index
      %209 = memref.load %arg2[%208] : memref<324xf32, #tpu.memory_space<smem>>
      %210 = vector.broadcast %209 : f32 to vector<64x128xf32>
      %211 = arith.mulf %210, %199 : vector<64x128xf32>
      %212 = arith.addf %206, %211 : vector<64x128xf32>
      %c2_i32_126 = arith.constant 2 : i32
      %213 = arith.addi %195, %c2_i32_126 : i32
      %214 = arith.index_cast %213 : i32 to index
      %215 = memref.load %arg2[%214] : memref<324xf32, #tpu.memory_space<smem>>
      %216 = vector.broadcast %215 : f32 to vector<64x128xf32>
      %217 = arith.mulf %216, %201 : vector<64x128xf32>
      %218 = arith.addf %212, %217 : vector<64x128xf32>
      %c3_i32_127 = arith.constant 3 : i32
      %219 = arith.muli %arg8, %c3_i32_127 : i32
      %c1_i32_128 = arith.constant 1 : i32
      %220 = arith.addi %219, %c1_i32_128 : i32
      %c9_i32_129 = arith.constant 9 : i32
      %221 = arith.muli %220, %c9_i32_129 : i32
      %c6_i32_130 = arith.constant 6 : i32
      %222 = arith.addi %221, %c6_i32_130 : i32
      %c2_131 = arith.constant 2 : index
      %c2_132 = arith.constant 2 : index
      %c0_133 = arith.constant 0 : index
      %223 = vector.load %arg5[%c2_131, %c2_132, %c0_133] : memref<6x130x128xf32, #tpu.memory_space<vmem>>, vector<1x64x128xf32>
      %224 = vector.shape_cast %223 : vector<1x64x128xf32> to vector<64x128xf32>
      %c0_134 = arith.constant 0 : index
      %c1_135 = arith.constant 1 : index
      %c2_136 = arith.constant 2 : index
      %c0_137 = arith.constant 0 : index
      %225 = vector.load %arg1[%c0_134, %c1_135, %c2_136, %c0_137] : memref<1x3x130x128xf32, #tpu.memory_space<vmem>>, vector<1x1x64x128xf32>
      %226 = vector.shape_cast %225 : vector<1x1x64x128xf32> to vector<64x128xf32>
      %c3_138 = arith.constant 3 : index
      %c2_139 = arith.constant 2 : index
      %c0_140 = arith.constant 0 : index
      %227 = vector.load %arg5[%c3_138, %c2_139, %c0_140] : memref<6x130x128xf32, #tpu.memory_space<vmem>>, vector<1x64x128xf32>
      %228 = vector.shape_cast %227 : vector<1x64x128xf32> to vector<64x128xf32>
      %229 = arith.index_cast %222 : i32 to index
      %230 = memref.load %arg2[%229] : memref<324xf32, #tpu.memory_space<smem>>
      %231 = vector.broadcast %230 : f32 to vector<64x128xf32>
      %232 = arith.mulf %231, %224 : vector<64x128xf32>
      %233 = arith.addf %218, %232 : vector<64x128xf32>
      %c1_i32_141 = arith.constant 1 : i32
      %234 = arith.addi %222, %c1_i32_141 : i32
      %235 = arith.index_cast %234 : i32 to index
      %236 = memref.load %arg2[%235] : memref<324xf32, #tpu.memory_space<smem>>
      %237 = vector.broadcast %236 : f32 to vector<64x128xf32>
      %238 = arith.mulf %237, %226 : vector<64x128xf32>
      %239 = arith.addf %233, %238 : vector<64x128xf32>
      %c2_i32_142 = arith.constant 2 : i32
      %240 = arith.addi %222, %c2_i32_142 : i32
      %241 = arith.index_cast %240 : i32 to index
      %242 = memref.load %arg2[%241] : memref<324xf32, #tpu.memory_space<smem>>
      %243 = vector.broadcast %242 : f32 to vector<64x128xf32>
      %244 = arith.mulf %243, %228 : vector<64x128xf32>
      %245 = arith.addf %239, %244 : vector<64x128xf32>
      %c3_i32_143 = arith.constant 3 : i32
      %246 = arith.muli %arg8, %c3_i32_143 : i32
      %c2_i32_144 = arith.constant 2 : i32
      %247 = arith.addi %246, %c2_i32_144 : i32
      %c9_i32_145 = arith.constant 9 : i32
      %248 = arith.muli %247, %c9_i32_145 : i32
      %c0_i32_146 = arith.constant 0 : i32
      %249 = arith.addi %248, %c0_i32_146 : i32
      %c4_147 = arith.constant 4 : index
      %c0_148 = arith.constant 0 : index
      %c0_149 = arith.constant 0 : index
      %250 = vector.load %arg5[%c4_147, %c0_148, %c0_149] : memref<6x130x128xf32, #tpu.memory_space<vmem>>, vector<1x64x128xf32>
      %251 = vector.shape_cast %250 : vector<1x64x128xf32> to vector<64x128xf32>
      %c0_150 = arith.constant 0 : index
      %c2_151 = arith.constant 2 : index
      %c0_152 = arith.constant 0 : index
      %c0_153 = arith.constant 0 : index
      %252 = vector.load %arg1[%c0_150, %c2_151, %c0_152, %c0_153] : memref<1x3x130x128xf32, #tpu.memory_space<vmem>>, vector<1x1x64x128xf32>
      %253 = vector.shape_cast %252 : vector<1x1x64x128xf32> to vector<64x128xf32>
      %c5_154 = arith.constant 5 : index
      %c0_155 = arith.constant 0 : index
      %c0_156 = arith.constant 0 : index
      %254 = vector.load %arg5[%c5_154, %c0_155, %c0_156] : memref<6x130x128xf32, #tpu.memory_space<vmem>>, vector<1x64x128xf32>
      %255 = vector.shape_cast %254 : vector<1x64x128xf32> to vector<64x128xf32>
      %256 = arith.index_cast %249 : i32 to index
      %257 = memref.load %arg2[%256] : memref<324xf32, #tpu.memory_space<smem>>
      %258 = vector.broadcast %257 : f32 to vector<64x128xf32>
      %259 = arith.mulf %258, %251 : vector<64x128xf32>
      %260 = arith.addf %245, %259 : vector<64x128xf32>
      %c1_i32_157 = arith.constant 1 : i32
      %261 = arith.addi %249, %c1_i32_157 : i32
      %262 = arith.index_cast %261 : i32 to index
      %263 = memref.load %arg2[%262] : memref<324xf32, #tpu.memory_space<smem>>
      %264 = vector.broadcast %263 : f32 to vector<64x128xf32>
      %265 = arith.mulf %264, %253 : vector<64x128xf32>
      %266 = arith.addf %260, %265 : vector<64x128xf32>
      %c2_i32_158 = arith.constant 2 : i32
      %267 = arith.addi %249, %c2_i32_158 : i32
      %268 = arith.index_cast %267 : i32 to index
      %269 = memref.load %arg2[%268] : memref<324xf32, #tpu.memory_space<smem>>
      %270 = vector.broadcast %269 : f32 to vector<64x128xf32>
      %271 = arith.mulf %270, %255 : vector<64x128xf32>
      %272 = arith.addf %266, %271 : vector<64x128xf32>
      %c3_i32_159 = arith.constant 3 : i32
      %273 = arith.muli %arg8, %c3_i32_159 : i32
      %c2_i32_160 = arith.constant 2 : i32
      %274 = arith.addi %273, %c2_i32_160 : i32
      %c9_i32_161 = arith.constant 9 : i32
      %275 = arith.muli %274, %c9_i32_161 : i32
      %c3_i32_162 = arith.constant 3 : i32
      %276 = arith.addi %275, %c3_i32_162 : i32
      %c4_163 = arith.constant 4 : index
      %c1_164 = arith.constant 1 : index
      %c0_165 = arith.constant 0 : index
      %277 = vector.load %arg5[%c4_163, %c1_164, %c0_165] : memref<6x130x128xf32, #tpu.memory_space<vmem>>, vector<1x64x128xf32>
      %278 = vector.shape_cast %277 : vector<1x64x128xf32> to vector<64x128xf32>
      %c0_166 = arith.constant 0 : index
      %c2_167 = arith.constant 2 : index
      %c1_168 = arith.constant 1 : index
      %c0_169 = arith.constant 0 : index
      %279 = vector.load %arg1[%c0_166, %c2_167, %c1_168, %c0_169] : memref<1x3x130x128xf32, #tpu.memory_space<vmem>>, vector<1x1x64x128xf32>
      %280 = vector.shape_cast %279 : vector<1x1x64x128xf32> to vector<64x128xf32>
      %c5_170 = arith.constant 5 : index
      %c1_171 = arith.constant 1 : index
      %c0_172 = arith.constant 0 : index
      %281 = vector.load %arg5[%c5_170, %c1_171, %c0_172] : memref<6x130x128xf32, #tpu.memory_space<vmem>>, vector<1x64x128xf32>
      %282 = vector.shape_cast %281 : vector<1x64x128xf32> to vector<64x128xf32>
      %283 = arith.index_cast %276 : i32 to index
      %284 = memref.load %arg2[%283] : memref<324xf32, #tpu.memory_space<smem>>
      %285 = vector.broadcast %284 : f32 to vector<64x128xf32>
      %286 = arith.mulf %285, %278 : vector<64x128xf32>
      %287 = arith.addf %272, %286 : vector<64x128xf32>
      %c1_i32_173 = arith.constant 1 : i32
      %288 = arith.addi %276, %c1_i32_173 : i32
      %289 = arith.index_cast %288 : i32 to index
      %290 = memref.load %arg2[%289] : memref<324xf32, #tpu.memory_space<smem>>
      %291 = vector.broadcast %290 : f32 to vector<64x128xf32>
      %292 = arith.mulf %291, %280 : vector<64x128xf32>
      %293 = arith.addf %287, %292 : vector<64x128xf32>
      %c2_i32_174 = arith.constant 2 : i32
      %294 = arith.addi %276, %c2_i32_174 : i32
      %295 = arith.index_cast %294 : i32 to index
      %296 = memref.load %arg2[%295] : memref<324xf32, #tpu.memory_space<smem>>
      %297 = vector.broadcast %296 : f32 to vector<64x128xf32>
      %298 = arith.mulf %297, %282 : vector<64x128xf32>
      %299 = arith.addf %293, %298 : vector<64x128xf32>
      %c3_i32_175 = arith.constant 3 : i32
      %300 = arith.muli %arg8, %c3_i32_175 : i32
      %c2_i32_176 = arith.constant 2 : i32
      %301 = arith.addi %300, %c2_i32_176 : i32
      %c9_i32_177 = arith.constant 9 : i32
      %302 = arith.muli %301, %c9_i32_177 : i32
      %c6_i32_178 = arith.constant 6 : i32
      %303 = arith.addi %302, %c6_i32_178 : i32
      %c4_179 = arith.constant 4 : index
      %c2_180 = arith.constant 2 : index
      %c0_181 = arith.constant 0 : index
      %304 = vector.load %arg5[%c4_179, %c2_180, %c0_181] : memref<6x130x128xf32, #tpu.memory_space<vmem>>, vector<1x64x128xf32>
      %305 = vector.shape_cast %304 : vector<1x64x128xf32> to vector<64x128xf32>
      %c0_182 = arith.constant 0 : index
      %c2_183 = arith.constant 2 : index
      %c2_184 = arith.constant 2 : index
      %c0_185 = arith.constant 0 : index
      %306 = vector.load %arg1[%c0_182, %c2_183, %c2_184, %c0_185] : memref<1x3x130x128xf32, #tpu.memory_space<vmem>>, vector<1x1x64x128xf32>
      %307 = vector.shape_cast %306 : vector<1x1x64x128xf32> to vector<64x128xf32>
      %c5_186 = arith.constant 5 : index
      %c2_187 = arith.constant 2 : index
      %c0_188 = arith.constant 0 : index
      %308 = vector.load %arg5[%c5_186, %c2_187, %c0_188] : memref<6x130x128xf32, #tpu.memory_space<vmem>>, vector<1x64x128xf32>
      %309 = vector.shape_cast %308 : vector<1x64x128xf32> to vector<64x128xf32>
      %310 = arith.index_cast %303 : i32 to index
      %311 = memref.load %arg2[%310] : memref<324xf32, #tpu.memory_space<smem>>
      %312 = vector.broadcast %311 : f32 to vector<64x128xf32>
      %313 = arith.mulf %312, %305 : vector<64x128xf32>
      %314 = arith.addf %299, %313 : vector<64x128xf32>
      %c1_i32_189 = arith.constant 1 : i32
      %315 = arith.addi %303, %c1_i32_189 : i32
      %316 = arith.index_cast %315 : i32 to index
      %317 = memref.load %arg2[%316] : memref<324xf32, #tpu.memory_space<smem>>
      %318 = vector.broadcast %317 : f32 to vector<64x128xf32>
      %319 = arith.mulf %318, %307 : vector<64x128xf32>
      %320 = arith.addf %314, %319 : vector<64x128xf32>
      %c2_i32_190 = arith.constant 2 : i32
      %321 = arith.addi %303, %c2_i32_190 : i32
      %322 = arith.index_cast %321 : i32 to index
      %323 = memref.load %arg2[%322] : memref<324xf32, #tpu.memory_space<smem>>
      %324 = vector.broadcast %323 : f32 to vector<64x128xf32>
      %325 = arith.mulf %324, %309 : vector<64x128xf32>
      %326 = arith.addf %320, %325 : vector<64x128xf32>
      %c0_191 = arith.constant 0 : index
      %c0_192 = arith.constant 0 : index
      %c0_193 = arith.constant 0 : index
      %327 = vector.load %arg6[%c0_191, %c0_192, %c0_193] : memref<2x32x64xf32, #tpu.memory_space<vmem>>, vector<1x32x64xf32>
      %328 = vector.shape_cast %327 : vector<1x32x64xf32> to vector<32x64xf32>
      %cst_194 = arith.constant dense<0.000000e+00> : vector<32x128xf32>
      %329 = tpu.matmul %328, %326, %cst_194 {dimension_numbers = #tpu.dot_dimension_numbers<[1], [0], [0], [1], [0, 0, 1, 1], [], []>} : vector<32x64xf32>, vector<64x128xf32>, vector<32x128xf32> -> vector<32x128xf32>
      %c1_195 = arith.constant 1 : index
      %c0_196 = arith.constant 0 : index
      %c0_197 = arith.constant 0 : index
      %330 = vector.load %arg6[%c1_195, %c0_196, %c0_197] : memref<2x32x64xf32, #tpu.memory_space<vmem>>, vector<1x32x64xf32>
      %331 = vector.shape_cast %330 : vector<1x32x64xf32> to vector<32x64xf32>
      %cst_198 = arith.constant dense<0.000000e+00> : vector<32x128xf32>
      %332 = tpu.matmul %331, %326, %cst_198 {dimension_numbers = #tpu.dot_dimension_numbers<[1], [0], [0], [1], [0, 0, 1, 1], [], []>} : vector<32x64xf32>, vector<64x128xf32>, vector<32x128xf32> -> vector<32x128xf32>
      %333 = arith.maximumf %329, %332 : vector<32x128xf32>
      %c0_199 = arith.constant 0 : index
      %c0_200 = arith.constant 0 : index
      %c0_201 = arith.constant 0 : index
      %334 = vector.load %arg7[%c0_199, %c0_200, %c0_201] : memref<2x128x64xf32, #tpu.memory_space<vmem>>, vector<1x128x64xf32>
      %335 = vector.shape_cast %334 : vector<1x128x64xf32> to vector<128x64xf32>
      %cst_202 = arith.constant dense<0.000000e+00> : vector<32x64xf32>
      %336 = tpu.matmul %333, %335, %cst_202 {dimension_numbers = #tpu.dot_dimension_numbers<[1], [0], [0], [1], [0, 0, 1, 1], [], []>} : vector<32x128xf32>, vector<128x64xf32>, vector<32x64xf32> -> vector<32x64xf32>
      %c1_203 = arith.constant 1 : index
      %c0_204 = arith.constant 0 : index
      %c0_205 = arith.constant 0 : index
      %337 = vector.load %arg7[%c1_203, %c0_204, %c0_205] : memref<2x128x64xf32, #tpu.memory_space<vmem>>, vector<1x128x64xf32>
      %338 = vector.shape_cast %337 : vector<1x128x64xf32> to vector<128x64xf32>
      %cst_206 = arith.constant dense<0.000000e+00> : vector<32x64xf32>
      %339 = tpu.matmul %333, %338, %cst_206 {dimension_numbers = #tpu.dot_dimension_numbers<[1], [0], [0], [1], [0, 0, 1, 1], [], []>} : vector<32x128xf32>, vector<128x64xf32>, vector<32x64xf32> -> vector<32x64xf32>
      %340 = arith.maximumf %336, %339 : vector<32x64xf32>
      %cst_207 = arith.constant 0.000000e+00 : f32
      %341 = vector.broadcast %cst_207 : f32 to vector<64x128xf32>
      %c3_i32_208 = arith.constant 3 : i32
      %342 = arith.muli %arg8, %c3_i32_208 : i32
      %c0_i32_209 = arith.constant 0 : i32
      %343 = arith.addi %342, %c0_i32_209 : i32
      %c9_i32_210 = arith.constant 9 : i32
      %344 = arith.muli %343, %c9_i32_210 : i32
      %c0_i32_211 = arith.constant 0 : i32
      %345 = arith.addi %344, %c0_i32_211 : i32
      %c0_212 = arith.constant 0 : index
      %c64 = arith.constant 64 : index
      %c0_213 = arith.constant 0 : index
      %346 = vector.load %arg5[%c0_212, %c64, %c0_213] : memref<6x130x128xf32, #tpu.memory_space<vmem>>, vector<1x64x128xf32>
      %347 = vector.shape_cast %346 : vector<1x64x128xf32> to vector<64x128xf32>
      %c0_214 = arith.constant 0 : index
      %c0_215 = arith.constant 0 : index
      %c64_216 = arith.constant 64 : index
      %c0_217 = arith.constant 0 : index
      %348 = vector.load %arg1[%c0_214, %c0_215, %c64_216, %c0_217] : memref<1x3x130x128xf32, #tpu.memory_space<vmem>>, vector<1x1x64x128xf32>
      %349 = vector.shape_cast %348 : vector<1x1x64x128xf32> to vector<64x128xf32>
      %c1_218 = arith.constant 1 : index
      %c64_219 = arith.constant 64 : index
      %c0_220 = arith.constant 0 : index
      %350 = vector.load %arg5[%c1_218, %c64_219, %c0_220] : memref<6x130x128xf32, #tpu.memory_space<vmem>>, vector<1x64x128xf32>
      %351 = vector.shape_cast %350 : vector<1x64x128xf32> to vector<64x128xf32>
      %352 = arith.index_cast %345 : i32 to index
      %353 = memref.load %arg2[%352] : memref<324xf32, #tpu.memory_space<smem>>
      %354 = vector.broadcast %353 : f32 to vector<64x128xf32>
      %355 = arith.mulf %354, %347 : vector<64x128xf32>
      %356 = arith.addf %341, %355 : vector<64x128xf32>
      %c1_i32_221 = arith.constant 1 : i32
      %357 = arith.addi %345, %c1_i32_221 : i32
      %358 = arith.index_cast %357 : i32 to index
      %359 = memref.load %arg2[%358] : memref<324xf32, #tpu.memory_space<smem>>
      %360 = vector.broadcast %359 : f32 to vector<64x128xf32>
      %361 = arith.mulf %360, %349 : vector<64x128xf32>
      %362 = arith.addf %356, %361 : vector<64x128xf32>
      %c2_i32_222 = arith.constant 2 : i32
      %363 = arith.addi %345, %c2_i32_222 : i32
      %364 = arith.index_cast %363 : i32 to index
      %365 = memref.load %arg2[%364] : memref<324xf32, #tpu.memory_space<smem>>
      %366 = vector.broadcast %365 : f32 to vector<64x128xf32>
      %367 = arith.mulf %366, %351 : vector<64x128xf32>
      %368 = arith.addf %362, %367 : vector<64x128xf32>
      %c3_i32_223 = arith.constant 3 : i32
      %369 = arith.muli %arg8, %c3_i32_223 : i32
      %c0_i32_224 = arith.constant 0 : i32
      %370 = arith.addi %369, %c0_i32_224 : i32
      %c9_i32_225 = arith.constant 9 : i32
      %371 = arith.muli %370, %c9_i32_225 : i32
      %c3_i32_226 = arith.constant 3 : i32
      %372 = arith.addi %371, %c3_i32_226 : i32
      %c0_227 = arith.constant 0 : index
      %c65 = arith.constant 65 : index
      %c0_228 = arith.constant 0 : index
      %373 = vector.load %arg5[%c0_227, %c65, %c0_228] : memref<6x130x128xf32, #tpu.memory_space<vmem>>, vector<1x64x128xf32>
      %374 = vector.shape_cast %373 : vector<1x64x128xf32> to vector<64x128xf32>
      %c0_229 = arith.constant 0 : index
      %c0_230 = arith.constant 0 : index
      %c65_231 = arith.constant 65 : index
      %c0_232 = arith.constant 0 : index
      %375 = vector.load %arg1[%c0_229, %c0_230, %c65_231, %c0_232] : memref<1x3x130x128xf32, #tpu.memory_space<vmem>>, vector<1x1x64x128xf32>
      %376 = vector.shape_cast %375 : vector<1x1x64x128xf32> to vector<64x128xf32>
      %c1_233 = arith.constant 1 : index
      %c65_234 = arith.constant 65 : index
      %c0_235 = arith.constant 0 : index
      %377 = vector.load %arg5[%c1_233, %c65_234, %c0_235] : memref<6x130x128xf32, #tpu.memory_space<vmem>>, vector<1x64x128xf32>
      %378 = vector.shape_cast %377 : vector<1x64x128xf32> to vector<64x128xf32>
      %379 = arith.index_cast %372 : i32 to index
      %380 = memref.load %arg2[%379] : memref<324xf32, #tpu.memory_space<smem>>
      %381 = vector.broadcast %380 : f32 to vector<64x128xf32>
      %382 = arith.mulf %381, %374 : vector<64x128xf32>
      %383 = arith.addf %368, %382 : vector<64x128xf32>
      %c1_i32_236 = arith.constant 1 : i32
      %384 = arith.addi %372, %c1_i32_236 : i32
      %385 = arith.index_cast %384 : i32 to index
      %386 = memref.load %arg2[%385] : memref<324xf32, #tpu.memory_space<smem>>
      %387 = vector.broadcast %386 : f32 to vector<64x128xf32>
      %388 = arith.mulf %387, %376 : vector<64x128xf32>
      %389 = arith.addf %383, %388 : vector<64x128xf32>
      %c2_i32_237 = arith.constant 2 : i32
      %390 = arith.addi %372, %c2_i32_237 : i32
      %391 = arith.index_cast %390 : i32 to index
      %392 = memref.load %arg2[%391] : memref<324xf32, #tpu.memory_space<smem>>
      %393 = vector.broadcast %392 : f32 to vector<64x128xf32>
      %394 = arith.mulf %393, %378 : vector<64x128xf32>
      %395 = arith.addf %389, %394 : vector<64x128xf32>
      %c3_i32_238 = arith.constant 3 : i32
      %396 = arith.muli %arg8, %c3_i32_238 : i32
      %c0_i32_239 = arith.constant 0 : i32
      %397 = arith.addi %396, %c0_i32_239 : i32
      %c9_i32_240 = arith.constant 9 : i32
      %398 = arith.muli %397, %c9_i32_240 : i32
      %c6_i32_241 = arith.constant 6 : i32
      %399 = arith.addi %398, %c6_i32_241 : i32
      %c0_242 = arith.constant 0 : index
      %c66 = arith.constant 66 : index
      %c0_243 = arith.constant 0 : index
      %400 = vector.load %arg5[%c0_242, %c66, %c0_243] : memref<6x130x128xf32, #tpu.memory_space<vmem>>, vector<1x64x128xf32>
      %401 = vector.shape_cast %400 : vector<1x64x128xf32> to vector<64x128xf32>
      %c0_244 = arith.constant 0 : index
      %c0_245 = arith.constant 0 : index
      %c66_246 = arith.constant 66 : index
      %c0_247 = arith.constant 0 : index
      %402 = vector.load %arg1[%c0_244, %c0_245, %c66_246, %c0_247] : memref<1x3x130x128xf32, #tpu.memory_space<vmem>>, vector<1x1x64x128xf32>
      %403 = vector.shape_cast %402 : vector<1x1x64x128xf32> to vector<64x128xf32>
      %c1_248 = arith.constant 1 : index
      %c66_249 = arith.constant 66 : index
      %c0_250 = arith.constant 0 : index
      %404 = vector.load %arg5[%c1_248, %c66_249, %c0_250] : memref<6x130x128xf32, #tpu.memory_space<vmem>>, vector<1x64x128xf32>
      %405 = vector.shape_cast %404 : vector<1x64x128xf32> to vector<64x128xf32>
      %406 = arith.index_cast %399 : i32 to index
      %407 = memref.load %arg2[%406] : memref<324xf32, #tpu.memory_space<smem>>
      %408 = vector.broadcast %407 : f32 to vector<64x128xf32>
      %409 = arith.mulf %408, %401 : vector<64x128xf32>
      %410 = arith.addf %395, %409 : vector<64x128xf32>
      %c1_i32_251 = arith.constant 1 : i32
      %411 = arith.addi %399, %c1_i32_251 : i32
      %412 = arith.index_cast %411 : i32 to index
      %413 = memref.load %arg2[%412] : memref<324xf32, #tpu.memory_space<smem>>
      %414 = vector.broadcast %413 : f32 to vector<64x128xf32>
      %415 = arith.mulf %414, %403 : vector<64x128xf32>
      %416 = arith.addf %410, %415 : vector<64x128xf32>
      %c2_i32_252 = arith.constant 2 : i32
      %417 = arith.addi %399, %c2_i32_252 : i32
      %418 = arith.index_cast %417 : i32 to index
      %419 = memref.load %arg2[%418] : memref<324xf32, #tpu.memory_space<smem>>
      %420 = vector.broadcast %419 : f32 to vector<64x128xf32>
      %421 = arith.mulf %420, %405 : vector<64x128xf32>
      %422 = arith.addf %416, %421 : vector<64x128xf32>
      %c3_i32_253 = arith.constant 3 : i32
      %423 = arith.muli %arg8, %c3_i32_253 : i32
      %c1_i32_254 = arith.constant 1 : i32
      %424 = arith.addi %423, %c1_i32_254 : i32
      %c9_i32_255 = arith.constant 9 : i32
      %425 = arith.muli %424, %c9_i32_255 : i32
      %c0_i32_256 = arith.constant 0 : i32
      %426 = arith.addi %425, %c0_i32_256 : i32
      %c2_257 = arith.constant 2 : index
      %c64_258 = arith.constant 64 : index
      %c0_259 = arith.constant 0 : index
      %427 = vector.load %arg5[%c2_257, %c64_258, %c0_259] : memref<6x130x128xf32, #tpu.memory_space<vmem>>, vector<1x64x128xf32>
      %428 = vector.shape_cast %427 : vector<1x64x128xf32> to vector<64x128xf32>
      %c0_260 = arith.constant 0 : index
      %c1_261 = arith.constant 1 : index
      %c64_262 = arith.constant 64 : index
      %c0_263 = arith.constant 0 : index
      %429 = vector.load %arg1[%c0_260, %c1_261, %c64_262, %c0_263] : memref<1x3x130x128xf32, #tpu.memory_space<vmem>>, vector<1x1x64x128xf32>
      %430 = vector.shape_cast %429 : vector<1x1x64x128xf32> to vector<64x128xf32>
      %c3_264 = arith.constant 3 : index
      %c64_265 = arith.constant 64 : index
      %c0_266 = arith.constant 0 : index
      %431 = vector.load %arg5[%c3_264, %c64_265, %c0_266] : memref<6x130x128xf32, #tpu.memory_space<vmem>>, vector<1x64x128xf32>
      %432 = vector.shape_cast %431 : vector<1x64x128xf32> to vector<64x128xf32>
      %433 = arith.index_cast %426 : i32 to index
      %434 = memref.load %arg2[%433] : memref<324xf32, #tpu.memory_space<smem>>
      %435 = vector.broadcast %434 : f32 to vector<64x128xf32>
      %436 = arith.mulf %435, %428 : vector<64x128xf32>
      %437 = arith.addf %422, %436 : vector<64x128xf32>
      %c1_i32_267 = arith.constant 1 : i32
      %438 = arith.addi %426, %c1_i32_267 : i32
      %439 = arith.index_cast %438 : i32 to index
      %440 = memref.load %arg2[%439] : memref<324xf32, #tpu.memory_space<smem>>
      %441 = vector.broadcast %440 : f32 to vector<64x128xf32>
      %442 = arith.mulf %441, %430 : vector<64x128xf32>
      %443 = arith.addf %437, %442 : vector<64x128xf32>
      %c2_i32_268 = arith.constant 2 : i32
      %444 = arith.addi %426, %c2_i32_268 : i32
      %445 = arith.index_cast %444 : i32 to index
      %446 = memref.load %arg2[%445] : memref<324xf32, #tpu.memory_space<smem>>
      %447 = vector.broadcast %446 : f32 to vector<64x128xf32>
      %448 = arith.mulf %447, %432 : vector<64x128xf32>
      %449 = arith.addf %443, %448 : vector<64x128xf32>
      %c3_i32_269 = arith.constant 3 : i32
      %450 = arith.muli %arg8, %c3_i32_269 : i32
      %c1_i32_270 = arith.constant 1 : i32
      %451 = arith.addi %450, %c1_i32_270 : i32
      %c9_i32_271 = arith.constant 9 : i32
      %452 = arith.muli %451, %c9_i32_271 : i32
      %c3_i32_272 = arith.constant 3 : i32
      %453 = arith.addi %452, %c3_i32_272 : i32
      %c2_273 = arith.constant 2 : index
      %c65_274 = arith.constant 65 : index
      %c0_275 = arith.constant 0 : index
      %454 = vector.load %arg5[%c2_273, %c65_274, %c0_275] : memref<6x130x128xf32, #tpu.memory_space<vmem>>, vector<1x64x128xf32>
      %455 = vector.shape_cast %454 : vector<1x64x128xf32> to vector<64x128xf32>
      %c0_276 = arith.constant 0 : index
      %c1_277 = arith.constant 1 : index
      %c65_278 = arith.constant 65 : index
      %c0_279 = arith.constant 0 : index
      %456 = vector.load %arg1[%c0_276, %c1_277, %c65_278, %c0_279] : memref<1x3x130x128xf32, #tpu.memory_space<vmem>>, vector<1x1x64x128xf32>
      %457 = vector.shape_cast %456 : vector<1x1x64x128xf32> to vector<64x128xf32>
      %c3_280 = arith.constant 3 : index
      %c65_281 = arith.constant 65 : index
      %c0_282 = arith.constant 0 : index
      %458 = vector.load %arg5[%c3_280, %c65_281, %c0_282] : memref<6x130x128xf32, #tpu.memory_space<vmem>>, vector<1x64x128xf32>
      %459 = vector.shape_cast %458 : vector<1x64x128xf32> to vector<64x128xf32>
      %460 = arith.index_cast %453 : i32 to index
      %461 = memref.load %arg2[%460] : memref<324xf32, #tpu.memory_space<smem>>
      %462 = vector.broadcast %461 : f32 to vector<64x128xf32>
      %463 = arith.mulf %462, %455 : vector<64x128xf32>
      %464 = arith.addf %449, %463 : vector<64x128xf32>
      %c1_i32_283 = arith.constant 1 : i32
      %465 = arith.addi %453, %c1_i32_283 : i32
      %466 = arith.index_cast %465 : i32 to index
      %467 = memref.load %arg2[%466] : memref<324xf32, #tpu.memory_space<smem>>
      %468 = vector.broadcast %467 : f32 to vector<64x128xf32>
      %469 = arith.mulf %468, %457 : vector<64x128xf32>
      %470 = arith.addf %464, %469 : vector<64x128xf32>
      %c2_i32_284 = arith.constant 2 : i32
      %471 = arith.addi %453, %c2_i32_284 : i32
      %472 = arith.index_cast %471 : i32 to index
      %473 = memref.load %arg2[%472] : memref<324xf32, #tpu.memory_space<smem>>
      %474 = vector.broadcast %473 : f32 to vector<64x128xf32>
      %475 = arith.mulf %474, %459 : vector<64x128xf32>
      %476 = arith.addf %470, %475 : vector<64x128xf32>
      %c3_i32_285 = arith.constant 3 : i32
      %477 = arith.muli %arg8, %c3_i32_285 : i32
      %c1_i32_286 = arith.constant 1 : i32
      %478 = arith.addi %477, %c1_i32_286 : i32
      %c9_i32_287 = arith.constant 9 : i32
      %479 = arith.muli %478, %c9_i32_287 : i32
      %c6_i32_288 = arith.constant 6 : i32
      %480 = arith.addi %479, %c6_i32_288 : i32
      %c2_289 = arith.constant 2 : index
      %c66_290 = arith.constant 66 : index
      %c0_291 = arith.constant 0 : index
      %481 = vector.load %arg5[%c2_289, %c66_290, %c0_291] : memref<6x130x128xf32, #tpu.memory_space<vmem>>, vector<1x64x128xf32>
      %482 = vector.shape_cast %481 : vector<1x64x128xf32> to vector<64x128xf32>
      %c0_292 = arith.constant 0 : index
      %c1_293 = arith.constant 1 : index
      %c66_294 = arith.constant 66 : index
      %c0_295 = arith.constant 0 : index
      %483 = vector.load %arg1[%c0_292, %c1_293, %c66_294, %c0_295] : memref<1x3x130x128xf32, #tpu.memory_space<vmem>>, vector<1x1x64x128xf32>
      %484 = vector.shape_cast %483 : vector<1x1x64x128xf32> to vector<64x128xf32>
      %c3_296 = arith.constant 3 : index
      %c66_297 = arith.constant 66 : index
      %c0_298 = arith.constant 0 : index
      %485 = vector.load %arg5[%c3_296, %c66_297, %c0_298] : memref<6x130x128xf32, #tpu.memory_space<vmem>>, vector<1x64x128xf32>
      %486 = vector.shape_cast %485 : vector<1x64x128xf32> to vector<64x128xf32>
      %487 = arith.index_cast %480 : i32 to index
      %488 = memref.load %arg2[%487] : memref<324xf32, #tpu.memory_space<smem>>
      %489 = vector.broadcast %488 : f32 to vector<64x128xf32>
      %490 = arith.mulf %489, %482 : vector<64x128xf32>
      %491 = arith.addf %476, %490 : vector<64x128xf32>
      %c1_i32_299 = arith.constant 1 : i32
      %492 = arith.addi %480, %c1_i32_299 : i32
      %493 = arith.index_cast %492 : i32 to index
      %494 = memref.load %arg2[%493] : memref<324xf32, #tpu.memory_space<smem>>
      %495 = vector.broadcast %494 : f32 to vector<64x128xf32>
      %496 = arith.mulf %495, %484 : vector<64x128xf32>
      %497 = arith.addf %491, %496 : vector<64x128xf32>
      %c2_i32_300 = arith.constant 2 : i32
      %498 = arith.addi %480, %c2_i32_300 : i32
      %499 = arith.index_cast %498 : i32 to index
      %500 = memref.load %arg2[%499] : memref<324xf32, #tpu.memory_space<smem>>
      %501 = vector.broadcast %500 : f32 to vector<64x128xf32>
      %502 = arith.mulf %501, %486 : vector<64x128xf32>
      %503 = arith.addf %497, %502 : vector<64x128xf32>
      %c3_i32_301 = arith.constant 3 : i32
      %504 = arith.muli %arg8, %c3_i32_301 : i32
      %c2_i32_302 = arith.constant 2 : i32
      %505 = arith.addi %504, %c2_i32_302 : i32
      %c9_i32_303 = arith.constant 9 : i32
      %506 = arith.muli %505, %c9_i32_303 : i32
      %c0_i32_304 = arith.constant 0 : i32
      %507 = arith.addi %506, %c0_i32_304 : i32
      %c4_305 = arith.constant 4 : index
      %c64_306 = arith.constant 64 : index
      %c0_307 = arith.constant 0 : index
      %508 = vector.load %arg5[%c4_305, %c64_306, %c0_307] : memref<6x130x128xf32, #tpu.memory_space<vmem>>, vector<1x64x128xf32>
      %509 = vector.shape_cast %508 : vector<1x64x128xf32> to vector<64x128xf32>
      %c0_308 = arith.constant 0 : index
      %c2_309 = arith.constant 2 : index
      %c64_310 = arith.constant 64 : index
      %c0_311 = arith.constant 0 : index
      %510 = vector.load %arg1[%c0_308, %c2_309, %c64_310, %c0_311] : memref<1x3x130x128xf32, #tpu.memory_space<vmem>>, vector<1x1x64x128xf32>
      %511 = vector.shape_cast %510 : vector<1x1x64x128xf32> to vector<64x128xf32>
      %c5_312 = arith.constant 5 : index
      %c64_313 = arith.constant 64 : index
      %c0_314 = arith.constant 0 : index
      %512 = vector.load %arg5[%c5_312, %c64_313, %c0_314] : memref<6x130x128xf32, #tpu.memory_space<vmem>>, vector<1x64x128xf32>
      %513 = vector.shape_cast %512 : vector<1x64x128xf32> to vector<64x128xf32>
      %514 = arith.index_cast %507 : i32 to index
      %515 = memref.load %arg2[%514] : memref<324xf32, #tpu.memory_space<smem>>
      %516 = vector.broadcast %515 : f32 to vector<64x128xf32>
      %517 = arith.mulf %516, %509 : vector<64x128xf32>
      %518 = arith.addf %503, %517 : vector<64x128xf32>
      %c1_i32_315 = arith.constant 1 : i32
      %519 = arith.addi %507, %c1_i32_315 : i32
      %520 = arith.index_cast %519 : i32 to index
      %521 = memref.load %arg2[%520] : memref<324xf32, #tpu.memory_space<smem>>
      %522 = vector.broadcast %521 : f32 to vector<64x128xf32>
      %523 = arith.mulf %522, %511 : vector<64x128xf32>
      %524 = arith.addf %518, %523 : vector<64x128xf32>
      %c2_i32_316 = arith.constant 2 : i32
      %525 = arith.addi %507, %c2_i32_316 : i32
      %526 = arith.index_cast %525 : i32 to index
      %527 = memref.load %arg2[%526] : memref<324xf32, #tpu.memory_space<smem>>
      %528 = vector.broadcast %527 : f32 to vector<64x128xf32>
      %529 = arith.mulf %528, %513 : vector<64x128xf32>
      %530 = arith.addf %524, %529 : vector<64x128xf32>
      %c3_i32_317 = arith.constant 3 : i32
      %531 = arith.muli %arg8, %c3_i32_317 : i32
      %c2_i32_318 = arith.constant 2 : i32
      %532 = arith.addi %531, %c2_i32_318 : i32
      %c9_i32_319 = arith.constant 9 : i32
      %533 = arith.muli %532, %c9_i32_319 : i32
      %c3_i32_320 = arith.constant 3 : i32
      %534 = arith.addi %533, %c3_i32_320 : i32
      %c4_321 = arith.constant 4 : index
      %c65_322 = arith.constant 65 : index
      %c0_323 = arith.constant 0 : index
      %535 = vector.load %arg5[%c4_321, %c65_322, %c0_323] : memref<6x130x128xf32, #tpu.memory_space<vmem>>, vector<1x64x128xf32>
      %536 = vector.shape_cast %535 : vector<1x64x128xf32> to vector<64x128xf32>
      %c0_324 = arith.constant 0 : index
      %c2_325 = arith.constant 2 : index
      %c65_326 = arith.constant 65 : index
      %c0_327 = arith.constant 0 : index
      %537 = vector.load %arg1[%c0_324, %c2_325, %c65_326, %c0_327] : memref<1x3x130x128xf32, #tpu.memory_space<vmem>>, vector<1x1x64x128xf32>
      %538 = vector.shape_cast %537 : vector<1x1x64x128xf32> to vector<64x128xf32>
      %c5_328 = arith.constant 5 : index
      %c65_329 = arith.constant 65 : index
      %c0_330 = arith.constant 0 : index
      %539 = vector.load %arg5[%c5_328, %c65_329, %c0_330] : memref<6x130x128xf32, #tpu.memory_space<vmem>>, vector<1x64x128xf32>
      %540 = vector.shape_cast %539 : vector<1x64x128xf32> to vector<64x128xf32>
      %541 = arith.index_cast %534 : i32 to index
      %542 = memref.load %arg2[%541] : memref<324xf32, #tpu.memory_space<smem>>
      %543 = vector.broadcast %542 : f32 to vector<64x128xf32>
      %544 = arith.mulf %543, %536 : vector<64x128xf32>
      %545 = arith.addf %530, %544 : vector<64x128xf32>
      %c1_i32_331 = arith.constant 1 : i32
      %546 = arith.addi %534, %c1_i32_331 : i32
      %547 = arith.index_cast %546 : i32 to index
      %548 = memref.load %arg2[%547] : memref<324xf32, #tpu.memory_space<smem>>
      %549 = vector.broadcast %548 : f32 to vector<64x128xf32>
      %550 = arith.mulf %549, %538 : vector<64x128xf32>
      %551 = arith.addf %545, %550 : vector<64x128xf32>
      %c2_i32_332 = arith.constant 2 : i32
      %552 = arith.addi %534, %c2_i32_332 : i32
      %553 = arith.index_cast %552 : i32 to index
      %554 = memref.load %arg2[%553] : memref<324xf32, #tpu.memory_space<smem>>
      %555 = vector.broadcast %554 : f32 to vector<64x128xf32>
      %556 = arith.mulf %555, %540 : vector<64x128xf32>
      %557 = arith.addf %551, %556 : vector<64x128xf32>
      %c3_i32_333 = arith.constant 3 : i32
      %558 = arith.muli %arg8, %c3_i32_333 : i32
      %c2_i32_334 = arith.constant 2 : i32
      %559 = arith.addi %558, %c2_i32_334 : i32
      %c9_i32_335 = arith.constant 9 : i32
      %560 = arith.muli %559, %c9_i32_335 : i32
      %c6_i32_336 = arith.constant 6 : i32
      %561 = arith.addi %560, %c6_i32_336 : i32
      %c4_337 = arith.constant 4 : index
      %c66_338 = arith.constant 66 : index
      %c0_339 = arith.constant 0 : index
      %562 = vector.load %arg5[%c4_337, %c66_338, %c0_339] : memref<6x130x128xf32, #tpu.memory_space<vmem>>, vector<1x64x128xf32>
      %563 = vector.shape_cast %562 : vector<1x64x128xf32> to vector<64x128xf32>
      %c0_340 = arith.constant 0 : index
      %c2_341 = arith.constant 2 : index
      %c66_342 = arith.constant 66 : index
      %c0_343 = arith.constant 0 : index
      %564 = vector.load %arg1[%c0_340, %c2_341, %c66_342, %c0_343] : memref<1x3x130x128xf32, #tpu.memory_space<vmem>>, vector<1x1x64x128xf32>
      %565 = vector.shape_cast %564 : vector<1x1x64x128xf32> to vector<64x128xf32>
      %c5_344 = arith.constant 5 : index
      %c66_345 = arith.constant 66 : index
      %c0_346 = arith.constant 0 : index
      %566 = vector.load %arg5[%c5_344, %c66_345, %c0_346] : memref<6x130x128xf32, #tpu.memory_space<vmem>>, vector<1x64x128xf32>
      %567 = vector.shape_cast %566 : vector<1x64x128xf32> to vector<64x128xf32>
      %568 = arith.index_cast %561 : i32 to index
      %569 = memref.load %arg2[%568] : memref<324xf32, #tpu.memory_space<smem>>
      %570 = vector.broadcast %569 : f32 to vector<64x128xf32>
      %571 = arith.mulf %570, %563 : vector<64x128xf32>
      %572 = arith.addf %557, %571 : vector<64x128xf32>
      %c1_i32_347 = arith.constant 1 : i32
      %573 = arith.addi %561, %c1_i32_347 : i32
      %574 = arith.index_cast %573 : i32 to index
      %575 = memref.load %arg2[%574] : memref<324xf32, #tpu.memory_space<smem>>
      %576 = vector.broadcast %575 : f32 to vector<64x128xf32>
      %577 = arith.mulf %576, %565 : vector<64x128xf32>
      %578 = arith.addf %572, %577 : vector<64x128xf32>
      %c2_i32_348 = arith.constant 2 : i32
      %579 = arith.addi %561, %c2_i32_348 : i32
      %580 = arith.index_cast %579 : i32 to index
      %581 = memref.load %arg2[%580] : memref<324xf32, #tpu.memory_space<smem>>
      %582 = vector.broadcast %581 : f32 to vector<64x128xf32>
      %583 = arith.mulf %582, %567 : vector<64x128xf32>
      %584 = arith.addf %578, %583 : vector<64x128xf32>
      %c0_349 = arith.constant 0 : index
      %c0_350 = arith.constant 0 : index
      %c0_351 = arith.constant 0 : index
      %585 = vector.load %arg6[%c0_349, %c0_350, %c0_351] : memref<2x32x64xf32, #tpu.memory_space<vmem>>, vector<1x32x64xf32>
      %586 = vector.shape_cast %585 : vector<1x32x64xf32> to vector<32x64xf32>
      %cst_352 = arith.constant dense<0.000000e+00> : vector<32x128xf32>
      %587 = tpu.matmul %586, %584, %cst_352 {dimension_numbers = #tpu.dot_dimension_numbers<[1], [0], [0], [1], [0, 0, 1, 1], [], []>} : vector<32x64xf32>, vector<64x128xf32>, vector<32x128xf32> -> vector<32x128xf32>
      %c1_353 = arith.constant 1 : index
      %c0_354 = arith.constant 0 : index
      %c0_355 = arith.constant 0 : index
      %588 = vector.load %arg6[%c1_353, %c0_354, %c0_355] : memref<2x32x64xf32, #tpu.memory_space<vmem>>, vector<1x32x64xf32>
      %589 = vector.shape_cast %588 : vector<1x32x64xf32> to vector<32x64xf32>
      %cst_356 = arith.constant dense<0.000000e+00> : vector<32x128xf32>
      %590 = tpu.matmul %589, %584, %cst_356 {dimension_numbers = #tpu.dot_dimension_numbers<[1], [0], [0], [1], [0, 0, 1, 1], [], []>} : vector<32x64xf32>, vector<64x128xf32>, vector<32x128xf32> -> vector<32x128xf32>
      %591 = arith.maximumf %587, %590 : vector<32x128xf32>
      %c0_357 = arith.constant 0 : index
      %c0_358 = arith.constant 0 : index
      %c0_359 = arith.constant 0 : index
      %592 = vector.load %arg7[%c0_357, %c0_358, %c0_359] : memref<2x128x64xf32, #tpu.memory_space<vmem>>, vector<1x128x64xf32>
      %593 = vector.shape_cast %592 : vector<1x128x64xf32> to vector<128x64xf32>
      %cst_360 = arith.constant dense<0.000000e+00> : vector<32x64xf32>
      %594 = tpu.matmul %591, %593, %cst_360 {dimension_numbers = #tpu.dot_dimension_numbers<[1], [0], [0], [1], [0, 0, 1, 1], [], []>} : vector<32x128xf32>, vector<128x64xf32>, vector<32x64xf32> -> vector<32x64xf32>
      %c1_361 = arith.constant 1 : index
      %c0_362 = arith.constant 0 : index
      %c0_363 = arith.constant 0 : index
      %595 = vector.load %arg7[%c1_361, %c0_362, %c0_363] : memref<2x128x64xf32, #tpu.memory_space<vmem>>, vector<1x128x64xf32>
      %596 = vector.shape_cast %595 : vector<1x128x64xf32> to vector<128x64xf32>
      %cst_364 = arith.constant dense<0.000000e+00> : vector<32x64xf32>
      %597 = tpu.matmul %591, %596, %cst_364 {dimension_numbers = #tpu.dot_dimension_numbers<[1], [0], [0], [1], [0, 0, 1, 1], [], []>} : vector<32x128xf32>, vector<128x64xf32>, vector<32x64xf32> -> vector<32x64xf32>
      %598 = arith.maximumf %594, %597 : vector<32x64xf32>
      %599 = tpu.concatenate %340, %598 in 0 : vector<32x64xf32>, vector<32x64xf32> -> vector<64x64xf32>
      %600 = arith.index_cast %arg8 : i32 to index
      %601 = memref.load %arg3[%600] : memref<12xf32, #tpu.memory_space<smem>>
      %602 = vector.broadcast %601 : f32 to vector<64x64xf32>
      %603 = arith.addf %599, %602 : vector<64x64xf32>
      %cst_365 = arith.constant 0.000000e+00 : f32
      %604 = vector.broadcast %cst_365 : f32 to vector<64x64xf32>
      %605 = arith.maximumf %603, %604 : vector<64x64xf32>
      %c0_366 = arith.constant 0 : index
      %606 = arith.index_cast %arg8 : i32 to index
      %c0_367 = arith.constant 0 : index
      %c0_368 = arith.constant 0 : index
      %607 = vector.load %arg4[%c0_366, %606, %c0_367, %c0_368] : memref<1x12x64x64xf32, #tpu.memory_space<vmem>>, vector<1x1x64x64xf32>
      %608 = vector.shape_cast %607 : vector<1x1x64x64xf32> to vector<64x64xf32>
      %609 = vector.shape_cast %605 : vector<64x64xf32> to vector<1x1x64x64xf32>
      tpu.vector_store %arg4[%c0_366, %606, %c0_367, %c0_368], %609 {strides = array<i32>} : memref<1x12x64x64xf32, #tpu.memory_space<vmem>>, vector<1x1x64x64xf32>,
    }
    %c12_i32_48 = arith.constant 12 : i32
    return
  }
  func.func @transform_0(%arg0: i32) -> (i32, i32, i32, i32) {
    %c0_i32 = arith.constant 0 : i32
    %c0_i32_0 = arith.constant 0 : i32
    %c0_i32_1 = arith.constant 0 : i32
    %c0_i32_2 = arith.constant 0 : i32
    return %arg0, %c0_i32, %c0_i32_0, %c0_i32_1 : i32, i32, i32, i32
  }
  func.func @transform_1(%arg0: i32) -> i32 {
    %c0_i32 = arith.constant 0 : i32
    %c0_i32_0 = arith.constant 0 : i32
    return %c0_i32 : i32
  }
  func.func @transform_2(%arg0: i32) -> i32 {
    %c0_i32 = arith.constant 0 : i32
    %c0_i32_0 = arith.constant 0 : i32
    return %c0_i32 : i32
  }
  func.func @transform_3(%arg0: i32) -> (i32, i32, i32, i32) {
    %c0_i32 = arith.constant 0 : i32
    %c0_i32_0 = arith.constant 0 : i32
    %c0_i32_1 = arith.constant 0 : i32
    %c0_i32_2 = arith.constant 0 : i32
    return %arg0, %c0_i32, %c0_i32_0, %c0_i32_1 : i32, i32, i32, i32
  }
}

</mosaic_0001>

<llo_original>
// kernel: tpu_custom_call.1
$region0: #{tpu_custom_call.1}
  #allocation0 [shape = 'u32[]', space=smem, size = 0x4, offset = 0x4, fixed_abs, tag = 'smem constant byte address 0x4 - core index']
  #allocation1 [shape = 'u32[144,128]{1,0:T(1,128)}', space=vmem, size = 0x12000, scoped, tag = 'internal scratch']
  #allocation2 [shape = 'f32[6,130,128]{2,1,0:T(8,128)}', space=vmem, size = 0x66000, scoped, tag = 'scratch operand']
  #allocation3 [shape = 'f32[2,32,64]{2,1,0:T(8,128)}', space=vmem, size = 0x8000, scoped, tag = 'scratch operand']
  #allocation4 [shape = 'f32[2,128,64]{2,1,0:T(8,128)}', space=vmem, size = 0x20000, scoped, tag = 'scratch operand']
  %s0 = inlined_call_operand.vmem [shape: f32[2,3,130,128], index: 0, kind: input, shape index: {}]
  %s1 = inlined_call_operand.vmem [shape: f32[324], index: 1, kind: input, shape index: {}]
  %s2 = inlined_call_operand.vmem [shape: f32[12], index: 2, kind: input, shape index: {}]
  %s3 = inlined_call_operand.hbm [shape: f32[2,12,64,64], index: 3, kind: output, shape index: {}]
  %s4 = sld [smem:[#allocation0]]
  $region60: #{tpu_custom_call.1} parent=0
    _
  %s6 = ssub.s32 1, %s4
  %s7 = scalar_select 0, %s6, %s4
  $region1: #{tpu_custom_call.1} parent=0
    #allocation5 [shape = 'u8[1536]{0}', space=smem, size = 0x600, scoped, tag = 'input window, operand 1, single buffered']
    #allocation6 [shape = 's32[2]{0}', space=sflag, size = 0x8, scoped, tag = 'scoped memory for tpu_custom_call.1']
    #allocation7 [shape = 's32[2]{0}', space=sflag, size = 0x8, scoped, tag = 'scoped memory for tpu_custom_call.1']
    #allocation8 [shape = 'u8[512]{0}', space=smem, size = 0x200, scoped, tag = 'input window, operand 2, single buffered']
    #allocation9 [shape = 's32[1]{0}', space=sflag, size = 0x4, scoped, tag = 'scoped memory for tpu_custom_call.1']
    #allocation10 [shape = 'u8[786432]{0}', space=vmem, size = 0xc0000, scoped, tag = 'output window, operand 0']
    %8 = vsyncpa [#allocation7], 0
    %9 = vsyncpa [#allocation9], 0
    %10 = vsyncpa [#allocation6], 0
    %s11 = scalar_lea.sflag [#allocation6], 1
    %12 = vsyncpa %s11, 0
    loop: start=0, step=1, limit=4
    $region2: #{tpu_custom_call.1} parent=1 // loop_pre_header
      _
    $region3: #{tpu_custom_call.1} parent=1 // loop_header
      %s14 = sphi 0, %s18
      %p15 = scmp.ge.s32.totalorder %s14, 4
      %s24 = sphi 0, %s26
      %s27 = sphi 0, %s24
      %s28 = sphi 0, %s27
      %s44 = sphi 0, %s28
      %s48 = sphi 0, %s48
      %s50 = sphi 0, %s48
      %s51 = sphi 0, %s50
      %s65 = sphi 0, %s51
      %s69 = sphi 0, %s69
      %s71 = sphi 0, %s69
      %s72 = sphi 0, %s71
      %s86 = sphi 0, %s72
      %s92 = sphi 0, %s94
      %s95 = sphi 0, %s92
      %s96 = sphi 0, %s95
      %s112 = sphi 0, %s96
    $region4: #{tpu_custom_call.1} parent=1 // loop_header_branch
      %17 = sbr.rel (%p15) target = $region8
    $region5: #{tpu_custom_call.1} parent=1 // loop_body
      %s19 = ssub.s32 %s14, 1
      %s20 = ssub.s32 %s14, 2
      %s21 = sadd.s32 %s14, 1
      %s22 = ssub.s32 %s14, %s21
      %p23 = scmp.eq.s32.totalorder %s22, 0
      %s25 = sadd.s32 %s24, 1
      %s26 = scalar_select %p23, %s24, %s25
      %p29 = pneg %p23
      %p30 = scmp.eq.s32.totalorder %s14, 1
      %p31 = por %p29, %p30
      %p32 = scmp.ne.s32.totalorder %s24, %s27
      %p33 = scmp.eq.s32.totalorder %s14, 0
      %p34 = por %p32, %p33
      %p35 = scmp.ne.s32.totalorder %s24, %s27
      %p36 = scmp.eq.s32.totalorder %s19, 1
      %p37 = por %p35, %p36
      %p38 = scmp.ne.s32.totalorder %s27, %s28
      %p39 = scmp.eq.s32.totalorder %s19, 0
      %p40 = por %p38, %p39
      %p41 = scmp.ne.s32.totalorder %s27, %s28
      %p42 = scmp.eq.s32.totalorder %s20, 1
      %p43 = por %p41, %p42
      %p45 = scmp.ne.s32.totalorder %s28, %s44
      %p46 = scmp.eq.s32.totalorder %s20, 0
      %p47 = por %p45, %p46
      %s49 = sadd.s32 %s48, 1
      %p52 = scmp.eq.s32.totalorder %s14, 1
      %p53 = scmp.ne.s32.totalorder %s48, %s50
      %p54 = scmp.eq.s32.totalorder %s14, 0
      %p55 = por %p53, %p54
      %p56 = scmp.ne.s32.totalorder %s48, %s50
      %p57 = scmp.eq.s32.totalorder %s19, 1
      %p58 = por %p56, %p57
      %p59 = scmp.ne.s32.totalorder %s50, %s51
      %p60 = scmp.eq.s32.totalorder %s19, 0
      %p61 = por %p59, %p60
      %p62 = scmp.ne.s32.totalorder %s50, %s51
      %p63 = scmp.eq.s32.totalorder %s20, 1
      %p64 = por %p62, %p63
      %p66 = scmp.ne.s32.totalorder %s51, %s65
      %p67 = scmp.eq.s32.totalorder %s20, 0
      %p68 = por %p66, %p67
      %s70 = sadd.s32 %s69, 1
      %p73 = scmp.eq.s32.totalorder %s14, 1
      %p74 = scmp.ne.s32.totalorder %s69, %s71
      %p75 = scmp.eq.s32.totalorder %s14, 0
      %p76 = por %p74, %p75
      %p77 = scmp.ne.s32.totalorder %s69, %s71
      %p78 = scmp.eq.s32.totalorder %s19, 1
      %p79 = por %p77, %p78
      %p80 = scmp.ne.s32.totalorder %s71, %s72
      %p81 = scmp.eq.s32.totalorder %s19, 0
      %p82 = por %p80, %p81
      %p83 = scmp.ne.s32.totalorder %s71, %s72
      %p84 = scmp.eq.s32.totalorder %s20, 1
      %p85 = por %p83, %p84
      %p87 = scmp.ne.s32.totalorder %s72, %s86
      %p88 = scmp.eq.s32.totalorder %s20, 0
      %p89 = por %p87, %p88
      %s90 = ssub.s32 %s14, %s21
      %p91 = scmp.eq.s32.totalorder %s90, 0
      %s93 = sadd.s32 %s92, 1
      %s94 = scalar_select %p91, %s92, %s93
      %p97 = pneg %p91
      %p98 = scmp.eq.s32.totalorder %s14, 1
      %p99 = por %p97, %p98
      %p100 = scmp.ne.s32.totalorder %s92, %s95
      %p101 = scmp.eq.s32.totalorder %s14, 0
      %p102 = por %p100, %p101
      %p103 = scmp.ne.s32.totalorder %s92, %s95
      %p104 = scmp.eq.s32.totalorder %s19, 1
      %p105 = por %p103, %p104
      %p106 = scmp.ne.s32.totalorder %s95, %s96
      %p107 = scmp.eq.s32.totalorder %s19, 0
      %p108 = por %p106, %p107
      %p109 = scmp.ne.s32.totalorder %s95, %s96
      %p110 = scmp.eq.s32.totalorder %s20, 1
      %p111 = por %p109, %p110
      %p113 = scmp.ne.s32.totalorder %s96, %s112
      %p114 = scmp.eq.s32.totalorder %s20, 0
      %p115 = por %p113, %p114
      %p116 = scmp.le.s32.totalorder 1, %s14
      %p117 = scmp.lt.s32.totalorder %s14, 3
      %p118 = pnand %p116, %p117
      %p119 = pneg %p118
      // Predicated region
      $region9: #{tpu_custom_call.1} parent=5 // pred_check
        _
      $region10: #{tpu_custom_call.1} parent=5 // pred_check_branch
        %121 = sbr.rel (%p118) target = $region12
      $region11: #{tpu_custom_call.1} parent=5 // pred_region
        %s122 = ssub.s32 %s14, 1
        // Predicated region
        $region13: #{tpu_custom_call.1} parent=11 // pred_check
          %p123 = pneg %p61
        $region14: #{tpu_custom_call.1} parent=11 // pred_check_branch
          %125 = sbr.rel (%p123) target = $region16
        $region15: #{tpu_custom_call.1} parent=11 // pred_region
          %s127 = ssub.s32 48, 48
          %128 = vsyncadd [#allocation7], %s127
          %s130 = sshll.u32 %s1, 4
          %s131 = int_to_ptr.vmem [resolvable:$true] %s130
          %133 = dma.vmem_to_smem %s131, 48, [#allocation5], [#allocation7]
        $region16: #{tpu_custom_call.1} parent=11 // pred_fallthru
          _
        // Predicated region
        $region17: #{tpu_custom_call.1} parent=11 // pred_check
          %p134 = pneg %p82
        $region18: #{tpu_custom_call.1} parent=11 // pred_check_branch
          %136 = sbr.rel (%p134) target = $region20
        $region19: #{tpu_custom_call.1} parent=11 // pred_region
          %s138 = ssub.s32 16, 16
          %139 = vsyncadd [#allocation9], %s138
          %s141 = sshll.u32 %s2, 4
          %s142 = int_to_ptr.vmem [resolvable:$true] %s141
          %144 = dma.vmem_to_smem %s142, 16, [#allocation8], [#allocation9]
        $region20: #{tpu_custom_call.1} parent=11 // pred_fallthru
          _
      $region12: #{tpu_custom_call.1} parent=5 // pred_fallthru
        _
      %p145 = scmp.lt.s32.totalorder %s14, 2
      // Predicated region
      $region21: #{tpu_custom_call.1} parent=5 // pred_check
        %p146 = pneg %p145
      $region22: #{tpu_custom_call.1} parent=5 // pred_check_branch
        %148 = sbr.rel (%p146) target = $region24
      $region23: #{tpu_custom_call.1} parent=5 // pred_region
        // Predicated region
        $region25: #{tpu_custom_call.1} parent=23 // pred_check
          %p149 = pneg %p34
        $region26: #{tpu_custom_call.1} parent=23 // pred_check_branch
          %151 = sbr.rel (%p149) target = $region28
        $region27: #{tpu_custom_call.1} parent=23 // pred_region
          %p152 = scmp.lt.s32.totalorder %s14, 1
          %s153 = scalar_select %p152, %s14, 1
          %s154 = smul.addr %s153, 51
          %s155 = smul.addr %s154, 8
          %s156 = scalar_lea.vmem %s0, %s155
        $region28: #{tpu_custom_call.1} parent=23 // pred_fallthru
          _
      $region24: #{tpu_custom_call.1} parent=5 // pred_fallthru
        _
      %p157 = scmp.le.s32.totalorder 1, %s14
      %p158 = scmp.lt.s32.totalorder %s14, 3
      %p159 = pnand %p157, %p158
      %p160 = pneg %p159
      // Predicated region
      $region29: #{tpu_custom_call.1} parent=5 // pred_check
        _
      $region30: #{tpu_custom_call.1} parent=5 // pred_check_branch
        %162 = sbr.rel (%p159) target = $region32
      $region31: #{tpu_custom_call.1} parent=5 // pred_region
        %s163 = ssub.s32 %s14, 1
        // Predicated region
        $region33: #{tpu_custom_call.1} parent=31 // pred_check
          %p164 = pneg %p61
        $region34: #{tpu_custom_call.1} parent=31 // pred_check_branch
          %166 = sbr.rel (%p164) target = $region36
        $region35: #{tpu_custom_call.1} parent=31 // pred_region
          %167 = dma.done [#allocation7], 48
        $region36: #{tpu_custom_call.1} parent=31 // pred_fallthru
          _
        // Predicated region
        $region37: #{tpu_custom_call.1} parent=31 // pred_check
          %p168 = pneg %p82
        $region38: #{tpu_custom_call.1} parent=31 // pred_check_branch
          %170 = sbr.rel (%p168) target = $region40
        $region39: #{tpu_custom_call.1} parent=31 // pred_region
          %171 = dma.done [#allocation9], 16
        $region40: #{tpu_custom_call.1} parent=31 // pred_fallthru
          _
        %172 = sfence
        %p173 = scmp.lt.s32.totalorder %s19, 1
        %s174 = scalar_select %p173, %s19, 1
        %s175 = smul.addr %s174, 51
        %s176 = smul.addr %s175, 8
        %s177 = scalar_lea.vmem %s0, %s176
        %p178 = pneg %p40
        %p179 = pneg %p37
        %p180 = pneg %p61
        %p181 = pneg %p58
        %p182 = pneg %p82
        %p183 = pneg %p79
        %p184 = pneg %p108
        %p185 = pneg %p105
        %s186 = sand.u32 %s95, 1
        %s187 = scalar_lea.sflag [#allocation6], %s186
        %s188 = sand.u32 %s95, 1
        %s189 = smul.addr %s188, 768
        %s190 = scalar_lea.vmem [#allocation10], %s189
        %p191 = scmp.lt.s32.totalorder %s19, 1
        %s192 = scalar_select %p191, %s19, 1
        %s193 = smul.addr %s192, 51
        %s194 = smul.addr %s193, 8
        %s195 = scalar_lea.vmem %s0, %s194
        %v196 = vlaneseq
        %v197 = vshrl.u32 %v196, 7
        %v198 = vadd.s32 %v197, 8
        %v199 = vadd.s32 %v197, 16
        %v200 = vadd.s32 %v197, 24
        %v201 = vadd.s32 %v197, 32
        %v202 = vadd.s32 %v197, 40
        %v203 = vadd.s32 %v197, 48
        %v204 = vadd.s32 %v197, 56
        %v205 = vadd.s32 %v197, 64
        %v206 = vadd.s32 %v197, 72
        %v207 = vadd.s32 %v197, 80
        %v208 = vadd.s32 %v197, 88
        %v209 = vadd.s32 %v197, 96
        %v210 = vadd.s32 %v197, 104
        %v211 = vadd.s32 %v197, 112
        %v212 = vadd.s32 %v197, 120
        %v213 = vlaneseq
        %v214 = vand.u32 %v213, 127
        %v215 = vsub.s32 %v214, 1
        %vm216 = vcmp.eq.s32.totalorder %v197, %v215
        %vm217 = vcmp.eq.s32.totalorder %v198, %v215
        %vm218 = vcmp.eq.s32.totalorder %v199, %v215
        %vm219 = vcmp.eq.s32.totalorder %v200, %v215
        %vm220 = vcmp.eq.s32.totalorder %v201, %v215
        %vm221 = vcmp.eq.s32.totalorder %v202, %v215
        %vm222 = vcmp.eq.s32.totalorder %v203, %v215
        %vm223 = vcmp.eq.s32.totalorder %v204, %v215
        %vm224 = vcmp.eq.s32.totalorder %v205, %v215
        %vm225 = vcmp.eq.s32.totalorder %v206, %v215
        %vm226 = vcmp.eq.s32.totalorder %v207, %v215
        %vm227 = vcmp.eq.s32.totalorder %v208, %v215
        %vm228 = vcmp.eq.s32.totalorder %v209, %v215
        %vm229 = vcmp.eq.s32.totalorder %v210, %v215
        %vm230 = vcmp.eq.s32.totalorder %v211, %v215
        %vm231 = vcmp.eq.s32.totalorder %v212, %v215
        %v232 = vsel %vm216, 1, 0
        %v233 = vsel %vm217, 1, 0
        %v234 = vsel %vm218, 1, 0
        %v235 = vsel %vm219, 1, 0
        %v236 = vsel %vm220, 1, 0
        %v237 = vsel %vm221, 1, 0
        %v238 = vsel %vm222, 1, 0
        %v239 = vsel %vm223, 1, 0
        %v240 = vsel %vm224, 1, 0
        %v241 = vsel %vm225, 1, 0
        %v242 = vsel %vm226, 1, 0
        %v243 = vsel %vm227, 1, 0
        %v244 = vsel %vm228, 1, 0
        %v245 = vsel %vm229, 1, 0
        %v246 = vsel %vm230, 1, 0
        %v247 = vsel %vm231, 1, 0
        %v248 = vcvt.s32.f32 %v232
        %v249 = vcvt.s32.f32 %v233
        %v250 = vcvt.s32.f32 %v234
        %v251 = vcvt.s32.f32 %v235
        %v252 = vcvt.s32.f32 %v236
        %v253 = vcvt.s32.f32 %v237
        %v254 = vcvt.s32.f32 %v238
        %v255 = vcvt.s32.f32 %v239
        %v256 = vcvt.s32.f32 %v240
        %v257 = vcvt.s32.f32 %v241
        %v258 = vcvt.s32.f32 %v242
        %v259 = vcvt.s32.f32 %v243
        %v260 = vcvt.s32.f32 %v244
        %v261 = vcvt.s32.f32 %v245
        %v262 = vcvt.s32.f32 %v246
        %v263 = vcvt.s32.f32 %v247
        %v264 = vadd.s32 %v214, 1
        %vm265 = vcmp.eq.s32.totalorder %v197, %v264
        %vm266 = vcmp.eq.s32.totalorder %v198, %v264
        %vm267 = vcmp.eq.s32.totalorder %v199, %v264
        %vm268 = vcmp.eq.s32.totalorder %v200, %v264
        %vm269 = vcmp.eq.s32.totalorder %v201, %v264
        %vm270 = vcmp.eq.s32.totalorder %v202, %v264
        %vm271 = vcmp.eq.s32.totalorder %v203, %v264
        %vm272 = vcmp.eq.s32.totalorder %v204, %v264
        %vm273 = vcmp.eq.s32.totalorder %v205, %v264
        %vm274 = vcmp.eq.s32.totalorder %v206, %v264
        %vm275 = vcmp.eq.s32.totalorder %v207, %v264
        %vm276 = vcmp.eq.s32.totalorder %v208, %v264
        %vm277 = vcmp.eq.s32.totalorder %v209, %v264
        %vm278 = vcmp.eq.s32.totalorder %v210, %v264
        %vm279 = vcmp.eq.s32.totalorder %v211, %v264
        %vm280 = vcmp.eq.s32.totalorder %v212, %v264
        %v281 = vsel %vm265, 1, 0
        %v282 = vsel %vm266, 1, 0
        %v283 = vsel %vm267, 1, 0
        %v284 = vsel %vm268, 1, 0
        %v285 = vsel %vm269, 1, 0
        %v286 = vsel %vm270, 1, 0
        %v287 = vsel %vm271, 1, 0
        %v288 = vsel %vm272, 1, 0
        %v289 = vsel %vm273, 1, 0
        %v290 = vsel %vm274, 1, 0
        %v291 = vsel %vm275, 1, 0
        %v292 = vsel %vm276, 1, 0
        %v293 = vsel %vm277, 1, 0
        %v294 = vsel %vm278, 1, 0
        %v295 = vsel %vm279, 1, 0
        %v296 = vsel %vm280, 1, 0
        %v297 = vcvt.s32.f32 %v281
        %v298 = vcvt.s32.f32 %v282
        %v299 = vcvt.s32.f32 %v283
        %v300 = vcvt.s32.f32 %v284
        %v301 = vcvt.s32.f32 %v285
        %v302 = vcvt.s32.f32 %v286
        %v303 = vcvt.s32.f32 %v287
        %v304 = vcvt.s32.f32 %v288
        %v305 = vcvt.s32.f32 %v289
        %v306 = vcvt.s32.f32 %v290
        %v307 = vcvt.s32.f32 %v291
        %v308 = vcvt.s32.f32 %v292
        %v309 = vcvt.s32.f32 %v293
        %v310 = vcvt.s32.f32 %v294
        %v311 = vcvt.s32.f32 %v295
        %v312 = vcvt.s32.f32 %v296
        %v313 = vld [vmem:[%s195] sm:$0xff]
        %v314 = vld [vmem:[%s195 + $0x8] sm:$0xff]
        %v315 = vld [vmem:[%s195 + $0x10] sm:$0xff]
        %v316 = vld [vmem:[%s195 + $0x18] sm:$0xff]
        %v317 = vld [vmem:[%s195 + $0x20] sm:$0xff]
        %v318 = vld [vmem:[%s195 + $0x28] sm:$0xff]
        %v319 = vld [vmem:[%s195 + $0x30] sm:$0xff]
        %v320 = vld [vmem:[%s195 + $0x38] sm:$0xff]
        %v321 = vld [vmem:[%s195 + $0x40] sm:$0xff]
        %v322 = vld [vmem:[%s195 + $0x48] sm:$0xff]
        %v323 = vld [vmem:[%s195 + $0x50] sm:$0xff]
        %v324 = vld [vmem:[%s195 + $0x58] sm:$0xff]
        %v325 = vld [vmem:[%s195 + $0x60] sm:$0xff]
        %v326 = vld [vmem:[%s195 + $0x68] sm:$0xff]
        %v327 = vld [vmem:[%s195 + $0x70] sm:$0xff]
        %v328 = vld [vmem:[%s195 + $0x78] sm:$0xff]
        %v329 = vld [vmem:[%s195 + $0x80] sm:$0x3]
        %330 = vmatprep.subr.mxu0 0.0
        %331 = vmatpush1.msra.mxu0 %v248
        %332 = vmatprep.subr.mxu0 0.0
        %333 = vmatpush1.msra.mxu0 %v249
        %334 = vmatprep.subr.mxu0 0.0
        %335 = vmatpush1.msra.mxu0 %v250
        %336 = vmatprep.subr.mxu0 0.0
        %337 = vmatpush1.msra.mxu0 %v251
        %338 = vmatprep.subr.mxu0 0.0
        %339 = vmatpush1.msra.mxu0 %v252
        %340 = vmatprep.subr.mxu0 0.0
        %341 = vmatpush1.msra.mxu0 %v253
        %342 = vmatprep.subr.mxu0 0.0
        %343 = vmatpush1.msra.mxu0 %v254
        %344 = vmatprep.subr.mxu0 0.0
        %345 = vmatpush1.msra.mxu0 %v255
        %346 = vmatprep.subr.mxu0 0.0
        %347 = vmatpush1.msra.mxu0 %v256
        %348 = vmatprep.subr.mxu0 0.0
        %349 = vmatpush1.msra.mxu0 %v257
        %350 = vmatprep.subr.mxu0 0.0
        %351 = vmatpush1.msra.mxu0 %v258
        %352 = vmatprep.subr.mxu0 0.0
        %353 = vmatpush1.msra.mxu0 %v259
        %354 = vmatprep.subr.mxu0 0.0
        %355 = vmatpush1.msra.mxu0 %v260
        %356 = vmatprep.subr.mxu0 0.0
        %357 = vmatpush1.msra.mxu0 %v261
        %358 = vmatprep.subr.mxu0 0.0
        %359 = vmatpush1.msra.mxu0 %v262
        %360 = vmatprep.subr.mxu0 0.0
        %361 = vmatpush1.msra.mxu0 %v263
        %362 = vmatprep.subr.mxu0 0.0
        %363 = vmatpush1.msra.mxu0 0.0
        %364 = vmatprep.subr.mxu0 0.0
        %365 = vmatpush1.msra.mxu0 0.0
        %366 = vmatprep.subr.mxu0 0.0
        %367 = vmatpush1.msra.mxu0 0.0
        %368 = vmatprep.subr.mxu0 0.0
        %369 = vmatpush1.msra.mxu0 0.0
        %370 = vmatprep.subr.mxu0 0.0
        %371 = vmatpush1.msra.mxu0 0.0
        %372 = vmatprep.subr.mxu0 0.0
        %373 = vmatpush1.msra.mxu0 0.0
        %374 = vmatprep.subr.mxu0 0.0
        %375 = vmatpush1.msra.mxu0 0.0
        %376 = vmatprep.subr.mxu0 0.0
        %377 = vmatpush1.msra.mxu0 0.0
        %378 = vmatprep.subr.mxu0 0.0
        %379 = vmatpush1.msra.mxu0 0.0
        %380 = vmatprep.subr.mxu0 0.0
        %381 = vmatpush1.msra.mxu0 0.0
        %382 = vmatprep.subr.mxu0 0.0
        %383 = vmatpush1.msra.mxu0 0.0
        %384 = vmatprep.subr.mxu0 0.0
        %385 = vmatpush1.msra.mxu0 0.0
        %386 = vmatprep.subr.mxu0 0.0
        %387 = vmatpush1.msra.mxu0 0.0
        %388 = vmatprep.subr.mxu0 0.0
        %389 = vmatpush1.msra.mxu0 0.0
        %390 = vmatprep.subr.mxu0 0.0
        %391 = vmatpush1.msra.mxu0 0.0
        %392 = vmatprep.subr.mxu0 0.0
        %393 = vmatpush1.msra.mxu0 0.0
        %394 = vmatprep.mubr.f32.mxu0 0.0
        %395 = vmatmul.mubr.f32.gmra.mrb[0].mxu0 %v313
        %v396 = vpop.f32.mrb[0].mxu0
        %v397 = vadd.f32 0.0, %v396
        %v398 = vpop.f32.mrb[0].mxu0
        %399 = vmatprep.mubr.f32.mxu0 0.0
        %400 = vmatmul.mubr.f32.gmra.mrb[0].mxu0 %v314
        %v401 = vpop.f32.mrb[0].mxu0
        %v402 = vadd.f32 0.0, %v401
        %v403 = vpop.f32.mrb[0].mxu0
        %404 = vmatprep.mubr.f32.mxu0 0.0
        %405 = vmatmul.mubr.f32.gmra.mrb[0].mxu0 %v315
        %v406 = vpop.f32.mrb[0].mxu0
        %v407 = vadd.f32 0.0, %v406
        %v408 = vpop.f32.mrb[0].mxu0
        %409 = vmatprep.mubr.f32.mxu0 0.0
        %410 = vmatmul.mubr.f32.gmra.mrb[0].mxu0 %v316
        %v411 = vpop.f32.mrb[0].mxu0
        %v412 = vadd.f32 0.0, %v411
        %v413 = vpop.f32.mrb[0].mxu0
        %414 = vmatprep.mubr.f32.mxu0 0.0
        %415 = vmatmul.mubr.f32.gmra.mrb[0].mxu0 %v317
        %v416 = vpop.f32.mrb[0].mxu0
        %v417 = vadd.f32 0.0, %v416
        %v418 = vpop.f32.mrb[0].mxu0
        %419 = vmatprep.mubr.f32.mxu0 0.0
        %420 = vmatmul.mubr.f32.gmra.mrb[0].mxu0 %v318
        %v421 = vpop.f32.mrb[0].mxu0
        %v422 = vadd.f32 0.0, %v421
        %v423 = vpop.f32.mrb[0].mxu0
        %424 = vmatprep.mubr.f32.mxu0 0.0
        %425 = vmatmul.mubr.f32.gmra.mrb[0].mxu0 %v319
        %v426 = vpop.f32.mrb[0].mxu0
        %v427 = vadd.f32 0.0, %v426
        %v428 = vpop.f32.mrb[0].mxu0
        %429 = vmatprep.mubr.f32.mxu0 0.0
        %430 = vmatmul.mubr.f32.gmra.mrb[0].mxu0 %v320
        %v431 = vpop.f32.mrb[0].mxu0
        %v432 = vadd.f32 0.0, %v431
        %v433 = vpop.f32.mrb[0].mxu0
        %434 = vmatprep.mubr.f32.mxu0 0.0
        %435 = vmatmul.mubr.f32.gmra.mrb[0].mxu0 %v321
        %v436 = vpop.f32.mrb[0].mxu0
        %v437 = vadd.f32 0.0, %v436
        %v438 = vpop.f32.mrb[0].mxu0
        %439 = vmatprep.mubr.f32.mxu0 0.0
        %440 = vmatmul.mubr.f32.gmra.mrb[0].mxu0 %v322
        %v441 = vpop.f32.mrb[0].mxu0
        %v442 = vadd.f32 0.0, %v441
        %v443 = vpop.f32.mrb[0].mxu0
        %444 = vmatprep.mubr.f32.mxu0 0.0
        %445 = vmatmul.mubr.f32.gmra.mrb[0].mxu0 %v323
        %v446 = vpop.f32.mrb[0].mxu0
        %v447 = vadd.f32 0.0, %v446
        %v448 = vpop.f32.mrb[0].mxu0
        %449 = vmatprep.mubr.f32.mxu0 0.0
        %450 = vmatmul.mubr.f32.gmra.mrb[0].mxu0 %v324
        %v451 = vpop.f32.mrb[0].mxu0
        %v452 = vadd.f32 0.0, %v451
        %v453 = vpop.f32.mrb[0].mxu0
        %454 = vmatprep.mubr.f32.mxu0 0.0
        %455 = vmatmul.mubr.f32.gmra.mrb[0].mxu0 %v325
        %v456 = vpop.f32.mrb[0].mxu0
        %v457 = vadd.f32 0.0, %v456
        %v458 = vpop.f32.mrb[0].mxu0
        %459 = vmatprep.mubr.f32.mxu0 0.0
        %460 = vmatmul.mubr.f32.gmra.mrb[0].mxu0 %v326
        %v461 = vpop.f32.mrb[0].mxu0
        %v462 = vadd.f32 0.0, %v461
        %v463 = vpop.f32.mrb[0].mxu0
        %464 = vmatprep.mubr.f32.mxu0 0.0
        %465 = vmatmul.mubr.f32.gmra.mrb[0].mxu0 %v327
        %v466 = vpop.f32.mrb[0].mxu0
        %v467 = vadd.f32 0.0, %v466
        %v468 = vpop.f32.mrb[0].mxu0
        %469 = vmatprep.mubr.f32.mxu0 0.0
        %470 = vmatmul.mubr.f32.gmra.mrb[0].mxu0 %v328
        %v471 = vpop.f32.mrb[0].mxu0
        %v472 = vadd.f32 0.0, %v471
        %v473 = vpop.f32.mrb[0].mxu0
        %474 = vmatprep.mubr.f32.mxu0 0.0
        %475 = vmatmul.mubr.f32.gmra.mrb[0].mxu0 %v329
        %v476 = vpop.f32.mrb[0].mxu0
        %v477 = vadd.f32 0.0, %v476
        %v478 = vpop.f32.mrb[0].mxu0
        %479 = vdwg.mxu0
        %480 = vst [vmem:[#allocation2] sm:$0xff] %v397
        %481 = vst [vmem:[#allocation2 + $0x8] sm:$0xff] %v402
        %482 = vst [vmem:[#allocation2 + $0x10] sm:$0xff] %v407
        %483 = vst [vmem:[#allocation2 + $0x18] sm:$0xff] %v412
        %484 = vst [vmem:[#allocation2 + $0x20] sm:$0xff] %v417
        %485 = vst [vmem:[#allocation2 + $0x28] sm:$0xff] %v422
        %486 = vst [vmem:[#allocation2 + $0x30] sm:$0xff] %v427
        %487 = vst [vmem:[#allocation2 + $0x38] sm:$0xff] %v432
        %488 = vst [vmem:[#allocation2 + $0x40] sm:$0xff] %v437
        %489 = vst [vmem:[#allocation2 + $0x48] sm:$0xff] %v442
        %490 = vst [vmem:[#allocation2 + $0x50] sm:$0xff] %v447
        %491 = vst [vmem:[#allocation2 + $0x58] sm:$0xff] %v452
        %492 = vst [vmem:[#allocation2 + $0x60] sm:$0xff] %v457
        %493 = vst [vmem:[#allocation2 + $0x68] sm:$0xff] %v462
        %494 = vst [vmem:[#allocation2 + $0x70] sm:$0xff] %v467
        %495 = vst [vmem:[#allocation2 + $0x78] sm:$0xff] %v472
        %496 = vst [vmem:[#allocation2 + $0x80] sm:$0x3] %v477
        %497 = vmatprep.subr.mxu0 0.0
        %498 = vmatpush1.msra.mxu0 %v297
        %499 = vmatprep.subr.mxu0 0.0
        %500 = vmatpush1.msra.mxu0 %v298
        %501 = vmatprep.subr.mxu0 0.0
        %502 = vmatpush1.msra.mxu0 %v299
        %503 = vmatprep.subr.mxu0 0.0
        %504 = vmatpush1.msra.mxu0 %v300
        %505 = vmatprep.subr.mxu0 0.0
        %506 = vmatpush1.msra.mxu0 %v301
        %507 = vmatprep.subr.mxu0 0.0
        %508 = vmatpush1.msra.mxu0 %v302
        %509 = vmatprep.subr.mxu0 0.0
        %510 = vmatpush1.msra.mxu0 %v303
        %511 = vmatprep.subr.mxu0 0.0
        %512 = vmatpush1.msra.mxu0 %v304
        %513 = vmatprep.subr.mxu0 0.0
        %514 = vmatpush1.msra.mxu0 %v305
        %515 = vmatprep.subr.mxu0 0.0
        %516 = vmatpush1.msra.mxu0 %v306
        %517 = vmatprep.subr.mxu0 0.0
        %518 = vmatpush1.msra.mxu0 %v307
        %519 = vmatprep.subr.mxu0 0.0
        %520 = vmatpush1.msra.mxu0 %v308
        %521 = vmatprep.subr.mxu0 0.0
        %522 = vmatpush1.msra.mxu0 %v309
        %523 = vmatprep.subr.mxu0 0.0
        %524 = vmatpush1.msra.mxu0 %v310
        %525 = vmatprep.subr.mxu0 0.0
        %526 = vmatpush1.msra.mxu0 %v311
        %527 = vmatprep.subr.mxu0 0.0
        %528 = vmatpush1.msra.mxu0 %v312
        %529 = vmatprep.subr.mxu0 0.0
        %530 = vmatpush1.msra.mxu0 0.0
        %531 = vmatprep.subr.mxu0 0.0
        %532 = vmatpush1.msra.mxu0 0.0
        %533 = vmatprep.subr.mxu0 0.0
        %534 = vmatpush1.msra.mxu0 0.0
        %535 = vmatprep.subr.mxu0 0.0
        %536 = vmatpush1.msra.mxu0 0.0
        %537 = vmatprep.subr.mxu0 0.0
        %538 = vmatpush1.msra.mxu0 0.0
        %539 = vmatprep.subr.mxu0 0.0
        %540 = vmatpush1.msra.mxu0 0.0
        %541 = vmatprep.subr.mxu0 0.0
        %542 = vmatpush1.msra.mxu0 0.0
        %543 = vmatprep.subr.mxu0 0.0
        %544 = vmatpush1.msra.mxu0 0.0
        %545 = vmatprep.subr.mxu0 0.0
        %546 = vmatpush1.msra.mxu0 0.0
        %547 = vmatprep.subr.mxu0 0.0
        %548 = vmatpush1.msra.mxu0 0.0
        %549 = vmatprep.subr.mxu0 0.0
        %550 = vmatpush1.msra.mxu0 0.0
        %551 = vmatprep.subr.mxu0 0.0
        %552 = vmatpush1.msra.mxu0 0.0
        %553 = vmatprep.subr.mxu0 0.0
        %554 = vmatpush1.msra.mxu0 0.0
        %555 = vmatprep.subr.mxu0 0.0
        %556 = vmatpush1.msra.mxu0 0.0
        %557 = vmatprep.subr.mxu0 0.0
        %558 = vmatpush1.msra.mxu0 0.0
        %559 = vmatprep.subr.mxu0 0.0
        %560 = vmatpush1.msra.mxu0 0.0
        %561 = vmatprep.mubr.f32.mxu0 0.0
        %562 = vmatmul.mubr.f32.gmra.mrb[0].mxu0 %v313
        %v563 = vpop.f32.mrb[0].mxu0
        %v564 = vadd.f32 0.0, %v563
        %v565 = vpop.f32.mrb[0].mxu0
        %566 = vmatprep.mubr.f32.mxu0 0.0
        %567 = vmatmul.mubr.f32.gmra.mrb[0].mxu0 %v314
        %v568 = vpop.f32.mrb[0].mxu0
        %v569 = vadd.f32 0.0, %v568
        %v570 = vpop.f32.mrb[0].mxu0
        %571 = vmatprep.mubr.f32.mxu0 0.0
        %572 = vmatmul.mubr.f32.gmra.mrb[0].mxu0 %v315
        %v573 = vpop.f32.mrb[0].mxu0
        %v574 = vadd.f32 0.0, %v573
        %v575 = vpop.f32.mrb[0].mxu0
        %576 = vmatprep.mubr.f32.mxu0 0.0
        %577 = vmatmul.mubr.f32.gmra.mrb[0].mxu0 %v316
        %v578 = vpop.f32.mrb[0].mxu0
        %v579 = vadd.f32 0.0, %v578
        %v580 = vpop.f32.mrb[0].mxu0
        %581 = vmatprep.mubr.f32.mxu0 0.0
        %582 = vmatmul.mubr.f32.gmra.mrb[0].mxu0 %v317
        %v583 = vpop.f32.mrb[0].mxu0
        %v584 = vadd.f32 0.0, %v583
        %v585 = vpop.f32.mrb[0].mxu0
        %586 = vmatprep.mubr.f32.mxu0 0.0
        %587 = vmatmul.mubr.f32.gmra.mrb[0].mxu0 %v318
        %v588 = vpop.f32.mrb[0].mxu0
        %v589 = vadd.f32 0.0, %v588
        %v590 = vpop.f32.mrb[0].mxu0
        %591 = vmatprep.mubr.f32.mxu0 0.0
        %592 = vmatmul.mubr.f32.gmra.mrb[0].mxu0 %v319
        %v593 = vpop.f32.mrb[0].mxu0
        %v594 = vadd.f32 0.0, %v593
        %v595 = vpop.f32.mrb[0].mxu0
        %596 = vmatprep.mubr.f32.mxu0 0.0
        %597 = vmatmul.mubr.f32.gmra.mrb[0].mxu0 %v320
        %v598 = vpop.f32.mrb[0].mxu0
        %v599 = vadd.f32 0.0, %v598
        %v600 = vpop.f32.mrb[0].mxu0
        %601 = vmatprep.mubr.f32.mxu0 0.0
        %602 = vmatmul.mubr.f32.gmra.mrb[0].mxu0 %v321
        %v603 = vpop.f32.mrb[0].mxu0
        %v604 = vadd.f32 0.0, %v603
        %v605 = vpop.f32.mrb[0].mxu0
        %606 = vmatprep.mubr.f32.mxu0 0.0
        %607 = vmatmul.mubr.f32.gmra.mrb[0].mxu0 %v322
        %v608 = vpop.f32.mrb[0].mxu0
        %v609 = vadd.f32 0.0, %v608
        %v610 = vpop.f32.mrb[0].mxu0
        %611 = vmatprep.mubr.f32.mxu0 0.0
        %612 = vmatmul.mubr.f32.gmra.mrb[0].mxu0 %v323
        %v613 = vpop.f32.mrb[0].mxu0
        %v614 = vadd.f32 0.0, %v613
        %v615 = vpop.f32.mrb[0].mxu0
        %616 = vmatprep.mubr.f32.mxu0 0.0
        %617 = vmatmul.mubr.f32.gmra.mrb[0].mxu0 %v324
        %v618 = vpop.f32.mrb[0].mxu0
        %v619 = vadd.f32 0.0, %v618
        %v620 = vpop.f32.mrb[0].mxu0
        %621 = vmatprep.mubr.f32.mxu0 0.0
        %622 = vmatmul.mubr.f32.gmra.mrb[0].mxu0 %v325
        %v623 = vpop.f32.mrb[0].mxu0
        %v624 = vadd.f32 0.0, %v623
        %v625 = vpop.f32.mrb[0].mxu0
        %626 = vmatprep.mubr.f32.mxu0 0.0
        %627 = vmatmul.mubr.f32.gmra.mrb[0].mxu0 %v326
        %v628 = vpop.f32.mrb[0].mxu0
        %v629 = vadd.f32 0.0, %v628
        %v630 = vpop.f32.mrb[0].mxu0
        %631 = vmatprep.mubr.f32.mxu0 0.0
        %632 = vmatmul.mubr.f32.gmra.mrb[0].mxu0 %v327
        %v633 = vpop.f32.mrb[0].mxu0
        %v634 = vadd.f32 0.0, %v633
        %v635 = vpop.f32.mrb[0].mxu0
        %636 = vmatprep.mubr.f32.mxu0 0.0
        %637 = vmatmul.mubr.f32.gmra.mrb[0].mxu0 %v328
        %v638 = vpop.f32.mrb[0].mxu0
        %v639 = vadd.f32 0.0, %v638
        %v640 = vpop.f32.mrb[0].mxu0
        %641 = vmatprep.mubr.f32.mxu0 0.0
        %642 = vmatmul.mubr.f32.gmra.mrb[0].mxu0 %v329
        %v643 = vpop.f32.mrb[0].mxu0
        %v644 = vadd.f32 0.0, %v643
        %v645 = vpop.f32.mrb[0].mxu0
        %646 = vdwg.mxu0
        %s647 = scalar_lea.vmem [#allocation2], 136
        %648 = vst [vmem:[%s647] sm:$0xff] %v564
        %649 = vst [vmem:[%s647 + $0x8] sm:$0xff] %v569
        %650 = vst [vmem:[%s647 + $0x10] sm:$0xff] %v574
        %651 = vst [vmem:[%s647 + $0x18] sm:$0xff] %v579
        %652 = vst [vmem:[%s647 + $0x20] sm:$0xff] %v584
        %653 = vst [vmem:[%s647 + $0x28] sm:$0xff] %v589
        %654 = vst [vmem:[%s647 + $0x30] sm:$0xff] %v594
        %655 = vst [vmem:[%s647 + $0x38] sm:$0xff] %v599
        %656 = vst [vmem:[%s647 + $0x40] sm:$0xff] %v604
        %657 = vst [vmem:[%s647 + $0x48] sm:$0xff] %v609
        %658 = vst [vmem:[%s647 + $0x50] sm:$0xff] %v614
        %659 = vst [vmem:[%s647 + $0x58] sm:$0xff] %v619
        %660 = vst [vmem:[%s647 + $0x60] sm:$0xff] %v624
        %661 = vst [vmem:[%s647 + $0x68] sm:$0xff] %v629
        %662 = vst [vmem:[%s647 + $0x70] sm:$0xff] %v634
        %663 = vst [vmem:[%s647 + $0x78] sm:$0xff] %v639
        %664 = vst [vmem:[%s647 + $0x80] sm:$0x3] %v644
        %s665 = scalar_lea.vmem %s195, 136
        %v666 = vld [vmem:[%s665] sm:$0xff]
        %v667 = vld [vmem:[%s665 + $0x8] sm:$0xff]
        %v668 = vld [vmem:[%s665 + $0x10] sm:$0xff]
        %v669 = vld [vmem:[%s665 + $0x18] sm:$0xff]
        %v670 = vld [vmem:[%s665 + $0x20] sm:$0xff]
        %v671 = vld [vmem:[%s665 + $0x28] sm:$0xff]
        %v672 = vld [vmem:[%s665 + $0x30] sm:$0xff]
        %v673 = vld [vmem:[%s665 + $0x38] sm:$0xff]
        %v674 = vld [vmem:[%s665 + $0x40] sm:$0xff]
        %v675 = vld [vmem:[%s665 + $0x48] sm:$0xff]
        %v676 = vld [vmem:[%s665 + $0x50] sm:$0xff]
        %v677 = vld [vmem:[%s665 + $0x58] sm:$0xff]
        %v678 = vld [vmem:[%s665 + $0x60] sm:$0xff]
        %v679 = vld [vmem:[%s665 + $0x68] sm:$0xff]
        %v680 = vld [vmem:[%s665 + $0x70] sm:$0xff]
        %v681 = vld [vmem:[%s665 + $0x78] sm:$0xff]
        %v682 = vld [vmem:[%s665 + $0x80] sm:$0x3]
        %683 = vmatprep.subr.mxu0 0.0
        %684 = vmatpush1.msra.mxu0 %v248
        %685 = vmatprep.subr.mxu0 0.0
        %686 = vmatpush1.msra.mxu0 %v249
        %687 = vmatprep.subr.mxu0 0.0
        %688 = vmatpush1.msra.mxu0 %v250
        %689 = vmatprep.subr.mxu0 0.0
        %690 = vmatpush1.msra.mxu0 %v251
        %691 = vmatprep.subr.mxu0 0.0
        %692 = vmatpush1.msra.mxu0 %v252
        %693 = vmatprep.subr.mxu0 0.0
        %694 = vmatpush1.msra.mxu0 %v253
        %695 = vmatprep.subr.mxu0 0.0
        %696 = vmatpush1.msra.mxu0 %v254
        %697 = vmatprep.subr.mxu0 0.0
        %698 = vmatpush1.msra.mxu0 %v255
        %699 = vmatprep.subr.mxu0 0.0
        %700 = vmatpush1.msra.mxu0 %v256
        %701 = vmatprep.subr.mxu0 0.0
        %702 = vmatpush1.msra.mxu0 %v257
        %703 = vmatprep.subr.mxu0 0.0
        %704 = vmatpush1.msra.mxu0 %v258
        %705 = vmatprep.subr.mxu0 0.0
        %706 = vmatpush1.msra.mxu0 %v259
        %707 = vmatprep.subr.mxu0 0.0
        %708 = vmatpush1.msra.mxu0 %v260
        %709 = vmatprep.subr.mxu0 0.0
        %710 = vmatpush1.msra.mxu0 %v261
        %711 = vmatprep.subr.mxu0 0.0
        %712 = vmatpush1.msra.mxu0 %v262
        %713 = vmatprep.subr.mxu0 0.0
        %714 = vmatpush1.msra.mxu0 %v263
        %715 = vmatprep.subr.mxu0 0.0
        %716 = vmatpush1.msra.mxu0 0.0
        %717 = vmatprep.subr.mxu0 0.0
        %718 = vmatpush1.msra.mxu0 0.0
        %719 = vmatprep.subr.mxu0 0.0
        %720 = vmatpush1.msra.mxu0 0.0
        %721 = vmatprep.subr.mxu0 0.0
        %722 = vmatpush1.msra.mxu0 0.0
        %723 = vmatprep.subr.mxu0 0.0
        %724 = vmatpush1.msra.mxu0 0.0
        %725 = vmatprep.subr.mxu0 0.0
        %726 = vmatpush1.msra.mxu0 0.0
        %727 = vmatprep.subr.mxu0 0.0
        %728 = vmatpush1.msra.mxu0 0.0
        %729 = vmatprep.subr.mxu0 0.0
        %730 = vmatpush1.msra.mxu0 0.0
        %731 = vmatprep.subr.mxu0 0.0
        %732 = vmatpush1.msra.mxu0 0.0
        %733 = vmatprep.subr.mxu0 0.0
        %734 = vmatpush1.msra.mxu0 0.0
        %735 = vmatprep.subr.mxu0 0.0
        %736 = vmatpush1.msra.mxu0 0.0
        %737 = vmatprep.subr.mxu0 0.0
        %738 = vmatpush1.msra.mxu0 0.0
        %739 = vmatprep.subr.mxu0 0.0
        %740 = vmatpush1.msra.mxu0 0.0
        %741 = vmatprep.subr.mxu0 0.0
        %742 = vmatpush1.msra.mxu0 0.0
        %743 = vmatprep.subr.mxu0 0.0
        %744 = vmatpush1.msra.mxu0 0.0
        %745 = vmatprep.subr.mxu0 0.0
        %746 = vmatpush1.msra.mxu0 0.0
        %747 = vmatprep.mubr.f32.mxu0 0.0
        %748 = vmatmul.mubr.f32.gmra.mrb[0].mxu0 %v666
        %v749 = vpop.f32.mrb[0].mxu0
        %v750 = vadd.f32 0.0, %v749
        %v751 = vpop.f32.mrb[0].mxu0
        %752 = vmatprep.mubr.f32.mxu0 0.0
        %753 = vmatmul.mubr.f32.gmra.mrb[0].mxu0 %v667
        %v754 = vpop.f32.mrb[0].mxu0
        %v755 = vadd.f32 0.0, %v754
        %v756 = vpop.f32.mrb[0].mxu0
        %757 = vmatprep.mubr.f32.mxu0 0.0
        %758 = vmatmul.mubr.f32.gmra.mrb[0].mxu0 %v668
        %v759 = vpop.f32.mrb[0].mxu0
        %v760 = vadd.f32 0.0, %v759
        %v761 = vpop.f32.mrb[0].mxu0
        %762 = vmatprep.mubr.f32.mxu0 0.0
        %763 = vmatmul.mubr.f32.gmra.mrb[0].mxu0 %v669
        %v764 = vpop.f32.mrb[0].mxu0
        %v765 = vadd.f32 0.0, %v764
        %v766 = vpop.f32.mrb[0].mxu0
        %767 = vmatprep.mubr.f32.mxu0 0.0
        %768 = vmatmul.mubr.f32.gmra.mrb[0].mxu0 %v670
        %v769 = vpop.f32.mrb[0].mxu0
        %v770 = vadd.f32 0.0, %v769
        %v771 = vpop.f32.mrb[0].mxu0
        %772 = vmatprep.mubr.f32.mxu0 0.0
        %773 = vmatmul.mubr.f32.gmra.mrb[0].mxu0 %v671
        %v774 = vpop.f32.mrb[0].mxu0
        %v775 = vadd.f32 0.0, %v774
        %v776 = vpop.f32.mrb[0].mxu0
        %777 = vmatprep.mubr.f32.mxu0 0.0
        %778 = vmatmul.mubr.f32.gmra.mrb[0].mxu0 %v672
        %v779 = vpop.f32.mrb[0].mxu0
        %v780 = vadd.f32 0.0, %v779
        %v781 = vpop.f32.mrb[0].mxu0
        %782 = vmatprep.mubr.f32.mxu0 0.0
        %783 = vmatmul.mubr.f32.gmra.mrb[0].mxu0 %v673
        %v784 = vpop.f32.mrb[0].mxu0
        %v785 = vadd.f32 0.0, %v784
        %v786 = vpop.f32.mrb[0].mxu0
        %787 = vmatprep.mubr.f32.mxu0 0.0
        %788 = vmatmul.mubr.f32.gmra.mrb[0].mxu0 %v674
        %v789 = vpop.f32.mrb[0].mxu0
        %v790 = vadd.f32 0.0, %v789
        %v791 = vpop.f32.mrb[0].mxu0
        %792 = vmatprep.mubr.f32.mxu0 0.0
        %793 = vmatmul.mubr.f32.gmra.mrb[0].mxu0 %v675
        %v794 = vpop.f32.mrb[0].mxu0
        %v795 = vadd.f32 0.0, %v794
        %v796 = vpop.f32.mrb[0].mxu0
        %797 = vmatprep.mubr.f32.mxu0 0.0
        %798 = vmatmul.mubr.f32.gmra.mrb[0].mxu0 %v676
        %v799 = vpop.f32.mrb[0].mxu0
        %v800 = vadd.f32 0.0, %v799
        %v801 = vpop.f32.mrb[0].mxu0
        %802 = vmatprep.mubr.f32.mxu0 0.0
        %803 = vmatmul.mubr.f32.gmra.mrb[0].mxu0 %v677
        %v804 = vpop.f32.mrb[0].mxu0
        %v805 = vadd.f32 0.0, %v804
        %v806 = vpop.f32.mrb[0].mxu0
        %807 = vmatprep.mubr.f32.mxu0 0.0
        %808 = vmatmul.mubr.f32.gmra.mrb[0].mxu0 %v678
        %v809 = vpop.f32.mrb[0].mxu0
        %v810 = vadd.f32 0.0, %v809
        %v811 = vpop.f32.mrb[0].mxu0
        %812 = vmatprep.mubr.f32.mxu0 0.0
        %813 = vmatmul.mubr.f32.gmra.mrb[0].mxu0 %v679
        %v814 = vpop.f32.mrb[0].mxu0
        %v815 = vadd.f32 0.0, %v814
        %v816 = vpop.f32.mrb[0].mxu0
        %817 = vmatprep.mubr.f32.mxu0 0.0
        %818 = vmatmul.mubr.f32.gmra.mrb[0].mxu0 %v680
        %v819 = vpop.f32.mrb[0].mxu0
        %v820 = vadd.f32 0.0, %v819
        %v821 = vpop.f32.mrb[0].mxu0
        %822 = vmatprep.mubr.f32.mxu0 0.0
        %823 = vmatmul.mubr.f32.gmra.mrb[0].mxu0 %v681
        %v824 = vpop.f32.mrb[0].mxu0
        %v825 = vadd.f32 0.0, %v824
        %v826 = vpop.f32.mrb[0].mxu0
        %827 = vmatprep.mubr.f32.mxu0 0.0
        %828 = vmatmul.mubr.f32.gmra.mrb[0].mxu0 %v682
        %v829 = vpop.f32.mrb[0].mxu0
        %v830 = vadd.f32 0.0, %v829
        %v831 = vpop.f32.mrb[0].mxu0
        %832 = vdwg.mxu0
        %s833 = scalar_lea.vmem [#allocation2], 272
        %834 = vst [vmem:[%s833] sm:$0xff] %v750
        %835 = vst [vmem:[%s833 + $0x8] sm:$0xff] %v755
        %836 = vst [vmem:[%s833 + $0x10] sm:$0xff] %v760
        %837 = vst [vmem:[%s833 + $0x18] sm:$0xff] %v765
        %838 = vst [vmem:[%s833 + $0x20] sm:$0xff] %v770
        %839 = vst [vmem:[%s833 + $0x28] sm:$0xff] %v775
        %840 = vst [vmem:[%s833 + $0x30] sm:$0xff] %v780
        %841 = vst [vmem:[%s833 + $0x38] sm:$0xff] %v785
        %842 = vst [vmem:[%s833 + $0x40] sm:$0xff] %v790
        %843 = vst [vmem:[%s833 + $0x48] sm:$0xff] %v795
        %844 = vst [vmem:[%s833 + $0x50] sm:$0xff] %v800
        %845 = vst [vmem:[%s833 + $0x58] sm:$0xff] %v805
        %846 = vst [vmem:[%s833 + $0x60] sm:$0xff] %v810
        %847 = vst [vmem:[%s833 + $0x68] sm:$0xff] %v815
        %848 = vst [vmem:[%s833 + $0x70] sm:$0xff] %v820
        %849 = vst [vmem:[%s833 + $0x78] sm:$0xff] %v825
        %850 = vst [vmem:[%s833 + $0x80] sm:$0x3] %v830
        %851 = vmatprep.subr.mxu0 0.0
        %852 = vmatpush1.msra.mxu0 %v297
        %853 = vmatprep.subr.mxu0 0.0
        %854 = vmatpush1.msra.mxu0 %v298
        %855 = vmatprep.subr.mxu0 0.0
        %856 = vmatpush1.msra.mxu0 %v299
        %857 = vmatprep.subr.mxu0 0.0
        %858 = vmatpush1.msra.mxu0 %v300
        %859 = vmatprep.subr.mxu0 0.0
        %860 = vmatpush1.msra.mxu0 %v301
        %861 = vmatprep.subr.mxu0 0.0
        %862 = vmatpush1.msra.mxu0 %v302
        %863 = vmatprep.subr.mxu0 0.0
        %864 = vmatpush1.msra.mxu0 %v303
        %865 = vmatprep.subr.mxu0 0.0
        %866 = vmatpush1.msra.mxu0 %v304
        %867 = vmatprep.subr.mxu0 0.0
        %868 = vmatpush1.msra.mxu0 %v305
        %869 = vmatprep.subr.mxu0 0.0
        %870 = vmatpush1.msra.mxu0 %v306
        %871 = vmatprep.subr.mxu0 0.0
        %872 = vmatpush1.msra.mxu0 %v307
        %873 = vmatprep.subr.mxu0 0.0
        %874 = vmatpush1.msra.mxu0 %v308
        %875 = vmatprep.subr.mxu0 0.0
        %876 = vmatpush1.msra.mxu0 %v309
        %877 = vmatprep.subr.mxu0 0.0
        %878 = vmatpush1.msra.mxu0 %v310
        %879 = vmatprep.subr.mxu0 0.0
        %880 = vmatpush1.msra.mxu0 %v311
        %881 = vmatprep.subr.mxu0 0.0
        %882 = vmatpush1.msra.mxu0 %v312
        %883 = vmatprep.subr.mxu0 0.0
        %884 = vmatpush1.msra.mxu0 0.0
        %885 = vmatprep.subr.mxu0 0.0
        %886 = vmatpush1.msra.mxu0 0.0
        %887 = vmatprep.subr.mxu0 0.0
        %888 = vmatpush1.msra.mxu0 0.0
        %889 = vmatprep.subr.mxu0 0.0
        %890 = vmatpush1.msra.mxu0 0.0
        %891 = vmatprep.subr.mxu0 0.0
        %892 = vmatpush1.msra.mxu0 0.0
        %893 = vmatprep.subr.mxu0 0.0
        %894 = vmatpush1.msra.mxu0 0.0
        %895 = vmatprep.subr.mxu0 0.0
        %896 = vmatpush1.msra.mxu0 0.0
        %897 = vmatprep.subr.mxu0 0.0
        %898 = vmatpush1.msra.mxu0 0.0
        %899 = vmatprep.subr.mxu0 0.0
        %900 = vmatpush1.msra.mxu0 0.0
        %901 = vmatprep.subr.mxu0 0.0
        %902 = vmatpush1.msra.mxu0 0.0
        %903 = vmatprep.subr.mxu0 0.0
        %904 = vmatpush1.msra.mxu0 0.0
        %905 = vmatprep.subr.mxu0 0.0
        %906 = vmatpush1.msra.mxu0 0.0
        %907 = vmatprep.subr.mxu0 0.0
        %908 = vmatpush1.msra.mxu0 0.0
        %909 = vmatprep.subr.mxu0 0.0
        %910 = vmatpush1.msra.mxu0 0.0
        %911 = vmatprep.subr.mxu0 0.0
        %912 = vmatpush1.msra.mxu0 0.0
        %913 = vmatprep.subr.mxu0 0.0
        %914 = vmatpush1.msra.mxu0 0.0
        %915 = vmatprep.mubr.f32.mxu0 0.0
        %916 = vmatmul.mubr.f32.gmra.mrb[0].mxu0 %v666
        %v917 = vpop.f32.mrb[0].mxu0
        %v918 = vadd.f32 0.0, %v917
        %v919 = vpop.f32.mrb[0].mxu0
        %920 = vmatprep.mubr.f32.mxu0 0.0
        %921 = vmatmul.mubr.f32.gmra.mrb[0].mxu0 %v667
        %v922 = vpop.f32.mrb[0].mxu0
        %v923 = vadd.f32 0.0, %v922
        %v924 = vpop.f32.mrb[0].mxu0
        %925 = vmatprep.mubr.f32.mxu0 0.0
        %926 = vmatmul.mubr.f32.gmra.mrb[0].mxu0 %v668
        %v927 = vpop.f32.mrb[0].mxu0
        %v928 = vadd.f32 0.0, %v927
        %v929 = vpop.f32.mrb[0].mxu0
        %930 = vmatprep.mubr.f32.mxu0 0.0
        %931 = vmatmul.mubr.f32.gmra.mrb[0].mxu0 %v669
        %v932 = vpop.f32.mrb[0].mxu0
        %v933 = vadd.f32 0.0, %v932
        %v934 = vpop.f32.mrb[0].mxu0
        %935 = vmatprep.mubr.f32.mxu0 0.0
        %936 = vmatmul.mubr.f32.gmra.mrb[0].mxu0 %v670
        %v937 = vpop.f32.mrb[0].mxu0
        %v938 = vadd.f32 0.0, %v937
        %v939 = vpop.f32.mrb[0].mxu0
        %940 = vmatprep.mubr.f32.mxu0 0.0
        %941 = vmatmul.mubr.f32.gmra.mrb[0].mxu0 %v671
        %v942 = vpop.f32.mrb[0].mxu0
        %v943 = vadd.f32 0.0, %v942
        %v944 = vpop.f32.mrb[0].mxu0
        %945 = vmatprep.mubr.f32.mxu0 0.0
        %946 = vmatmul.mubr.f32.gmra.mrb[0].mxu0 %v672
        %v947 = vpop.f32.mrb[0].mxu0
        %v948 = vadd.f32 0.0, %v947
        %v949 = vpop.f32.mrb[0].mxu0
        %950 = vmatprep.mubr.f32.mxu0 0.0
        %951 = vmatmul.mubr.f32.gmra.mrb[0].mxu0 %v673
        %v952 = vpop.f32.mrb[0].mxu0
        %v953 = vadd.f32 0.0, %v952
        %v954 = vpop.f32.mrb[0].mxu0
        %955 = vmatprep.mubr.f32.mxu0 0.0
        %956 = vmatmul.mubr.f32.gmra.mrb[0].mxu0 %v674
        %v957 = vpop.f32.mrb[0].mxu0
        %v958 = vadd.f32 0.0, %v957
        %v959 = vpop.f32.mrb[0].mxu0
        %960 = vmatprep.mubr.f32.mxu0 0.0
        %961 = vmatmul.mubr.f32.gmra.mrb[0].mxu0 %v675
        %v962 = vpop.f32.mrb[0].mxu0
        %v963 = vadd.f32 0.0, %v962
        %v964 = vpop.f32.mrb[0].mxu0
        %965 = vmatprep.mubr.f32.mxu0 0.0
        %966 = vmatmul.mubr.f32.gmra.mrb[0].mxu0 %v676
        %v967 = vpop.f32.mrb[0].mxu0
        %v968 = vadd.f32 0.0, %v967
        %v969 = vpop.f32.mrb[0].mxu0
        %970 = vmatprep.mubr.f32.mxu0 0.0
        %971 = vmatmul.mubr.f32.gmra.mrb[0].mxu0 %v677
        %v972 = vpop.f32.mrb[0].mxu0
        %v973 = vadd.f32 0.0, %v972
        %v974 = vpop.f32.mrb[0].mxu0
        %975 = vmatprep.mubr.f32.mxu0 0.0
        %976 = vmatmul.mubr.f32.gmra.mrb[0].mxu0 %v678
        %v977 = vpop.f32.mrb[0].mxu0
        %v978 = vadd.f32 0.0, %v977
        %v979 = vpop.f32.mrb[0].mxu0
        %980 = vmatprep.mubr.f32.mxu0 0.0
        %981 = vmatmul.mubr.f32.gmra.mrb[0].mxu0 %v679
        %v982 = vpop.f32.mrb[0].mxu0
        %v983 = vadd.f32 0.0, %v982
        %v984 = vpop.f32.mrb[0].mxu0
        %985 = vmatprep.mubr.f32.mxu0 0.0
        %986 = vmatmul.mubr.f32.gmra.mrb[0].mxu0 %v680
        %v987 = vpop.f32.mrb[0].mxu0
        %v988 = vadd.f32 0.0, %v987
        %v989 = vpop.f32.mrb[0].mxu0
        %990 = vmatprep.mubr.f32.mxu0 0.0
        %991 = vmatmul.mubr.f32.gmra.mrb[0].mxu0 %v681
        %v992 = vpop.f32.mrb[0].mxu0
        %v993 = vadd.f32 0.0, %v992
        %v994 = vpop.f32.mrb[0].mxu0
        %995 = vmatprep.mubr.f32.mxu0 0.0
        %996 = vmatmul.mubr.f32.gmra.mrb[0].mxu0 %v682
        %v997 = vpop.f32.mrb[0].mxu0
        %v998 = vadd.f32 0.0, %v997
        %v999 = vpop.f32.mrb[0].mxu0
        %1000 = vdwg.mxu0
        %s1001 = scalar_lea.vmem [#allocation2], 408
        %1002 = vst [vmem:[%s1001] sm:$0xff] %v918
        %1003 = vst [vmem:[%s1001 + $0x8] sm:$0xff] %v923
        %1004 = vst [vmem:[%s1001 + $0x10] sm:$0xff] %v928
        %1005 = vst [vmem:[%s1001 + $0x18] sm:$0xff] %v933
        %1006 = vst [vmem:[%s1001 + $0x20] sm:$0xff] %v938
        %1007 = vst [vmem:[%s1001 + $0x28] sm:$0xff] %v943
        %1008 = vst [vmem:[%s1001 + $0x30] sm:$0xff] %v948
        %1009 = vst [vmem:[%s1001 + $0x38] sm:$0xff] %v953
        %1010 = vst [vmem:[%s1001 + $0x40] sm:$0xff] %v958
        %1011 = vst [vmem:[%s1001 + $0x48] sm:$0xff] %v963
        %1012 = vst [vmem:[%s1001 + $0x50] sm:$0xff] %v968
        %1013 = vst [vmem:[%s1001 + $0x58] sm:$0xff] %v973
        %1014 = vst [vmem:[%s1001 + $0x60] sm:$0xff] %v978
        %1015 = vst [vmem:[%s1001 + $0x68] sm:$0xff] %v983
        %1016 = vst [vmem:[%s1001 + $0x70] sm:$0xff] %v988
        %1017 = vst [vmem:[%s1001 + $0x78] sm:$0xff] %v993
        %1018 = vst [vmem:[%s1001 + $0x80] sm:$0x3] %v998
        %s1019 = scalar_lea.vmem %s195, 272
        %v1020 = vld [vmem:[%s1019] sm:$0xff]
        %v1021 = vld [vmem:[%s1019 + $0x8] sm:$0xff]
        %v1022 = vld [vmem:[%s1019 + $0x10] sm:$0xff]
        %v1023 = vld [vmem:[%s1019 + $0x18] sm:$0xff]
        %v1024 = vld [vmem:[%s1019 + $0x20] sm:$0xff]
        %v1025 = vld [vmem:[%s1019 + $0x28] sm:$0xff]
        %v1026 = vld [vmem:[%s1019 + $0x30] sm:$0xff]
        %v1027 = vld [vmem:[%s1019 + $0x38] sm:$0xff]
        %v1028 = vld [vmem:[%s1019 + $0x40] sm:$0xff]
        %v1029 = vld [vmem:[%s1019 + $0x48] sm:$0xff]
        %v1030 = vld [vmem:[%s1019 + $0x50] sm:$0xff]
        %v1031 = vld [vmem:[%s1019 + $0x58] sm:$0xff]
        %v1032 = vld [vmem:[%s1019 + $0x60] sm:$0xff]
        %v1033 = vld [vmem:[%s1019 + $0x68] sm:$0xff]
        %v1034 = vld [vmem:[%s1019 + $0x70] sm:$0xff]
        %v1035 = vld [vmem:[%s1019 + $0x78] sm:$0xff]
        %v1036 = vld [vmem:[%s1019 + $0x80] sm:$0x3]
        %1037 = vmatprep.subr.mxu0 0.0
        %1038 = vmatpush1.msra.mxu0 %v248
        %1039 = vmatprep.subr.mxu0 0.0
        %1040 = vmatpush1.msra.mxu0 %v249
        %1041 = vmatprep.subr.mxu0 0.0
        %1042 = vmatpush1.msra.mxu0 %v250
        %1043 = vmatprep.subr.mxu0 0.0
        %1044 = vmatpush1.msra.mxu0 %v251
        %1045 = vmatprep.subr.mxu0 0.0
        %1046 = vmatpush1.msra.mxu0 %v252
        %1047 = vmatprep.subr.mxu0 0.0
        %1048 = vmatpush1.msra.mxu0 %v253
        %1049 = vmatprep.subr.mxu0 0.0
        %1050 = vmatpush1.msra.mxu0 %v254
        %1051 = vmatprep.subr.mxu0 0.0
        %1052 = vmatpush1.msra.mxu0 %v255
        %1053 = vmatprep.subr.mxu0 0.0
        %1054 = vmatpush1.msra.mxu0 %v256
        %1055 = vmatprep.subr.mxu0 0.0
        %1056 = vmatpush1.msra.mxu0 %v257
        %1057 = vmatprep.subr.mxu0 0.0
        %1058 = vmatpush1.msra.mxu0 %v258
        %1059 = vmatprep.subr.mxu0 0.0
        %1060 = vmatpush1.msra.mxu0 %v259
        %1061 = vmatprep.subr.mxu0 0.0
        %1062 = vmatpush1.msra.mxu0 %v260
        %1063 = vmatprep.subr.mxu0 0.0
        %1064 = vmatpush1.msra.mxu0 %v261
        %1065 = vmatprep.subr.mxu0 0.0
        %1066 = vmatpush1.msra.mxu0 %v262
        %1067 = vmatprep.subr.mxu0 0.0
        %1068 = vmatpush1.msra.mxu0 %v263
        %1069 = vmatprep.subr.mxu0 0.0
        %1070 = vmatpush1.msra.mxu0 0.0
        %1071 = vmatprep.subr.mxu0 0.0
        %1072 = vmatpush1.msra.mxu0 0.0
        %1073 = vmatprep.subr.mxu0 0.0
        %1074 = vmatpush1.msra.mxu0 0.0
        %1075 = vmatprep.subr.mxu0 0.0
        %1076 = vmatpush1.msra.mxu0 0.0
        %1077 = vmatprep.subr.mxu0 0.0
        %1078 = vmatpush1.msra.mxu0 0.0
        %1079 = vmatprep.subr.mxu0 0.0
        %1080 = vmatpush1.msra.mxu0 0.0
        %1081 = vmatprep.subr.mxu0 0.0
        %1082 = vmatpush1.msra.mxu0 0.0
        %1083 = vmatprep.subr.mxu0 0.0
        %1084 = vmatpush1.msra.mxu0 0.0
        %1085 = vmatprep.subr.mxu0 0.0
        %1086 = vmatpush1.msra.mxu0 0.0
        %1087 = vmatprep.subr.mxu0 0.0
        %1088 = vmatpush1.msra.mxu0 0.0
        %1089 = vmatprep.subr.mxu0 0.0
        %1090 = vmatpush1.msra.mxu0 0.0
        %1091 = vmatprep.subr.mxu0 0.0
        %1092 = vmatpush1.msra.mxu0 0.0
        %1093 = vmatprep.subr.mxu0 0.0
        %1094 = vmatpush1.msra.mxu0 0.0
        %1095 = vmatprep.subr.mxu0 0.0
        %1096 = vmatpush1.msra.mxu0 0.0
        %1097 = vmatprep.subr.mxu0 0.0
        %1098 = vmatpush1.msra.mxu0 0.0
        %1099 = vmatprep.subr.mxu0 0.0
        %1100 = vmatpush1.msra.mxu0 0.0
        %1101 = vmatprep.mubr.f32.mxu0 0.0
        %1102 = vmatmul.mubr.f32.gmra.mrb[0].mxu0 %v1020
        %v1103 = vpop.f32.mrb[0].mxu0
        %v1104 = vadd.f32 0.0, %v1103
        %v1105 = vpop.f32.mrb[0].mxu0
        %1106 = vmatprep.mubr.f32.mxu0 0.0
        %1107 = vmatmul.mubr.f32.gmra.mrb[0].mxu0 %v1021
        %v1108 = vpop.f32.mrb[0].mxu0
        %v1109 = vadd.f32 0.0, %v1108
        %v1110 = vpop.f32.mrb[0].mxu0
        %1111 = vmatprep.mubr.f32.mxu0 0.0
        %1112 = vmatmul.mubr.f32.gmra.mrb[0].mxu0 %v1022
        %v1113 = vpop.f32.mrb[0].mxu0
        %v1114 = vadd.f32 0.0, %v1113
        %v1115 = vpop.f32.mrb[0].mxu0
        %1116 = vmatprep.mubr.f32.mxu0 0.0
        %1117 = vmatmul.mubr.f32.gmra.mrb[0].mxu0 %v1023
        %v1118 = vpop.f32.mrb[0].mxu0
        %v1119 = vadd.f32 0.0, %v1118
        %v1120 = vpop.f32.mrb[0].mxu0
        %1121 = vmatprep.mubr.f32.mxu0 0.0
        %1122 = vmatmul.mubr.f32.gmra.mrb[0].mxu0 %v1024
        %v1123 = vpop.f32.mrb[0].mxu0
        %v1124 = vadd.f32 0.0, %v1123
        %v1125 = vpop.f32.mrb[0].mxu0
        %1126 = vmatprep.mubr.f32.mxu0 0.0
        %1127 = vmatmul.mubr.f32.gmra.mrb[0].mxu0 %v1025
        %v1128 = vpop.f32.mrb[0].mxu0
        %v1129 = vadd.f32 0.0, %v1128
        %v1130 = vpop.f32.mrb[0].mxu0
        %1131 = vmatprep.mubr.f32.mxu0 0.0
        %1132 = vmatmul.mubr.f32.gmra.mrb[0].mxu0 %v1026
        %v1133 = vpop.f32.mrb[0].mxu0
        %v1134 = vadd.f32 0.0, %v1133
        %v1135 = vpop.f32.mrb[0].mxu0
        %1136 = vmatprep.mubr.f32.mxu0 0.0
        %1137 = vmatmul.mubr.f32.gmra.mrb[0].mxu0 %v1027
        %v1138 = vpop.f32.mrb[0].mxu0
        %v1139 = vadd.f32 0.0, %v1138
        %v1140 = vpop.f32.mrb[0].mxu0
        %1141 = vmatprep.mubr.f32.mxu0 0.0
        %1142 = vmatmul.mubr.f32.gmra.mrb[0].mxu0 %v1028
        %v1143 = vpop.f32.mrb[0].mxu0
        %v1144 = vadd.f32 0.0, %v1143
        %v1145 = vpop.f32.mrb[0].mxu0
        %1146 = vmatprep.mubr.f32.mxu0 0.0
        %1147 = vmatmul.mubr.f32.gmra.mrb[0].mxu0 %v1029
        %v1148 = vpop.f32.mrb[0].mxu0
        %v1149 = vadd.f32 0.0, %v1148
        %v1150 = vpop.f32.mrb[0].mxu0
        %1151 = vmatprep.mubr.f32.mxu0 0.0
        %1152 = vmatmul.mubr.f32.gmra.mrb[0].mxu0 %v1030
        %v1153 = vpop.f32.mrb[0].mxu0
        %v1154 = vadd.f32 0.0, %v1153
        %v1155 = vpop.f32.mrb[0].mxu0
        %1156 = vmatprep.mubr.f32.mxu0 0.0
        %1157 = vmatmul.mubr.f32.gmra.mrb[0].mxu0 %v1031
        %v1158 = vpop.f32.mrb[0].mxu0
        %v1159 = vadd.f32 0.0, %v1158
        %v1160 = vpop.f32.mrb[0].mxu0
        %1161 = vmatprep.mubr.f32.mxu0 0.0
        %1162 = vmatmul.mubr.f32.gmra.mrb[0].mxu0 %v1032
        %v1163 = vpop.f32.mrb[0].mxu0
        %v1164 = vadd.f32 0.0, %v1163
        %v1165 = vpop.f32.mrb[0].mxu0
        %1166 = vmatprep.mubr.f32.mxu0 0.0
        %1167 = vmatmul.mubr.f32.gmra.mrb[0].mxu0 %v1033
        %v1168 = vpop.f32.mrb[0].mxu0
        %v1169 = vadd.f32 0.0, %v1168
        %v1170 = vpop.f32.mrb[0].mxu0
        %1171 = vmatprep.mubr.f32.mxu0 0.0
        %1172 = vmatmul.mubr.f32.gmra.mrb[0].mxu0 %v1034
        %v1173 = vpop.f32.mrb[0].mxu0
        %v1174 = vadd.f32 0.0, %v1173
        %v1175 = vpop.f32.mrb[0].mxu0
        %1176 = vmatprep.mubr.f32.mxu0 0.0
        %1177 = vmatmul.mubr.f32.gmra.mrb[0].mxu0 %v1035
        %v1178 = vpop.f32.mrb[0].mxu0
        %v1179 = vadd.f32 0.0, %v1178
        %v1180 = vpop.f32.mrb[0].mxu0
        %1181 = vmatprep.mubr.f32.mxu0 0.0
        %1182 = vmatmul.mubr.f32.gmra.mrb[0].mxu0 %v1036
        %v1183 = vpop.f32.mrb[0].mxu0
        %v1184 = vadd.f32 0.0, %v1183
        %v1185 = vpop.f32.mrb[0].mxu0
        %1186 = vdwg.mxu0
        %s1187 = scalar_lea.vmem [#allocation2], 544
        %1188 = vst [vmem:[%s1187] sm:$0xff] %v1104
        %1189 = vst [vmem:[%s1187 + $0x8] sm:$0xff] %v1109
        %1190 = vst [vmem:[%s1187 + $0x10] sm:$0xff] %v1114
        %1191 = vst [vmem:[%s1187 + $0x18] sm:$0xff] %v1119
        %1192 = vst [vmem:[%s1187 + $0x20] sm:$0xff] %v1124
        %1193 = vst [vmem:[%s1187 + $0x28] sm:$0xff] %v1129
        %1194 = vst [vmem:[%s1187 + $0x30] sm:$0xff] %v1134
        %1195 = vst [vmem:[%s1187 + $0x38] sm:$0xff] %v1139
        %1196 = vst [vmem:[%s1187 + $0x40] sm:$0xff] %v1144
        %1197 = vst [vmem:[%s1187 + $0x48] sm:$0xff] %v1149
        %1198 = vst [vmem:[%s1187 + $0x50] sm:$0xff] %v1154
        %1199 = vst [vmem:[%s1187 + $0x58] sm:$0xff] %v1159
        %1200 = vst [vmem:[%s1187 + $0x60] sm:$0xff] %v1164
        %1201 = vst [vmem:[%s1187 + $0x68] sm:$0xff] %v1169
        %1202 = vst [vmem:[%s1187 + $0x70] sm:$0xff] %v1174
        %1203 = vst [vmem:[%s1187 + $0x78] sm:$0xff] %v1179
        %1204 = vst [vmem:[%s1187 + $0x80] sm:$0x3] %v1184
        %1205 = vmatprep.subr.mxu0 0.0
        %1206 = vmatpush1.msra.mxu0 %v297
        %1207 = vmatprep.subr.mxu0 0.0
        %1208 = vmatpush1.msra.mxu0 %v298
        %1209 = vmatprep.subr.mxu0 0.0
        %1210 = vmatpush1.msra.mxu0 %v299
        %1211 = vmatprep.subr.mxu0 0.0
        %1212 = vmatpush1.msra.mxu0 %v300
        %1213 = vmatprep.subr.mxu0 0.0
        %1214 = vmatpush1.msra.mxu0 %v301
        %1215 = vmatprep.subr.mxu0 0.0
        %1216 = vmatpush1.msra.mxu0 %v302
        %1217 = vmatprep.subr.mxu0 0.0
        %1218 = vmatpush1.msra.mxu0 %v303
        %1219 = vmatprep.subr.mxu0 0.0
        %1220 = vmatpush1.msra.mxu0 %v304
        %1221 = vmatprep.subr.mxu0 0.0
        %1222 = vmatpush1.msra.mxu0 %v305
        %1223 = vmatprep.subr.mxu0 0.0
        %1224 = vmatpush1.msra.mxu0 %v306
        %1225 = vmatprep.subr.mxu0 0.0
        %1226 = vmatpush1.msra.mxu0 %v307
        %1227 = vmatprep.subr.mxu0 0.0
        %1228 = vmatpush1.msra.mxu0 %v308
        %1229 = vmatprep.subr.mxu0 0.0
        %1230 = vmatpush1.msra.mxu0 %v309
        %1231 = vmatprep.subr.mxu0 0.0
        %1232 = vmatpush1.msra.mxu0 %v310
        %1233 = vmatprep.subr.mxu0 0.0
        %1234 = vmatpush1.msra.mxu0 %v311
        %1235 = vmatprep.subr.mxu0 0.0
        %1236 = vmatpush1.msra.mxu0 %v312
        %1237 = vmatprep.subr.mxu0 0.0
        %1238 = vmatpush1.msra.mxu0 0.0
        %1239 = vmatprep.subr.mxu0 0.0
        %1240 = vmatpush1.msra.mxu0 0.0
        %1241 = vmatprep.subr.mxu0 0.0
        %1242 = vmatpush1.msra.mxu0 0.0
        %1243 = vmatprep.subr.mxu0 0.0
        %1244 = vmatpush1.msra.mxu0 0.0
        %1245 = vmatprep.subr.mxu0 0.0
        %1246 = vmatpush1.msra.mxu0 0.0
        %1247 = vmatprep.subr.mxu0 0.0
        %1248 = vmatpush1.msra.mxu0 0.0
        %1249 = vmatprep.subr.mxu0 0.0
        %1250 = vmatpush1.msra.mxu0 0.0
        %1251 = vmatprep.subr.mxu0 0.0
        %1252 = vmatpush1.msra.mxu0 0.0
        %1253 = vmatprep.subr.mxu0 0.0
        %1254 = vmatpush1.msra.mxu0 0.0
        %1255 = vmatprep.subr.mxu0 0.0
        %1256 = vmatpush1.msra.mxu0 0.0
        %1257 = vmatprep.subr.mxu0 0.0
        %1258 = vmatpush1.msra.mxu0 0.0
        %1259 = vmatprep.subr.mxu0 0.0
        %1260 = vmatpush1.msra.mxu0 0.0
        %1261 = vmatprep.subr.mxu0 0.0
        %1262 = vmatpush1.msra.mxu0 0.0
        %1263 = vmatprep.subr.mxu0 0.0
        %1264 = vmatpush1.msra.mxu0 0.0
        %1265 = vmatprep.subr.mxu0 0.0
        %1266 = vmatpush1.msra.mxu0 0.0
        %1267 = vmatprep.subr.mxu0 0.0
        %1268 = vmatpush1.msra.mxu0 0.0
        %1269 = vmatprep.mubr.f32.mxu0 0.0
        %1270 = vmatmul.mubr.f32.gmra.mrb[0].mxu0 %v1020
        %v1271 = vpop.f32.mrb[0].mxu0
        %v1272 = vadd.f32 0.0, %v1271
        %v1273 = vpop.f32.mrb[0].mxu0
        %1274 = vmatprep.mubr.f32.mxu0 0.0
        %1275 = vmatmul.mubr.f32.gmra.mrb[0].mxu0 %v1021
        %v1276 = vpop.f32.mrb[0].mxu0
        %v1277 = vadd.f32 0.0, %v1276
        %v1278 = vpop.f32.mrb[0].mxu0
        %1279 = vmatprep.mubr.f32.mxu0 0.0
        %1280 = vmatmul.mubr.f32.gmra.mrb[0].mxu0 %v1022
        %v1281 = vpop.f32.mrb[0].mxu0
        %v1282 = vadd.f32 0.0, %v1281
        %v1283 = vpop.f32.mrb[0].mxu0
        %1284 = vmatprep.mubr.f32.mxu0 0.0
        %1285 = vmatmul.mubr.f32.gmra.mrb[0].mxu0 %v1023
        %v1286 = vpop.f32.mrb[0].mxu0
        %v1287 = vadd.f32 0.0, %v1286
        %v1288 = vpop.f32.mrb[0].mxu0
        %1289 = vmatprep.mubr.f32.mxu0 0.0
        %1290 = vmatmul.mubr.f32.gmra.mrb[0].mxu0 %v1024
        %v1291 = vpop.f32.mrb[0].mxu0
        %v1292 = vadd.f32 0.0, %v1291
        %v1293 = vpop.f32.mrb[0].mxu0
        %1294 = vmatprep.mubr.f32.mxu0 0.0
        %1295 = vmatmul.mubr.f32.gmra.mrb[0].mxu0 %v1025
        %v1296 = vpop.f32.mrb[0].mxu0
        %v1297 = vadd.f32 0.0, %v1296
        %v1298 = vpop.f32.mrb[0].mxu0
        %1299 = vmatprep.mubr.f32.mxu0 0.0
        %1300 = vmatmul.mubr.f32.gmra.mrb[0].mxu0 %v1026
        %v1301 = vpop.f32.mrb[0].mxu0
        %v1302 = vadd.f32 0.0, %v1301
        %v1303 = vpop.f32.mrb[0].mxu0
        %1304 = vmatprep.mubr.f32.mxu0 0.0
        %1305 = vmatmul.mubr.f32.gmra.mrb[0].mxu0 %v1027
        %v1306 = vpop.f32.mrb[0].mxu0
        %v1307 = vadd.f32 0.0, %v1306
        %v1308 = vpop.f32.mrb[0].mxu0
        %1309 = vmatprep.mubr.f32.mxu0 0.0
        %1310 = vmatmul.mubr.f32.gmra.mrb[0].mxu0 %v1028
        %v1311 = vpop.f32.mrb[0].mxu0
        %v1312 = vadd.f32 0.0, %v1311
        %v1313 = vpop.f32.mrb[0].mxu0
        %1314 = vmatprep.mubr.f32.mxu0 0.0
        %1315 = vmatmul.mubr.f32.gmra.mrb[0].mxu0 %v1029
        %v1316 = vpop.f32.mrb[0].mxu0
        %v1317 = vadd.f32 0.0, %v1316
        %v1318 = vpop.f32.mrb[0].mxu0
        %1319 = vmatprep.mubr.f32.mxu0 0.0
        %1320 = vmatmul.mubr.f32.gmra.mrb[0].mxu0 %v1030
        %v1321 = vpop.f32.mrb[0].mxu0
        %v1322 = vadd.f32 0.0, %v1321
        %v1323 = vpop.f32.mrb[0].mxu0
        %1324 = vmatprep.mubr.f32.mxu0 0.0
        %1325 = vmatmul.mubr.f32.gmra.mrb[0].mxu0 %v1031
        %v1326 = vpop.f32.mrb[0].mxu0
        %v1327 = vadd.f32 0.0, %v1326
        %v1328 = vpop.f32.mrb[0].mxu0
        %1329 = vmatprep.mubr.f32.mxu0 0.0
        %1330 = vmatmul.mubr.f32.gmra.mrb[0].mxu0 %v1032
        %v1331 = vpop.f32.mrb[0].mxu0
        %v1332 = vadd.f32 0.0, %v1331
        %v1333 = vpop.f32.mrb[0].mxu0
        %1334 = vmatprep.mubr.f32.mxu0 0.0
        %1335 = vmatmul.mubr.f32.gmra.mrb[0].mxu0 %v1033
        %v1336 = vpop.f32.mrb[0].mxu0
        %v1337 = vadd.f32 0.0, %v1336
        %v1338 = vpop.f32.mrb[0].mxu0
        %1339 = vmatprep.mubr.f32.mxu0 0.0
        %1340 = vmatmul.mubr.f32.gmra.mrb[0].mxu0 %v1034
        %v1341 = vpop.f32.mrb[0].mxu0
        %v1342 = vadd.f32 0.0, %v1341
        %v1343 = vpop.f32.mrb[0].mxu0
        %1344 = vmatprep.mubr.f32.mxu0 0.0
        %1345 = vmatmul.mubr.f32.gmra.mrb[0].mxu0 %v1035
        %v1346 = vpop.f32.mrb[0].mxu0
        %v1347 = vadd.f32 0.0, %v1346
        %v1348 = vpop.f32.mrb[0].mxu0
        %1349 = vmatprep.mubr.f32.mxu0 0.0
        %1350 = vmatmul.mubr.f32.gmra.mrb[0].mxu0 %v1036
        %v1351 = vpop.f32.mrb[0].mxu0
        %v1352 = vadd.f32 0.0, %v1351
        %v1353 = vpop.f32.mrb[0].mxu0
        %1354 = vdwg.mxu0
        %s1355 = scalar_lea.vmem [#allocation2], 680
        %1356 = vst [vmem:[%s1355] sm:$0xff] %v1272
        %1357 = vst [vmem:[%s1355 + $0x8] sm:$0xff] %v1277
        %1358 = vst [vmem:[%s1355 + $0x10] sm:$0xff] %v1282
        %1359 = vst [vmem:[%s1355 + $0x18] sm:$0xff] %v1287
        %1360 = vst [vmem:[%s1355 + $0x20] sm:$0xff] %v1292
        %1361 = vst [vmem:[%s1355 + $0x28] sm:$0xff] %v1297
        %1362 = vst [vmem:[%s1355 + $0x30] sm:$0xff] %v1302
        %1363 = vst [vmem:[%s1355 + $0x38] sm:$0xff] %v1307
        %1364 = vst [vmem:[%s1355 + $0x40] sm:$0xff] %v1312
        %1365 = vst [vmem:[%s1355 + $0x48] sm:$0xff] %v1317
        %1366 = vst [vmem:[%s1355 + $0x50] sm:$0xff] %v1322
        %1367 = vst [vmem:[%s1355 + $0x58] sm:$0xff] %v1327
        %1368 = vst [vmem:[%s1355 + $0x60] sm:$0xff] %v1332
        %1369 = vst [vmem:[%s1355 + $0x68] sm:$0xff] %v1337
        %1370 = vst [vmem:[%s1355 + $0x70] sm:$0xff] %v1342
        %1371 = vst [vmem:[%s1355 + $0x78] sm:$0xff] %v1347
        %1372 = vst [vmem:[%s1355 + $0x80] sm:$0x3] %v1352
        %v1373 = vmul.u32 %v197, 2
        %v1374 = vmul.u32 %v198, 2
        %v1375 = vmul.u32 %v199, 2
        %v1376 = vmul.u32 %v200, 2
        %vm1377 = vcmp.eq.s32.totalorder %v214, %v1373
        %vm1378 = vcmp.eq.s32.totalorder %v214, %v1374
        %vm1379 = vcmp.eq.s32.totalorder %v214, %v1375
        %vm1380 = vcmp.eq.s32.totalorder %v214, %v1376
        %v1381 = vsel %vm1377, 1, 0
        %v1382 = vsel %vm1378, 1, 0
        %v1383 = vsel %vm1379, 1, 0
        %v1384 = vsel %vm1380, 1, 0
        %v1385 = vcvt.s32.f32 %v1381
        %v1386 = vcvt.s32.f32 %v1382
        %v1387 = vcvt.s32.f32 %v1383
        %v1388 = vcvt.s32.f32 %v1384
        %vm1389 = vcmask 523264
        %1390 = vst.msk [vmem:[#allocation3] sm:$0xff] %vm1389, %v1385
        %1391 = vst.msk [vmem:[#allocation3 + $0x8] sm:$0xff] %vm1389, %v1386
        %1392 = vst.msk [vmem:[#allocation3 + $0x10] sm:$0xff] %vm1389, %v1387
        %1393 = vst.msk [vmem:[#allocation3 + $0x18] sm:$0xff] %vm1389, %v1388
        %v1394 = vadd.s32 %v1373, 1
        %v1395 = vadd.s32 %v1374, 1
        %v1396 = vadd.s32 %v1375, 1
        %v1397 = vadd.s32 %v1376, 1
        %vm1398 = vcmp.eq.s32.totalorder %v214, %v1394
        %vm1399 = vcmp.eq.s32.totalorder %v214, %v1395
        %vm1400 = vcmp.eq.s32.totalorder %v214, %v1396
        %vm1401 = vcmp.eq.s32.totalorder %v214, %v1397
        %v1402 = vsel %vm1398, 1, 0
        %v1403 = vsel %vm1399, 1, 0
        %v1404 = vsel %vm1400, 1, 0
        %v1405 = vsel %vm1401, 1, 0
        %v1406 = vcvt.s32.f32 %v1402
        %v1407 = vcvt.s32.f32 %v1403
        %v1408 = vcvt.s32.f32 %v1404
        %v1409 = vcvt.s32.f32 %v1405
        %s1410 = scalar_lea.vmem [#allocation3], 32
        %1411 = vst.msk [vmem:[%s1410] sm:$0xff] %vm1389, %v1406
        %1412 = vst.msk [vmem:[%s1410 + $0x8] sm:$0xff] %vm1389, %v1407
        %1413 = vst.msk [vmem:[%s1410 + $0x10] sm:$0xff] %vm1389, %v1408
        %1414 = vst.msk [vmem:[%s1410 + $0x18] sm:$0xff] %vm1389, %v1409
        %v1415 = vmul.u32 %v214, 2
        %vm1416 = vcmp.eq.s32.totalorder %v197, %v1415
        %vm1417 = vcmp.eq.s32.totalorder %v198, %v1415
        %vm1418 = vcmp.eq.s32.totalorder %v199, %v1415
        %vm1419 = vcmp.eq.s32.totalorder %v200, %v1415
        %vm1420 = vcmp.eq.s32.totalorder %v201, %v1415
        %vm1421 = vcmp.eq.s32.totalorder %v202, %v1415
        %vm1422 = vcmp.eq.s32.totalorder %v203, %v1415
        %vm1423 = vcmp.eq.s32.totalorder %v204, %v1415
        %vm1424 = vcmp.eq.s32.totalorder %v205, %v1415
        %vm1425 = vcmp.eq.s32.totalorder %v206, %v1415
        %vm1426 = vcmp.eq.s32.totalorder %v207, %v1415
        %vm1427 = vcmp.eq.s32.totalorder %v208, %v1415
        %vm1428 = vcmp.eq.s32.totalorder %v209, %v1415
        %vm1429 = vcmp.eq.s32.totalorder %v210, %v1415
        %vm1430 = vcmp.eq.s32.totalorder %v211, %v1415
        %vm1431 = vcmp.eq.s32.totalorder %v212, %v1415
        %v1432 = vsel %vm1416, 1, 0
        %v1433 = vsel %vm1417, 1, 0
        %v1434 = vsel %vm1418, 1, 0
        %v1435 = vsel %vm1419, 1, 0
        %v1436 = vsel %vm1420, 1, 0
        %v1437 = vsel %vm1421, 1, 0
        %v1438 = vsel %vm1422, 1, 0
        %v1439 = vsel %vm1423, 1, 0
        %v1440 = vsel %vm1424, 1, 0
        %v1441 = vsel %vm1425, 1, 0
        %v1442 = vsel %vm1426, 1, 0
        %v1443 = vsel %vm1427, 1, 0
        %v1444 = vsel %vm1428, 1, 0
        %v1445 = vsel %vm1429, 1, 0
        %v1446 = vsel %vm1430, 1, 0
        %v1447 = vsel %vm1431, 1, 0
        %v1448 = vcvt.s32.f32 %v1432
        %v1449 = vcvt.s32.f32 %v1433
        %v1450 = vcvt.s32.f32 %v1434
        %v1451 = vcvt.s32.f32 %v1435
        %v1452 = vcvt.s32.f32 %v1436
        %v1453 = vcvt.s32.f32 %v1437
        %v1454 = vcvt.s32.f32 %v1438
        %v1455 = vcvt.s32.f32 %v1439
        %v1456 = vcvt.s32.f32 %v1440
        %v1457 = vcvt.s32.f32 %v1441
        %v1458 = vcvt.s32.f32 %v1442
        %v1459 = vcvt.s32.f32 %v1443
        %v1460 = vcvt.s32.f32 %v1444
        %v1461 = vcvt.s32.f32 %v1445
        %v1462 = vcvt.s32.f32 %v1446
        %v1463 = vcvt.s32.f32 %v1447
        %1464 = vst.msk [vmem:[#allocation4] sm:$0xff] %vm1389, %v1448
        %1465 = vst.msk [vmem:[#allocation4 + $0x8] sm:$0xff] %vm1389, %v1449
        %1466 = vst.msk [vmem:[#allocation4 + $0x10] sm:$0xff] %vm1389, %v1450
        %1467 = vst.msk [vmem:[#allocation4 + $0x18] sm:$0xff] %vm1389, %v1451
        %1468 = vst.msk [vmem:[#allocation4 + $0x20] sm:$0xff] %vm1389, %v1452
        %1469 = vst.msk [vmem:[#allocation4 + $0x28] sm:$0xff] %vm1389, %v1453
        %1470 = vst.msk [vmem:[#allocation4 + $0x30] sm:$0xff] %vm1389, %v1454
        %1471 = vst.msk [vmem:[#allocation4 + $0x38] sm:$0xff] %vm1389, %v1455
        %1472 = vst.msk [vmem:[#allocation4 + $0x40] sm:$0xff] %vm1389, %v1456
        %1473 = vst.msk [vmem:[#allocation4 + $0x48] sm:$0xff] %vm1389, %v1457
        %1474 = vst.msk [vmem:[#allocation4 + $0x50] sm:$0xff] %vm1389, %v1458
        %1475 = vst.msk [vmem:[#allocation4 + $0x58] sm:$0xff] %vm1389, %v1459
        %1476 = vst.msk [vmem:[#allocation4 + $0x60] sm:$0xff] %vm1389, %v1460
        %1477 = vst.msk [vmem:[#allocation4 + $0x68] sm:$0xff] %vm1389, %v1461
        %1478 = vst.msk [vmem:[#allocation4 + $0x70] sm:$0xff] %vm1389, %v1462
        %1479 = vst.msk [vmem:[#allocation4 + $0x78] sm:$0xff] %vm1389, %v1463
        %v1480 = vadd.s32 %v1415, 1
        %vm1481 = vcmp.eq.s32.totalorder %v197, %v1480
        %vm1482 = vcmp.eq.s32.totalorder %v198, %v1480
        %vm1483 = vcmp.eq.s32.totalorder %v199, %v1480
        %vm1484 = vcmp.eq.s32.totalorder %v200, %v1480
        %vm1485 = vcmp.eq.s32.totalorder %v201, %v1480
        %vm1486 = vcmp.eq.s32.totalorder %v202, %v1480
        %vm1487 = vcmp.eq.s32.totalorder %v203, %v1480
        %vm1488 = vcmp.eq.s32.totalorder %v204, %v1480
        %vm1489 = vcmp.eq.s32.totalorder %v205, %v1480
        %vm1490 = vcmp.eq.s32.totalorder %v206, %v1480
        %vm1491 = vcmp.eq.s32.totalorder %v207, %v1480
        %vm1492 = vcmp.eq.s32.totalorder %v208, %v1480
        %vm1493 = vcmp.eq.s32.totalorder %v209, %v1480
        %vm1494 = vcmp.eq.s32.totalorder %v210, %v1480
        %vm1495 = vcmp.eq.s32.totalorder %v211, %v1480
        %vm1496 = vcmp.eq.s32.totalorder %v212, %v1480
        %v1497 = vsel %vm1481, 1, 0
        %v1498 = vsel %vm1482, 1, 0
        %v1499 = vsel %vm1483, 1, 0
        %v1500 = vsel %vm1484, 1, 0
        %v1501 = vsel %vm1485, 1, 0
        %v1502 = vsel %vm1486, 1, 0
        %v1503 = vsel %vm1487, 1, 0
        %v1504 = vsel %vm1488, 1, 0
        %v1505 = vsel %vm1489, 1, 0
        %v1506 = vsel %vm1490, 1, 0
        %v1507 = vsel %vm1491, 1, 0
        %v1508 = vsel %vm1492, 1, 0
        %v1509 = vsel %vm1493, 1, 0
        %v1510 = vsel %vm1494, 1, 0
        %v1511 = vsel %vm1495, 1, 0
        %v1512 = vsel %vm1496, 1, 0
        %v1513 = vcvt.s32.f32 %v1497
        %v1514 = vcvt.s32.f32 %v1498
        %v1515 = vcvt.s32.f32 %v1499
        %v1516 = vcvt.s32.f32 %v1500
        %v1517 = vcvt.s32.f32 %v1501
        %v1518 = vcvt.s32.f32 %v1502
        %v1519 = vcvt.s32.f32 %v1503
        %v1520 = vcvt.s32.f32 %v1504
        %v1521 = vcvt.s32.f32 %v1505
        %v1522 = vcvt.s32.f32 %v1506
        %v1523 = vcvt.s32.f32 %v1507
        %v1524 = vcvt.s32.f32 %v1508
        %v1525 = vcvt.s32.f32 %v1509
        %v1526 = vcvt.s32.f32 %v1510
        %v1527 = vcvt.s32.f32 %v1511
        %v1528 = vcvt.s32.f32 %v1512
        %s1529 = scalar_lea.vmem [#allocation4], 128
        %1530 = vst.msk [vmem:[%s1529] sm:$0xff] %vm1389, %v1513
        %1531 = vst.msk [vmem:[%s1529 + $0x8] sm:$0xff] %vm1389, %v1514
        %1532 = vst.msk [vmem:[%s1529 + $0x10] sm:$0xff] %vm1389, %v1515
        %1533 = vst.msk [vmem:[%s1529 + $0x18] sm:$0xff] %vm1389, %v1516
        %1534 = vst.msk [vmem:[%s1529 + $0x20] sm:$0xff] %vm1389, %v1517
        %1535 = vst.msk [vmem:[%s1529 + $0x28] sm:$0xff] %vm1389, %v1518
        %1536 = vst.msk [vmem:[%s1529 + $0x30] sm:$0xff] %vm1389, %v1519
        %1537 = vst.msk [vmem:[%s1529 + $0x38] sm:$0xff] %vm1389, %v1520
        %1538 = vst.msk [vmem:[%s1529 + $0x40] sm:$0xff] %vm1389, %v1521
        %1539 = vst.msk [vmem:[%s1529 + $0x48] sm:$0xff] %vm1389, %v1522
        %1540 = vst.msk [vmem:[%s1529 + $0x50] sm:$0xff] %vm1389, %v1523
        %1541 = vst.msk [vmem:[%s1529 + $0x58] sm:$0xff] %vm1389, %v1524
        %1542 = vst.msk [vmem:[%s1529 + $0x60] sm:$0xff] %vm1389, %v1525
        %1543 = vst.msk [vmem:[%s1529 + $0x68] sm:$0xff] %vm1389, %v1526
        %1544 = vst.msk [vmem:[%s1529 + $0x70] sm:$0xff] %vm1389, %v1527
        %1545 = vst.msk [vmem:[%s1529 + $0x78] sm:$0xff] %vm1389, %v1528
        loop: start=0, step=1, limit=12
        $region41: #{tpu_custom_call.1} parent=31 // loop_pre_header
          _
        $region42: #{tpu_custom_call.1} parent=31 // loop_header
          %s1547 = sphi 0, %s1551
          %p1548 = scmp.ge.s32.totalorder %s1547, 12
        $region43: #{tpu_custom_call.1} parent=31 // loop_header_branch
          %1550 = sbr.rel (%p1548) target = $region47
        $region44: #{tpu_custom_call.1} parent=31 // loop_body
          %s1552 = smul.u32 %s1547, 27
          %v1553 = vld [vmem:[#allocation2] sm:$0xff]
          %v1554 = vld [vmem:[#allocation2 + $0x8] sm:$0xff]
          %v1555 = vld [vmem:[#allocation2 + $0x10] sm:$0xff]
          %v1556 = vld [vmem:[#allocation2 + $0x18] sm:$0xff]
          %v1557 = vld [vmem:[#allocation2 + $0x20] sm:$0xff]
          %v1558 = vld [vmem:[#allocation2 + $0x28] sm:$0xff]
          %v1559 = vld [vmem:[#allocation2 + $0x30] sm:$0xff]
          %v1560 = vld [vmem:[#allocation2 + $0x38] sm:$0xff]
          %v1561 = vld [vmem:[%s195] sm:$0xff]
          %v1562 = vld [vmem:[%s195 + $0x8] sm:$0xff]
          %v1563 = vld [vmem:[%s195 + $0x10] sm:$0xff]
          %v1564 = vld [vmem:[%s195 + $0x18] sm:$0xff]
          %v1565 = vld [vmem:[%s195 + $0x20] sm:$0xff]
          %v1566 = vld [vmem:[%s195 + $0x28] sm:$0xff]
          %v1567 = vld [vmem:[%s195 + $0x30] sm:$0xff]
          %v1568 = vld [vmem:[%s195 + $0x38] sm:$0xff]
          %v1569 = vld [vmem:[%s647] sm:$0xff]
          %v1570 = vld [vmem:[%s647 + $0x8] sm:$0xff]
          %v1571 = vld [vmem:[%s647 + $0x10] sm:$0xff]
          %v1572 = vld [vmem:[%s647 + $0x18] sm:$0xff]
          %v1573 = vld [vmem:[%s647 + $0x20] sm:$0xff]
          %v1574 = vld [vmem:[%s647 + $0x28] sm:$0xff]
          %v1575 = vld [vmem:[%s647 + $0x30] sm:$0xff]
          %v1576 = vld [vmem:[%s647 + $0x38] sm:$0xff]
          %s1577 = sld [smem:[#allocation5 + %s1552]]
          %v1578 = vstv %s1577
          %v1579 = vmul.f32 %v1578, %v1553
          %v1580 = vmul.f32 %v1578, %v1554
          %v1581 = vmul.f32 %v1578, %v1555
          %v1582 = vmul.f32 %v1578, %v1556
          %v1583 = vmul.f32 %v1578, %v1557
          %v1584 = vmul.f32 %v1578, %v1558
          %v1585 = vmul.f32 %v1578, %v1559
          %v1586 = vmul.f32 %v1578, %v1560
          %v1587 = vadd.f32 %v1579, 0.0
          %v1588 = vadd.f32 %v1580, 0.0
          %v1589 = vadd.f32 %v1581, 0.0
          %v1590 = vadd.f32 %v1582, 0.0
          %v1591 = vadd.f32 %v1583, 0.0
          %v1592 = vadd.f32 %v1584, 0.0
          %v1593 = vadd.f32 %v1585, 0.0
          %v1594 = vadd.f32 %v1586, 0.0
          %s1595 = sadd.s32 %s1552, 1
          %s1596 = sld [smem:[#allocation5 + %s1595]]
          %v1597 = vstv %s1596
          %v1598 = vmul.f32 %v1597, %v1561
          %v1599 = vmul.f32 %v1597, %v1562
          %v1600 = vmul.f32 %v1597, %v1563
          %v1601 = vmul.f32 %v1597, %v1564
          %v1602 = vmul.f32 %v1597, %v1565
          %v1603 = vmul.f32 %v1597, %v1566
          %v1604 = vmul.f32 %v1597, %v1567
          %v1605 = vmul.f32 %v1597, %v1568
          %v1606 = vadd.f32 %v1587, %v1598
          %v1607 = vadd.f32 %v1588, %v1599
          %v1608 = vadd.f32 %v1589, %v1600
          %v1609 = vadd.f32 %v1590, %v1601
          %v1610 = vadd.f32 %v1591, %v1602
          %v1611 = vadd.f32 %v1592, %v1603
          %v1612 = vadd.f32 %v1593, %v1604
          %v1613 = vadd.f32 %v1594, %v1605
          %s1614 = sadd.s32 %s1552, 2
          %s1615 = sld [smem:[#allocation5 + %s1614]]
          %v1616 = vstv %s1615
          %v1617 = vmul.f32 %v1616, %v1569
          %v1618 = vmul.f32 %v1616, %v1570
          %v1619 = vmul.f32 %v1616, %v1571
          %v1620 = vmul.f32 %v1616, %v1572
          %v1621 = vmul.f32 %v1616, %v1573
          %v1622 = vmul.f32 %v1616, %v1574
          %v1623 = vmul.f32 %v1616, %v1575
          %v1624 = vmul.f32 %v1616, %v1576
          %v1625 = vadd.f32 %v1606, %v1617
          %v1626 = vadd.f32 %v1607, %v1618
          %v1627 = vadd.f32 %v1608, %v1619
          %v1628 = vadd.f32 %v1609, %v1620
          %v1629 = vadd.f32 %v1610, %v1621
          %v1630 = vadd.f32 %v1611, %v1622
          %v1631 = vadd.f32 %v1612, %v1623
          %v1632 = vadd.f32 %v1613, %v1624
          %s1633 = sadd.s32 %s1552, 3
          %v1634 = vld [vmem:[#allocation2 + $0x1] sm:$0xff]
          %v1635 = vld [vmem:[#allocation2 + $0x9] sm:$0xff]
          %v1636 = vld [vmem:[#allocation2 + $0x11] sm:$0xff]
          %v1637 = vld [vmem:[#allocation2 + $0x19] sm:$0xff]
          %v1638 = vld [vmem:[#allocation2 + $0x21] sm:$0xff]
          %v1639 = vld [vmem:[#allocation2 + $0x29] sm:$0xff]
          %v1640 = vld [vmem:[#allocation2 + $0x31] sm:$0xff]
          %v1641 = vld [vmem:[#allocation2 + $0x39] sm:$0xff]
          %v1642 = vld [vmem:[%s195 + $0x1] sm:$0xff]
          %v1643 = vld [vmem:[%s195 + $0x9] sm:$0xff]
          %v1644 = vld [vmem:[%s195 + $0x11] sm:$0xff]
          %v1645 = vld [vmem:[%s195 + $0x19] sm:$0xff]
          %v1646 = vld [vmem:[%s195 + $0x21] sm:$0xff]
          %v1647 = vld [vmem:[%s195 + $0x29] sm:$0xff]
          %v1648 = vld [vmem:[%s195 + $0x31] sm:$0xff]
          %v1649 = vld [vmem:[%s195 + $0x39] sm:$0xff]
          %v1650 = vld [vmem:[%s647 + $0x1] sm:$0xff]
          %v1651 = vld [vmem:[%s647 + $0x9] sm:$0xff]
          %v1652 = vld [vmem:[%s647 + $0x11] sm:$0xff]
          %v1653 = vld [vmem:[%s647 + $0x19] sm:$0xff]
          %v1654 = vld [vmem:[%s647 + $0x21] sm:$0xff]
          %v1655 = vld [vmem:[%s647 + $0x29] sm:$0xff]
          %v1656 = vld [vmem:[%s647 + $0x31] sm:$0xff]
          %v1657 = vld [vmem:[%s647 + $0x39] sm:$0xff]
          %s1658 = sld [smem:[#allocation5 + %s1633]]
          %v1659 = vstv %s1658
          %v1660 = vmul.f32 %v1659, %v1634
          %v1661 = vmul.f32 %v1659, %v1635
          %v1662 = vmul.f32 %v1659, %v1636
          %v1663 = vmul.f32 %v1659, %v1637
          %v1664 = vmul.f32 %v1659, %v1638
          %v1665 = vmul.f32 %v1659, %v1639
          %v1666 = vmul.f32 %v1659, %v1640
          %v1667 = vmul.f32 %v1659, %v1641
          %v1668 = vadd.f32 %v1625, %v1660
          %v1669 = vadd.f32 %v1626, %v1661
          %v1670 = vadd.f32 %v1627, %v1662
          %v1671 = vadd.f32 %v1628, %v1663
          %v1672 = vadd.f32 %v1629, %v1664
          %v1673 = vadd.f32 %v1630, %v1665
          %v1674 = vadd.f32 %v1631, %v1666
          %v1675 = vadd.f32 %v1632, %v1667
          %s1676 = sadd.s32 %s1552, 4
          %s1677 = sld [smem:[#allocation5 + %s1676]]
          %v1678 = vstv %s1677
          %v1679 = vmul.f32 %v1678, %v1642
          %v1680 = vmul.f32 %v1678, %v1643
          %v1681 = vmul.f32 %v1678, %v1644
          %v1682 = vmul.f32 %v1678, %v1645
          %v1683 = vmul.f32 %v1678, %v1646
          %v1684 = vmul.f32 %v1678, %v1647
          %v1685 = vmul.f32 %v1678, %v1648
          %v1686 = vmul.f32 %v1678, %v1649
          %v1687 = vadd.f32 %v1668, %v1679
          %v1688 = vadd.f32 %v1669, %v1680
          %v1689 = vadd.f32 %v1670, %v1681
          %v1690 = vadd.f32 %v1671, %v1682
          %v1691 = vadd.f32 %v1672, %v1683
          %v1692 = vadd.f32 %v1673, %v1684
          %v1693 = vadd.f32 %v1674, %v1685
          %v1694 = vadd.f32 %v1675, %v1686
          %s1695 = sadd.s32 %s1552, 5
          %s1696 = sld [smem:[#allocation5 + %s1695]]
          %v1697 = vstv %s1696
          %v1698 = vmul.f32 %v1697, %v1650
          %v1699 = vmul.f32 %v1697, %v1651
          %v1700 = vmul.f32 %v1697, %v1652
          %v1701 = vmul.f32 %v1697, %v1653
          %v1702 = vmul.f32 %v1697, %v1654
          %v1703 = vmul.f32 %v1697, %v1655
          %v1704 = vmul.f32 %v1697, %v1656
          %v1705 = vmul.f32 %v1697, %v1657
          %v1706 = vadd.f32 %v1687, %v1698
          %v1707 = vadd.f32 %v1688, %v1699
          %v1708 = vadd.f32 %v1689, %v1700
          %v1709 = vadd.f32 %v1690, %v1701
          %v1710 = vadd.f32 %v1691, %v1702
          %v1711 = vadd.f32 %v1692, %v1703
          %v1712 = vadd.f32 %v1693, %v1704
          %v1713 = vadd.f32 %v1694, %v1705
          %s1714 = sadd.s32 %s1552, 6
          %v1715 = vld [vmem:[#allocation2 + $0x2] sm:$0xff]
          %v1716 = vld [vmem:[#allocation2 + $0xa] sm:$0xff]
          %v1717 = vld [vmem:[#allocation2 + $0x12] sm:$0xff]
          %v1718 = vld [vmem:[#allocation2 + $0x1a] sm:$0xff]
          %v1719 = vld [vmem:[#allocation2 + $0x22] sm:$0xff]
          %v1720 = vld [vmem:[#allocation2 + $0x2a] sm:$0xff]
          %v1721 = vld [vmem:[#allocation2 + $0x32] sm:$0xff]
          %v1722 = vld [vmem:[#allocation2 + $0x3a] sm:$0xff]
          %v1723 = vld [vmem:[%s195 + $0x2] sm:$0xff]
          %v1724 = vld [vmem:[%s195 + $0xa] sm:$0xff]
          %v1725 = vld [vmem:[%s195 + $0x12] sm:$0xff]
          %v1726 = vld [vmem:[%s195 + $0x1a] sm:$0xff]
          %v1727 = vld [vmem:[%s195 + $0x22] sm:$0xff]
          %v1728 = vld [vmem:[%s195 + $0x2a] sm:$0xff]
          %v1729 = vld [vmem:[%s195 + $0x32] sm:$0xff]
          %v1730 = vld [vmem:[%s195 + $0x3a] sm:$0xff]
          %v1731 = vld [vmem:[%s647 + $0x2] sm:$0xff]
          %v1732 = vld [vmem:[%s647 + $0xa] sm:$0xff]
          %v1733 = vld [vmem:[%s647 + $0x12] sm:$0xff]
          %v1734 = vld [vmem:[%s647 + $0x1a] sm:$0xff]
          %v1735 = vld [vmem:[%s647 + $0x22] sm:$0xff]
          %v1736 = vld [vmem:[%s647 + $0x2a] sm:$0xff]
          %v1737 = vld [vmem:[%s647 + $0x32] sm:$0xff]
          %v1738 = vld [vmem:[%s647 + $0x3a] sm:$0xff]
          %s1739 = sld [smem:[#allocation5 + %s1714]]
          %v1740 = vstv %s1739
          %v1741 = vmul.f32 %v1740, %v1715
          %v1742 = vmul.f32 %v1740, %v1716
          %v1743 = vmul.f32 %v1740, %v1717
          %v1744 = vmul.f32 %v1740, %v1718
          %v1745 = vmul.f32 %v1740, %v1719
          %v1746 = vmul.f32 %v1740, %v1720
          %v1747 = vmul.f32 %v1740, %v1721
          %v1748 = vmul.f32 %v1740, %v1722
          %v1749 = vadd.f32 %v1706, %v1741
          %v1750 = vadd.f32 %v1707, %v1742
          %v1751 = vadd.f32 %v1708, %v1743
          %v1752 = vadd.f32 %v1709, %v1744
          %v1753 = vadd.f32 %v1710, %v1745
          %v1754 = vadd.f32 %v1711, %v1746
          %v1755 = vadd.f32 %v1712, %v1747
          %v1756 = vadd.f32 %v1713, %v1748
          %s1757 = sadd.s32 %s1552, 7
          %s1758 = sld [smem:[#allocation5 + %s1757]]
          %v1759 = vstv %s1758
          %v1760 = vmul.f32 %v1759, %v1723
          %v1761 = vmul.f32 %v1759, %v1724
          %v1762 = vmul.f32 %v1759, %v1725
          %v1763 = vmul.f32 %v1759, %v1726
          %v1764 = vmul.f32 %v1759, %v1727
          %v1765 = vmul.f32 %v1759, %v1728
          %v1766 = vmul.f32 %v1759, %v1729
          %v1767 = vmul.f32 %v1759, %v1730
          %v1768 = vadd.f32 %v1749, %v1760
          %v1769 = vadd.f32 %v1750, %v1761
          %v1770 = vadd.f32 %v1751, %v1762
          %v1771 = vadd.f32 %v1752, %v1763
          %v1772 = vadd.f32 %v1753, %v1764
          %v1773 = vadd.f32 %v1754, %v1765
          %v1774 = vadd.f32 %v1755, %v1766
          %v1775 = vadd.f32 %v1756, %v1767
          %s1776 = sadd.s32 %s1552, 8
          %s1777 = sld [smem:[#allocation5 + %s1776]]
          %v1778 = vstv %s1777
          %v1779 = vmul.f32 %v1778, %v1731
          %v1780 = vmul.f32 %v1778, %v1732
          %v1781 = vmul.f32 %v1778, %v1733
          %v1782 = vmul.f32 %v1778, %v1734
          %v1783 = vmul.f32 %v1778, %v1735
          %v1784 = vmul.f32 %v1778, %v1736
          %v1785 = vmul.f32 %v1778, %v1737
          %v1786 = vmul.f32 %v1778, %v1738
          %v1787 = vadd.f32 %v1768, %v1779
          %v1788 = vadd.f32 %v1769, %v1780
          %v1789 = vadd.f32 %v1770, %v1781
          %v1790 = vadd.f32 %v1771, %v1782
          %v1791 = vadd.f32 %v1772, %v1783
          %v1792 = vadd.f32 %v1773, %v1784
          %v1793 = vadd.f32 %v1774, %v1785
          %v1794 = vadd.f32 %v1775, %v1786
          %s1795 = smul.u32 %s1547, 3
          %s1796 = sadd.s32 %s1795, 1
          %s1797 = smul.u32 %s1796, 9
          %v1798 = vld [vmem:[%s833] sm:$0xff]
          %v1799 = vld [vmem:[%s833 + $0x8] sm:$0xff]
          %v1800 = vld [vmem:[%s833 + $0x10] sm:$0xff]
          %v1801 = vld [vmem:[%s833 + $0x18] sm:$0xff]
          %v1802 = vld [vmem:[%s833 + $0x20] sm:$0xff]
          %v1803 = vld [vmem:[%s833 + $0x28] sm:$0xff]
          %v1804 = vld [vmem:[%s833 + $0x30] sm:$0xff]
          %v1805 = vld [vmem:[%s833 + $0x38] sm:$0xff]
          %v1806 = vld [vmem:[%s665] sm:$0xff]
          %v1807 = vld [vmem:[%s665 + $0x8] sm:$0xff]
          %v1808 = vld [vmem:[%s665 + $0x10] sm:$0xff]
          %v1809 = vld [vmem:[%s665 + $0x18] sm:$0xff]
          %v1810 = vld [vmem:[%s665 + $0x20] sm:$0xff]
          %v1811 = vld [vmem:[%s665 + $0x28] sm:$0xff]
          %v1812 = vld [vmem:[%s665 + $0x30] sm:$0xff]
          %v1813 = vld [vmem:[%s665 + $0x38] sm:$0xff]
          %v1814 = vld [vmem:[%s1001] sm:$0xff]
          %v1815 = vld [vmem:[%s1001 + $0x8] sm:$0xff]
          %v1816 = vld [vmem:[%s1001 + $0x10] sm:$0xff]
          %v1817 = vld [vmem:[%s1001 + $0x18] sm:$0xff]
          %v1818 = vld [vmem:[%s1001 + $0x20] sm:$0xff]
          %v1819 = vld [vmem:[%s1001 + $0x28] sm:$0xff]
          %v1820 = vld [vmem:[%s1001 + $0x30] sm:$0xff]
          %v1821 = vld [vmem:[%s1001 + $0x38] sm:$0xff]
          %s1822 = sld [smem:[#allocation5 + %s1797]]
          %v1823 = vstv %s1822
          %v1824 = vmul.f32 %v1823, %v1798
          %v1825 = vmul.f32 %v1823, %v1799
          %v1826 = vmul.f32 %v1823, %v1800
          %v1827 = vmul.f32 %v1823, %v1801
          %v1828 = vmul.f32 %v1823, %v1802
          %v1829 = vmul.f32 %v1823, %v1803
          %v1830 = vmul.f32 %v1823, %v1804
          %v1831 = vmul.f32 %v1823, %v1805
          %v1832 = vadd.f32 %v1787, %v1824
          %v1833 = vadd.f32 %v1788, %v1825
          %v1834 = vadd.f32 %v1789, %v1826
          %v1835 = vadd.f32 %v1790, %v1827
          %v1836 = vadd.f32 %v1791, %v1828
          %v1837 = vadd.f32 %v1792, %v1829
          %v1838 = vadd.f32 %v1793, %v1830
          %v1839 = vadd.f32 %v1794, %v1831
          %s1840 = sadd.s32 %s1797, 1
          %s1841 = sld [smem:[#allocation5 + %s1840]]
          %v1842 = vstv %s1841
          %v1843 = vmul.f32 %v1842, %v1806
          %v1844 = vmul.f32 %v1842, %v1807
          %v1845 = vmul.f32 %v1842, %v1808
          %v1846 = vmul.f32 %v1842, %v1809
          %v1847 = vmul.f32 %v1842, %v1810
          %v1848 = vmul.f32 %v1842, %v1811
          %v1849 = vmul.f32 %v1842, %v1812
          %v1850 = vmul.f32 %v1842, %v1813
          %v1851 = vadd.f32 %v1832, %v1843
          %v1852 = vadd.f32 %v1833, %v1844
          %v1853 = vadd.f32 %v1834, %v1845
          %v1854 = vadd.f32 %v1835, %v1846
          %v1855 = vadd.f32 %v1836, %v1847
          %v1856 = vadd.f32 %v1837, %v1848
          %v1857 = vadd.f32 %v1838, %v1849
          %v1858 = vadd.f32 %v1839, %v1850
          %s1859 = sadd.s32 %s1797, 2
          %s1860 = sld [smem:[#allocation5 + %s1859]]
          %v1861 = vstv %s1860
          %v1862 = vmul.f32 %v1861, %v1814
          %v1863 = vmul.f32 %v1861, %v1815
          %v1864 = vmul.f32 %v1861, %v1816
          %v1865 = vmul.f32 %v1861, %v1817
          %v1866 = vmul.f32 %v1861, %v1818
          %v1867 = vmul.f32 %v1861, %v1819
          %v1868 = vmul.f32 %v1861, %v1820
          %v1869 = vmul.f32 %v1861, %v1821
          %v1870 = vadd.f32 %v1851, %v1862
          %v1871 = vadd.f32 %v1852, %v1863
          %v1872 = vadd.f32 %v1853, %v1864
          %v1873 = vadd.f32 %v1854, %v1865
          %v1874 = vadd.f32 %v1855, %v1866
          %v1875 = vadd.f32 %v1856, %v1867
          %v1876 = vadd.f32 %v1857, %v1868
          %v1877 = vadd.f32 %v1858, %v1869
          %s1878 = sadd.s32 %s1797, 3
          %v1879 = vld [vmem:[%s833 + $0x1] sm:$0xff]
          %v1880 = vld [vmem:[%s833 + $0x9] sm:$0xff]
          %v1881 = vld [vmem:[%s833 + $0x11] sm:$0xff]
          %v1882 = vld [vmem:[%s833 + $0x19] sm:$0xff]
          %v1883 = vld [vmem:[%s833 + $0x21] sm:$0xff]
          %v1884 = vld [vmem:[%s833 + $0x29] sm:$0xff]
          %v1885 = vld [vmem:[%s833 + $0x31] sm:$0xff]
          %v1886 = vld [vmem:[%s833 + $0x39] sm:$0xff]
          %v1887 = vld [vmem:[%s665 + $0x1] sm:$0xff]
          %v1888 = vld [vmem:[%s665 + $0x9] sm:$0xff]
          %v1889 = vld [vmem:[%s665 + $0x11] sm:$0xff]
          %v1890 = vld [vmem:[%s665 + $0x19] sm:$0xff]
          %v1891 = vld [vmem:[%s665 + $0x21] sm:$0xff]
          %v1892 = vld [vmem:[%s665 + $0x29] sm:$0xff]
          %v1893 = vld [vmem:[%s665 + $0x31] sm:$0xff]
          %v1894 = vld [vmem:[%s665 + $0x39] sm:$0xff]
          %v1895 = vld [vmem:[%s1001 + $0x1] sm:$0xff]
          %v1896 = vld [vmem:[%s1001 + $0x9] sm:$0xff]
          %v1897 = vld [vmem:[%s1001 + $0x11] sm:$0xff]
          %v1898 = vld [vmem:[%s1001 + $0x19] sm:$0xff]
          %v1899 = vld [vmem:[%s1001 + $0x21] sm:$0xff]
          %v1900 = vld [vmem:[%s1001 + $0x29] sm:$0xff]
          %v1901 = vld [vmem:[%s1001 + $0x31] sm:$0xff]
          %v1902 = vld [vmem:[%s1001 + $0x39] sm:$0xff]
          %s1903 = sld [smem:[#allocation5 + %s1878]]
          %v1904 = vstv %s1903
          %v1905 = vmul.f32 %v1904, %v1879
          %v1906 = vmul.f32 %v1904, %v1880
          %v1907 = vmul.f32 %v1904, %v1881
          %v1908 = vmul.f32 %v1904, %v1882
          %v1909 = vmul.f32 %v1904, %v1883
          %v1910 = vmul.f32 %v1904, %v1884
          %v1911 = vmul.f32 %v1904, %v1885
          %v1912 = vmul.f32 %v1904, %v1886
          %v1913 = vadd.f32 %v1870, %v1905
          %v1914 = vadd.f32 %v1871, %v1906
          %v1915 = vadd.f32 %v1872, %v1907
          %v1916 = vadd.f32 %v1873, %v1908
          %v1917 = vadd.f32 %v1874, %v1909
          %v1918 = vadd.f32 %v1875, %v1910
          %v1919 = vadd.f32 %v1876, %v1911
          %v1920 = vadd.f32 %v1877, %v1912
          %s1921 = sadd.s32 %s1797, 4
          %s1922 = sld [smem:[#allocation5 + %s1921]]
          %v1923 = vstv %s1922
          %v1924 = vmul.f32 %v1923, %v1887
          %v1925 = vmul.f32 %v1923, %v1888
          %v1926 = vmul.f32 %v1923, %v1889
          %v1927 = vmul.f32 %v1923, %v1890
          %v1928 = vmul.f32 %v1923, %v1891
          %v1929 = vmul.f32 %v1923, %v1892
          %v1930 = vmul.f32 %v1923, %v1893
          %v1931 = vmul.f32 %v1923, %v1894
          %v1932 = vadd.f32 %v1913, %v1924
          %v1933 = vadd.f32 %v1914, %v1925
          %v1934 = vadd.f32 %v1915, %v1926
          %v1935 = vadd.f32 %v1916, %v1927
          %v1936 = vadd.f32 %v1917, %v1928
          %v1937 = vadd.f32 %v1918, %v1929
          %v1938 = vadd.f32 %v1919, %v1930
          %v1939 = vadd.f32 %v1920, %v1931
          %s1940 = sadd.s32 %s1797, 5
          %s1941 = sld [smem:[#allocation5 + %s1940]]
          %v1942 = vstv %s1941
          %v1943 = vmul.f32 %v1942, %v1895
          %v1944 = vmul.f32 %v1942, %v1896
          %v1945 = vmul.f32 %v1942, %v1897
          %v1946 = vmul.f32 %v1942, %v1898
          %v1947 = vmul.f32 %v1942, %v1899
          %v1948 = vmul.f32 %v1942, %v1900
          %v1949 = vmul.f32 %v1942, %v1901
          %v1950 = vmul.f32 %v1942, %v1902
          %v1951 = vadd.f32 %v1932, %v1943
          %v1952 = vadd.f32 %v1933, %v1944
          %v1953 = vadd.f32 %v1934, %v1945
          %v1954 = vadd.f32 %v1935, %v1946
          %v1955 = vadd.f32 %v1936, %v1947
          %v1956 = vadd.f32 %v1937, %v1948
          %v1957 = vadd.f32 %v1938, %v1949
          %v1958 = vadd.f32 %v1939, %v1950
          %s1959 = sadd.s32 %s1797, 6
          %v1960 = vld [vmem:[%s833 + $0x2] sm:$0xff]
          %v1961 = vld [vmem:[%s833 + $0xa] sm:$0xff]
          %v1962 = vld [vmem:[%s833 + $0x12] sm:$0xff]
          %v1963 = vld [vmem:[%s833 + $0x1a] sm:$0xff]
          %v1964 = vld [vmem:[%s833 + $0x22] sm:$0xff]
          %v1965 = vld [vmem:[%s833 + $0x2a] sm:$0xff]
          %v1966 = vld [vmem:[%s833 + $0x32] sm:$0xff]
          %v1967 = vld [vmem:[%s833 + $0x3a] sm:$0xff]
          %v1968 = vld [vmem:[%s665 + $0x2] sm:$0xff]
          %v1969 = vld [vmem:[%s665 + $0xa] sm:$0xff]
          %v1970 = vld [vmem:[%s665 + $0x12] sm:$0xff]
          %v1971 = vld [vmem:[%s665 + $0x1a] sm:$0xff]
          %v1972 = vld [vmem:[%s665 + $0x22] sm:$0xff]
          %v1973 = vld [vmem:[%s665 + $0x2a] sm:$0xff]
          %v1974 = vld [vmem:[%s665 + $0x32] sm:$0xff]
          %v1975 = vld [vmem:[%s665 + $0x3a] sm:$0xff]
          %v1976 = vld [vmem:[%s1001 + $0x2] sm:$0xff]
          %v1977 = vld [vmem:[%s1001 + $0xa] sm:$0xff]
          %v1978 = vld [vmem:[%s1001 + $0x12] sm:$0xff]
          %v1979 = vld [vmem:[%s1001 + $0x1a] sm:$0xff]
          %v1980 = vld [vmem:[%s1001 + $0x22] sm:$0xff]
          %v1981 = vld [vmem:[%s1001 + $0x2a] sm:$0xff]
          %v1982 = vld [vmem:[%s1001 + $0x32] sm:$0xff]
          %v1983 = vld [vmem:[%s1001 + $0x3a] sm:$0xff]
          %s1984 = sld [smem:[#allocation5 + %s1959]]
          %v1985 = vstv %s1984
          %v1986 = vmul.f32 %v1985, %v1960
          %v1987 = vmul.f32 %v1985, %v1961
          %v1988 = vmul.f32 %v1985, %v1962
          %v1989 = vmul.f32 %v1985, %v1963
          %v1990 = vmul.f32 %v1985, %v1964
          %v1991 = vmul.f32 %v1985, %v1965
          %v1992 = vmul.f32 %v1985, %v1966
          %v1993 = vmul.f32 %v1985, %v1967
          %v1994 = vadd.f32 %v1951, %v1986
          %v1995 = vadd.f32 %v1952, %v1987
          %v1996 = vadd.f32 %v1953, %v1988
          %v1997 = vadd.f32 %v1954, %v1989
          %v1998 = vadd.f32 %v1955, %v1990
          %v1999 = vadd.f32 %v1956, %v1991
          %v2000 = vadd.f32 %v1957, %v1992
          %v2001 = vadd.f32 %v1958, %v1993
          %s2002 = sadd.s32 %s1797, 7
          %s2003 = sld [smem:[#allocation5 + %s2002]]
          %v2004 = vstv %s2003
          %v2005 = vmul.f32 %v2004, %v1968
          %v2006 = vmul.f32 %v2004, %v1969
          %v2007 = vmul.f32 %v2004, %v1970
          %v2008 = vmul.f32 %v2004, %v1971
          %v2009 = vmul.f32 %v2004, %v1972
          %v2010 = vmul.f32 %v2004, %v1973
          %v2011 = vmul.f32 %v2004, %v1974
          %v2012 = vmul.f32 %v2004, %v1975
          %v2013 = vadd.f32 %v1994, %v2005
          %v2014 = vadd.f32 %v1995, %v2006
          %v2015 = vadd.f32 %v1996, %v2007
          %v2016 = vadd.f32 %v1997, %v2008
          %v2017 = vadd.f32 %v1998, %v2009
          %v2018 = vadd.f32 %v1999, %v2010
          %v2019 = vadd.f32 %v2000, %v2011
          %v2020 = vadd.f32 %v2001, %v2012
          %s2021 = sadd.s32 %s1797, 8
          %s2022 = sld [smem:[#allocation5 + %s2021]]
          %v2023 = vstv %s2022
          %v2024 = vmul.f32 %v2023, %v1976
          %v2025 = vmul.f32 %v2023, %v1977
          %v2026 = vmul.f32 %v2023, %v1978
          %v2027 = vmul.f32 %v2023, %v1979
          %v2028 = vmul.f32 %v2023, %v1980
          %v2029 = vmul.f32 %v2023, %v1981
          %v2030 = vmul.f32 %v2023, %v1982
          %v2031 = vmul.f32 %v2023, %v1983
          %v2032 = vadd.f32 %v2013, %v2024
          %v2033 = vadd.f32 %v2014, %v2025
          %v2034 = vadd.f32 %v2015, %v2026
          %v2035 = vadd.f32 %v2016, %v2027
          %v2036 = vadd.f32 %v2017, %v2028
          %v2037 = vadd.f32 %v2018, %v2029
          %v2038 = vadd.f32 %v2019, %v2030
          %v2039 = vadd.f32 %v2020, %v2031
          %s2040 = sadd.s32 %s1795, 2
          %s2041 = smul.u32 %s2040, 9
          %v2042 = vld [vmem:[%s1187] sm:$0xff]
          %v2043 = vld [vmem:[%s1187 + $0x8] sm:$0xff]
          %v2044 = vld [vmem:[%s1187 + $0x10] sm:$0xff]
          %v2045 = vld [vmem:[%s1187 + $0x18] sm:$0xff]
          %v2046 = vld [vmem:[%s1187 + $0x20] sm:$0xff]
          %v2047 = vld [vmem:[%s1187 + $0x28] sm:$0xff]
          %v2048 = vld [vmem:[%s1187 + $0x30] sm:$0xff]
          %v2049 = vld [vmem:[%s1187 + $0x38] sm:$0xff]
          %v2050 = vld [vmem:[%s1019] sm:$0xff]
          %v2051 = vld [vmem:[%s1019 + $0x8] sm:$0xff]
          %v2052 = vld [vmem:[%s1019 + $0x10] sm:$0xff]
          %v2053 = vld [vmem:[%s1019 + $0x18] sm:$0xff]
          %v2054 = vld [vmem:[%s1019 + $0x20] sm:$0xff]
          %v2055 = vld [vmem:[%s1019 + $0x28] sm:$0xff]
          %v2056 = vld [vmem:[%s1019 + $0x30] sm:$0xff]
          %v2057 = vld [vmem:[%s1019 + $0x38] sm:$0xff]
          %v2058 = vld [vmem:[%s1355] sm:$0xff]
          %v2059 = vld [vmem:[%s1355 + $0x8] sm:$0xff]
          %v2060 = vld [vmem:[%s1355 + $0x10] sm:$0xff]
          %v2061 = vld [vmem:[%s1355 + $0x18] sm:$0xff]
          %v2062 = vld [vmem:[%s1355 + $0x20] sm:$0xff]
          %v2063 = vld [vmem:[%s1355 + $0x28] sm:$0xff]
          %v2064 = vld [vmem:[%s1355 + $0x30] sm:$0xff]
          %v2065 = vld [vmem:[%s1355 + $0x38] sm:$0xff]
          %s2066 = sld [smem:[#allocation5 + %s2041]]
          %v2067 = vstv %s2066
          %v2068 = vmul.f32 %v2067, %v2042
          %v2069 = vmul.f32 %v2067, %v2043
          %v2070 = vmul.f32 %v2067, %v2044
          %v2071 = vmul.f32 %v2067, %v2045
          %v2072 = vmul.f32 %v2067, %v2046
          %v2073 = vmul.f32 %v2067, %v2047
          %v2074 = vmul.f32 %v2067, %v2048
          %v2075 = vmul.f32 %v2067, %v2049
          %v2076 = vadd.f32 %v2032, %v2068
          %v2077 = vadd.f32 %v2033, %v2069
          %v2078 = vadd.f32 %v2034, %v2070
          %v2079 = vadd.f32 %v2035, %v2071
          %v2080 = vadd.f32 %v2036, %v2072
          %v2081 = vadd.f32 %v2037, %v2073
          %v2082 = vadd.f32 %v2038, %v2074
          %v2083 = vadd.f32 %v2039, %v2075
          %s2084 = sadd.s32 %s2041, 1
          %s2085 = sld [smem:[#allocation5 + %s2084]]
          %v2086 = vstv %s2085
          %v2087 = vmul.f32 %v2086, %v2050
          %v2088 = vmul.f32 %v2086, %v2051
          %v2089 = vmul.f32 %v2086, %v2052
          %v2090 = vmul.f32 %v2086, %v2053
          %v2091 = vmul.f32 %v2086, %v2054
          %v2092 = vmul.f32 %v2086, %v2055
          %v2093 = vmul.f32 %v2086, %v2056
          %v2094 = vmul.f32 %v2086, %v2057
          %v2095 = vadd.f32 %v2076, %v2087
          %v2096 = vadd.f32 %v2077, %v2088
          %v2097 = vadd.f32 %v2078, %v2089
          %v2098 = vadd.f32 %v2079, %v2090
          %v2099 = vadd.f32 %v2080, %v2091
          %v2100 = vadd.f32 %v2081, %v2092
          %v2101 = vadd.f32 %v2082, %v2093
          %v2102 = vadd.f32 %v2083, %v2094
          %s2103 = sadd.s32 %s2041, 2
          %s2104 = sld [smem:[#allocation5 + %s2103]]
          %v2105 = vstv %s2104
          %v2106 = vmul.f32 %v2105, %v2058
          %v2107 = vmul.f32 %v2105, %v2059
          %v2108 = vmul.f32 %v2105, %v2060
          %v2109 = vmul.f32 %v2105, %v2061
          %v2110 = vmul.f32 %v2105, %v2062
          %v2111 = vmul.f32 %v2105, %v2063
          %v2112 = vmul.f32 %v2105, %v2064
          %v2113 = vmul.f32 %v2105, %v2065
          %v2114 = vadd.f32 %v2095, %v2106
          %v2115 = vadd.f32 %v2096, %v2107
          %v2116 = vadd.f32 %v2097, %v2108
          %v2117 = vadd.f32 %v2098, %v2109
          %v2118 = vadd.f32 %v2099, %v2110
          %v2119 = vadd.f32 %v2100, %v2111
          %v2120 = vadd.f32 %v2101, %v2112
          %v2121 = vadd.f32 %v2102, %v2113
          %s2122 = sadd.s32 %s2041, 3
          %v2123 = vld [vmem:[%s1187 + $0x1] sm:$0xff]
          %v2124 = vld [vmem:[%s1187 + $0x9] sm:$0xff]
          %v2125 = vld [vmem:[%s1187 + $0x11] sm:$0xff]
          %v2126 = vld [vmem:[%s1187 + $0x19] sm:$0xff]
          %v2127 = vld [vmem:[%s1187 + $0x21] sm:$0xff]
          %v2128 = vld [vmem:[%s1187 + $0x29] sm:$0xff]
          %v2129 = vld [vmem:[%s1187 + $0x31] sm:$0xff]
          %v2130 = vld [vmem:[%s1187 + $0x39] sm:$0xff]
          %v2131 = vld [vmem:[%s1019 + $0x1] sm:$0xff]
          %v2132 = vld [vmem:[%s1019 + $0x9] sm:$0xff]
          %v2133 = vld [vmem:[%s1019 + $0x11] sm:$0xff]
          %v2134 = vld [vmem:[%s1019 + $0x19] sm:$0xff]
          %v2135 = vld [vmem:[%s1019 + $0x21] sm:$0xff]
          %v2136 = vld [vmem:[%s1019 + $0x29] sm:$0xff]
          %v2137 = vld [vmem:[%s1019 + $0x31] sm:$0xff]
          %v2138 = vld [vmem:[%s1019 + $0x39] sm:$0xff]
          %v2139 = vld [vmem:[%s1355 + $0x1] sm:$0xff]
          %v2140 = vld [vmem:[%s1355 + $0x9] sm:$0xff]
          %v2141 = vld [vmem:[%s1355 + $0x11] sm:$0xff]
          %v2142 = vld [vmem:[%s1355 + $0x19] sm:$0xff]
          %v2143 = vld [vmem:[%s1355 + $0x21] sm:$0xff]
          %v2144 = vld [vmem:[%s1355 + $0x29] sm:$0xff]
          %v2145 = vld [vmem:[%s1355 + $0x31] sm:$0xff]
          %v2146 = vld [vmem:[%s1355 + $0x39] sm:$0xff]
          %s2147 = sld [smem:[#allocation5 + %s2122]]
          %v2148 = vstv %s2147
          %v2149 = vmul.f32 %v2148, %v2123
          %v2150 = vmul.f32 %v2148, %v2124
          %v2151 = vmul.f32 %v2148, %v2125
          %v2152 = vmul.f32 %v2148, %v2126
          %v2153 = vmul.f32 %v2148, %v2127
          %v2154 = vmul.f32 %v2148, %v2128
          %v2155 = vmul.f32 %v2148, %v2129
          %v2156 = vmul.f32 %v2148, %v2130
          %v2157 = vadd.f32 %v2114, %v2149
          %v2158 = vadd.f32 %v2115, %v2150
          %v2159 = vadd.f32 %v2116, %v2151
          %v2160 = vadd.f32 %v2117, %v2152
          %v2161 = vadd.f32 %v2118, %v2153
          %v2162 = vadd.f32 %v2119, %v2154
          %v2163 = vadd.f32 %v2120, %v2155
          %v2164 = vadd.f32 %v2121, %v2156
          %s2165 = sadd.s32 %s2041, 4
          %s2166 = sld [smem:[#allocation5 + %s2165]]
          %v2167 = vstv %s2166
          %v2168 = vmul.f32 %v2167, %v2131
          %v2169 = vmul.f32 %v2167, %v2132
          %v2170 = vmul.f32 %v2167, %v2133
          %v2171 = vmul.f32 %v2167, %v2134
          %v2172 = vmul.f32 %v2167, %v2135
          %v2173 = vmul.f32 %v2167, %v2136
          %v2174 = vmul.f32 %v2167, %v2137
          %v2175 = vmul.f32 %v2167, %v2138
          %v2176 = vadd.f32 %v2157, %v2168
          %v2177 = vadd.f32 %v2158, %v2169
          %v2178 = vadd.f32 %v2159, %v2170
          %v2179 = vadd.f32 %v2160, %v2171
          %v2180 = vadd.f32 %v2161, %v2172
          %v2181 = vadd.f32 %v2162, %v2173
          %v2182 = vadd.f32 %v2163, %v2174
          %v2183 = vadd.f32 %v2164, %v2175
          %s2184 = sadd.s32 %s2041, 5
          %s2185 = sld [smem:[#allocation5 + %s2184]]
          %v2186 = vstv %s2185
          %v2187 = vmul.f32 %v2186, %v2139
          %v2188 = vmul.f32 %v2186, %v2140
          %v2189 = vmul.f32 %v2186, %v2141
          %v2190 = vmul.f32 %v2186, %v2142
          %v2191 = vmul.f32 %v2186, %v2143
          %v2192 = vmul.f32 %v2186, %v2144
          %v2193 = vmul.f32 %v2186, %v2145
          %v2194 = vmul.f32 %v2186, %v2146
          %v2195 = vadd.f32 %v2176, %v2187
          %v2196 = vadd.f32 %v2177, %v2188
          %v2197 = vadd.f32 %v2178, %v2189
          %v2198 = vadd.f32 %v2179, %v2190
          %v2199 = vadd.f32 %v2180, %v2191
          %v2200 = vadd.f32 %v2181, %v2192
          %v2201 = vadd.f32 %v2182, %v2193
          %v2202 = vadd.f32 %v2183, %v2194
          %s2203 = sadd.s32 %s2041, 6
          %v2204 = vld [vmem:[%s1187 + $0x2] sm:$0xff]
          %v2205 = vld [vmem:[%s1187 + $0xa] sm:$0xff]
          %v2206 = vld [vmem:[%s1187 + $0x12] sm:$0xff]
          %v2207 = vld [vmem:[%s1187 + $0x1a] sm:$0xff]
          %v2208 = vld [vmem:[%s1187 + $0x22] sm:$0xff]
          %v2209 = vld [vmem:[%s1187 + $0x2a] sm:$0xff]
          %v2210 = vld [vmem:[%s1187 + $0x32] sm:$0xff]
          %v2211 = vld [vmem:[%s1187 + $0x3a] sm:$0xff]
          %v2212 = vld [vmem:[%s1019 + $0x2] sm:$0xff]
          %v2213 = vld [vmem:[%s1019 + $0xa] sm:$0xff]
          %v2214 = vld [vmem:[%s1019 + $0x12] sm:$0xff]
          %v2215 = vld [vmem:[%s1019 + $0x1a] sm:$0xff]
          %v2216 = vld [vmem:[%s1019 + $0x22] sm:$0xff]
          %v2217 = vld [vmem:[%s1019 + $0x2a] sm:$0xff]
          %v2218 = vld [vmem:[%s1019 + $0x32] sm:$0xff]
          %v2219 = vld [vmem:[%s1019 + $0x3a] sm:$0xff]
          %v2220 = vld [vmem:[%s1355 + $0x2] sm:$0xff]
          %v2221 = vld [vmem:[%s1355 + $0xa] sm:$0xff]
          %v2222 = vld [vmem:[%s1355 + $0x12] sm:$0xff]
          %v2223 = vld [vmem:[%s1355 + $0x1a] sm:$0xff]
          %v2224 = vld [vmem:[%s1355 + $0x22] sm:$0xff]
          %v2225 = vld [vmem:[%s1355 + $0x2a] sm:$0xff]
          %v2226 = vld [vmem:[%s1355 + $0x32] sm:$0xff]
          %v2227 = vld [vmem:[%s1355 + $0x3a] sm:$0xff]
          %s2228 = sld [smem:[#allocation5 + %s2203]]
          %v2229 = vstv %s2228
          %v2230 = vmul.f32 %v2229, %v2204
          %v2231 = vmul.f32 %v2229, %v2205
          %v2232 = vmul.f32 %v2229, %v2206
          %v2233 = vmul.f32 %v2229, %v2207
          %v2234 = vmul.f32 %v2229, %v2208
          %v2235 = vmul.f32 %v2229, %v2209
          %v2236 = vmul.f32 %v2229, %v2210
          %v2237 = vmul.f32 %v2229, %v2211
          %v2238 = vadd.f32 %v2195, %v2230
          %v2239 = vadd.f32 %v2196, %v2231
          %v2240 = vadd.f32 %v2197, %v2232
          %v2241 = vadd.f32 %v2198, %v2233
          %v2242 = vadd.f32 %v2199, %v2234
          %v2243 = vadd.f32 %v2200, %v2235
          %v2244 = vadd.f32 %v2201, %v2236
          %v2245 = vadd.f32 %v2202, %v2237
          %s2246 = sadd.s32 %s2041, 7
          %s2247 = sld [smem:[#allocation5 + %s2246]]
          %v2248 = vstv %s2247
          %v2249 = vmul.f32 %v2248, %v2212
          %v2250 = vmul.f32 %v2248, %v2213
          %v2251 = vmul.f32 %v2248, %v2214
          %v2252 = vmul.f32 %v2248, %v2215
          %v2253 = vmul.f32 %v2248, %v2216
          %v2254 = vmul.f32 %v2248, %v2217
          %v2255 = vmul.f32 %v2248, %v2218
          %v2256 = vmul.f32 %v2248, %v2219
          %v2257 = vadd.f32 %v2238, %v2249
          %v2258 = vadd.f32 %v2239, %v2250
          %v2259 = vadd.f32 %v2240, %v2251
          %v2260 = vadd.f32 %v2241, %v2252
          %v2261 = vadd.f32 %v2242, %v2253
          %v2262 = vadd.f32 %v2243, %v2254
          %v2263 = vadd.f32 %v2244, %v2255
          %v2264 = vadd.f32 %v2245, %v2256
          %s2265 = sadd.s32 %s2041, 8
          %s2266 = sld [smem:[#allocation5 + %s2265]]
          %v2267 = vstv %s2266
          %v2268 = vmul.f32 %v2267, %v2220
          %v2269 = vmul.f32 %v2267, %v2221
          %v2270 = vmul.f32 %v2267, %v2222
          %v2271 = vmul.f32 %v2267, %v2223
          %v2272 = vmul.f32 %v2267, %v2224
          %v2273 = vmul.f32 %v2267, %v2225
          %v2274 = vmul.f32 %v2267, %v2226
          %v2275 = vmul.f32 %v2267, %v2227
          %v2276 = vadd.f32 %v2257, %v2268
          %v2277 = vadd.f32 %v2258, %v2269
          %v2278 = vadd.f32 %v2259, %v2270
          %v2279 = vadd.f32 %v2260, %v2271
          %v2280 = vadd.f32 %v2261, %v2272
          %v2281 = vadd.f32 %v2262, %v2273
          %v2282 = vadd.f32 %v2263, %v2274
          %v2283 = vadd.f32 %v2264, %v2275
          %v2284 = vld [vmem:[#allocation3] sm:$0xff]
          %v2285 = vld [vmem:[#allocation3 + $0x8] sm:$0xff]
          %v2286 = vld [vmem:[#allocation3 + $0x10] sm:$0xff]
          %v2287 = vld [vmem:[#allocation3 + $0x18] sm:$0xff]
          %v2289 = vsel %vm1389, %v2284, 0
          %v2292 = vsel %vm1389, %v2285, 0
          %v2295 = vsel %vm1389, %v2286, 0
          %v2298 = vsel %vm1389, %v2287, 0
          %2300 = vmatprep.subr.mxu0 0.0
          %2301 = vmatpush1.msra.mxu0 %v2276
          %2302 = vmatprep.subr.mxu0 0.0
          %2303 = vmatpush1.msra.mxu0 %v2277
          %2304 = vmatprep.subr.mxu0 0.0
          %2305 = vmatpush1.msra.mxu0 %v2278
          %2306 = vmatprep.subr.mxu0 0.0
          %2307 = vmatpush1.msra.mxu0 %v2279
          %2308 = vmatprep.subr.mxu0 0.0
          %2309 = vmatpush1.msra.mxu0 %v2280
          %2310 = vmatprep.subr.mxu0 0.0
          %2311 = vmatpush1.msra.mxu0 %v2281
          %2312 = vmatprep.subr.mxu0 0.0
          %2313 = vmatpush1.msra.mxu0 %v2282
          %2314 = vmatprep.subr.mxu0 0.0
          %2315 = vmatpush1.msra.mxu0 %v2283
          %2316 = vmatprep.subr.mxu0 0.0
          %2317 = vmatpush1.msra.mxu0 0.0
          %2318 = vmatprep.subr.mxu0 0.0
          %2319 = vmatpush1.msra.mxu0 0.0
          %2320 = vmatprep.subr.mxu0 0.0
          %2321 = vmatpush1.msra.mxu0 0.0
          %2322 = vmatprep.subr.mxu0 0.0
          %2323 = vmatpush1.msra.mxu0 0.0
          %2324 = vmatprep.subr.mxu0 0.0
          %2325 = vmatpush1.msra.mxu0 0.0
          %2326 = vmatprep.subr.mxu0 0.0
          %2327 = vmatpush1.msra.mxu0 0.0
          %2328 = vmatprep.subr.mxu0 0.0
          %2329 = vmatpush1.msra.mxu0 0.0
          %2330 = vmatprep.subr.mxu0 0.0
          %2331 = vmatpush1.msra.mxu0 0.0
          %2332 = vmatprep.subr.mxu0 0.0
          %2333 = vmatpush1.msra.mxu0 0.0
          %2334 = vmatprep.subr.mxu0 0.0
          %2335 = vmatpush1.msra.mxu0 0.0
          %2336 = vmatprep.subr.mxu0 0.0
          %2337 = vmatpush1.msra.mxu0 0.0
          %2338 = vmatprep.subr.mxu0 0.0
          %2339 = vmatpush1.msra.mxu0 0.0
          %2340 = vmatprep.subr.mxu0 0.0
          %2341 = vmatpush1.msra.mxu0 0.0
          %2342 = vmatprep.subr.mxu0 0.0
          %2343 = vmatpush1.msra.mxu0 0.0
          %2344 = vmatprep.subr.mxu0 0.0
          %2345 = vmatpush1.msra.mxu0 0.0
          %2346 = vmatprep.subr.mxu0 0.0
          %2347 = vmatpush1.msra.mxu0 0.0
          %2348 = vmatprep.subr.mxu0 0.0
          %2349 = vmatpush1.msra.mxu0 0.0
          %2350 = vmatprep.subr.mxu0 0.0
          %2351 = vmatpush1.msra.mxu0 0.0
          %2352 = vmatprep.subr.mxu0 0.0
          %2353 = vmatpush1.msra.mxu0 0.0
          %2354 = vmatprep.subr.mxu0 0.0
          %2355 = vmatpush1.msra.mxu0 0.0
          %2356 = vmatprep.subr.mxu0 0.0
          %2357 = vmatpush1.msra.mxu0 0.0
          %2358 = vmatprep.subr.mxu0 0.0
          %2359 = vmatpush1.msra.mxu0 0.0
          %2360 = vmatprep.subr.mxu0 0.0
          %2361 = vmatpush1.msra.mxu0 0.0
          %2362 = vmatprep.subr.mxu0 0.0
          %2363 = vmatpush1.msra.mxu0 0.0
          %2364 = vmatprep.mubr.f32.mxu0 0.0
          %2365 = vmatmul.mubr.f32.gmra.mrb[0].mxu0 %v2289
          %v2366 = vpop.f32.mrb[0].mxu0
          %v2367 = vadd.f32 0.0, %v2366
          %v2368 = vpop.f32.mrb[0].mxu0
          %2369 = vmatprep.mubr.f32.mxu0 0.0
          %2370 = vmatmul.mubr.f32.gmra.mrb[0].mxu0 %v2292
          %v2371 = vpop.f32.mrb[0].mxu0
          %v2372 = vadd.f32 0.0, %v2371
          %v2373 = vpop.f32.mrb[0].mxu0
          %2374 = vmatprep.mubr.f32.mxu0 0.0
          %2375 = vmatmul.mubr.f32.gmra.mrb[0].mxu0 %v2295
          %v2376 = vpop.f32.mrb[0].mxu0
          %v2377 = vadd.f32 0.0, %v2376
          %v2378 = vpop.f32.mrb[0].mxu0
          %2379 = vmatprep.mubr.f32.mxu0 0.0
          %2380 = vmatmul.mubr.f32.gmra.mrb[0].mxu0 %v2298
          %v2381 = vpop.f32.mrb[0].mxu0
          %v2382 = vadd.f32 0.0, %v2381
          %v2383 = vpop.f32.mrb[0].mxu0
          %2384 = vdwg.mxu0
          %v2385 = vld [vmem:[%s1410] sm:$0xff]
          %v2386 = vld [vmem:[%s1410 + $0x8] sm:$0xff]
          %v2387 = vld [vmem:[%s1410 + $0x10] sm:$0xff]
          %v2388 = vld [vmem:[%s1410 + $0x18] sm:$0xff]
          %v2390 = vsel %vm1389, %v2385, 0
          %v2393 = vsel %vm1389, %v2386, 0
          %v2396 = vsel %vm1389, %v2387, 0
          %v2399 = vsel %vm1389, %v2388, 0
          %2401 = vmatprep.subr.mxu0 0.0
          %2402 = vmatpush1.msra.mxu0 %v2276
          %2403 = vmatprep.subr.mxu0 0.0
          %2404 = vmatpush1.msra.mxu0 %v2277
          %2405 = vmatprep.subr.mxu0 0.0
          %2406 = vmatpush1.msra.mxu0 %v2278
          %2407 = vmatprep.subr.mxu0 0.0
          %2408 = vmatpush1.msra.mxu0 %v2279
          %2409 = vmatprep.subr.mxu0 0.0
          %2410 = vmatpush1.msra.mxu0 %v2280
          %2411 = vmatprep.subr.mxu0 0.0
          %2412 = vmatpush1.msra.mxu0 %v2281
          %2413 = vmatprep.subr.mxu0 0.0
          %2414 = vmatpush1.msra.mxu0 %v2282
          %2415 = vmatprep.subr.mxu0 0.0
          %2416 = vmatpush1.msra.mxu0 %v2283
          %2417 = vmatprep.subr.mxu0 0.0
          %2418 = vmatpush1.msra.mxu0 0.0
          %2419 = vmatprep.subr.mxu0 0.0
          %2420 = vmatpush1.msra.mxu0 0.0
          %2421 = vmatprep.subr.mxu0 0.0
          %2422 = vmatpush1.msra.mxu0 0.0
          %2423 = vmatprep.subr.mxu0 0.0
          %2424 = vmatpush1.msra.mxu0 0.0
          %2425 = vmatprep.subr.mxu0 0.0
          %2426 = vmatpush1.msra.mxu0 0.0
          %2427 = vmatprep.subr.mxu0 0.0
          %2428 = vmatpush1.msra.mxu0 0.0
          %2429 = vmatprep.subr.mxu0 0.0
          %2430 = vmatpush1.msra.mxu0 0.0
          %2431 = vmatprep.subr.mxu0 0.0
          %2432 = vmatpush1.msra.mxu0 0.0
          %2433 = vmatprep.subr.mxu0 0.0
          %2434 = vmatpush1.msra.mxu0 0.0
          %2435 = vmatprep.subr.mxu0 0.0
          %2436 = vmatpush1.msra.mxu0 0.0
          %2437 = vmatprep.subr.mxu0 0.0
          %2438 = vmatpush1.msra.mxu0 0.0
          %2439 = vmatprep.subr.mxu0 0.0
          %2440 = vmatpush1.msra.mxu0 0.0
          %2441 = vmatprep.subr.mxu0 0.0
          %2442 = vmatpush1.msra.mxu0 0.0
          %2443 = vmatprep.subr.mxu0 0.0
          %2444 = vmatpush1.msra.mxu0 0.0
          %2445 = vmatprep.subr.mxu0 0.0
          %2446 = vmatpush1.msra.mxu0 0.0
          %2447 = vmatprep.subr.mxu0 0.0
          %2448 = vmatpush1.msra.mxu0 0.0
          %2449 = vmatprep.subr.mxu0 0.0
          %2450 = vmatpush1.msra.mxu0 0.0
          %2451 = vmatprep.subr.mxu0 0.0
          %2452 = vmatpush1.msra.mxu0 0.0
          %2453 = vmatprep.subr.mxu0 0.0
          %2454 = vmatpush1.msra.mxu0 0.0
          %2455 = vmatprep.subr.mxu0 0.0
          %2456 = vmatpush1.msra.mxu0 0.0
          %2457 = vmatprep.subr.mxu0 0.0
          %2458 = vmatpush1.msra.mxu0 0.0
          %2459 = vmatprep.subr.mxu0 0.0
          %2460 = vmatpush1.msra.mxu0 0.0
          %2461 = vmatprep.subr.mxu0 0.0
          %2462 = vmatpush1.msra.mxu0 0.0
          %2463 = vmatprep.subr.mxu0 0.0
          %2464 = vmatpush1.msra.mxu0 0.0
          %2465 = vmatprep.mubr.f32.mxu0 0.0
          %2466 = vmatmul.mubr.f32.gmra.mrb[0].mxu0 %v2390
          %v2467 = vpop.f32.mrb[0].mxu0
          %v2468 = vadd.f32 0.0, %v2467
          %v2469 = vpop.f32.mrb[0].mxu0
          %2470 = vmatprep.mubr.f32.mxu0 0.0
          %2471 = vmatmul.mubr.f32.gmra.mrb[0].mxu0 %v2393
          %v2472 = vpop.f32.mrb[0].mxu0
          %v2473 = vadd.f32 0.0, %v2472
          %v2474 = vpop.f32.mrb[0].mxu0
          %2475 = vmatprep.mubr.f32.mxu0 0.0
          %2476 = vmatmul.mubr.f32.gmra.mrb[0].mxu0 %v2396
          %v2477 = vpop.f32.mrb[0].mxu0
          %v2478 = vadd.f32 0.0, %v2477
          %v2479 = vpop.f32.mrb[0].mxu0
          %2480 = vmatprep.mubr.f32.mxu0 0.0
          %2481 = vmatmul.mubr.f32.gmra.mrb[0].mxu0 %v2399
          %v2482 = vpop.f32.mrb[0].mxu0
          %v2483 = vadd.f32 0.0, %v2482
          %v2484 = vpop.f32.mrb[0].mxu0
          %2485 = vdwg.mxu0
          %v2486 = vmax.f32 %v2367, %v2468
          %v2487 = vmax.f32 %v2372, %v2473
          %v2488 = vmax.f32 %v2377, %v2478
          %v2489 = vmax.f32 %v2382, %v2483
          %v2490 = vld [vmem:[#allocation4] sm:$0xff]
          %v2491 = vld [vmem:[#allocation4 + $0x8] sm:$0xff]
          %v2492 = vld [vmem:[#allocation4 + $0x10] sm:$0xff]
          %v2493 = vld [vmem:[#allocation4 + $0x18] sm:$0xff]
          %v2494 = vld [vmem:[#allocation4 + $0x20] sm:$0xff]
          %v2495 = vld [vmem:[#allocation4 + $0x28] sm:$0xff]
          %v2496 = vld [vmem:[#allocation4 + $0x30] sm:$0xff]
          %v2497 = vld [vmem:[#allocation4 + $0x38] sm:$0xff]
          %v2498 = vld [vmem:[#allocation4 + $0x40] sm:$0xff]
          %v2499 = vld [vmem:[#allocation4 + $0x48] sm:$0xff]
          %v2500 = vld [vmem:[#allocation4 + $0x50] sm:$0xff]
          %v2501 = vld [vmem:[#allocation4 + $0x58] sm:$0xff]
          %v2502 = vld [vmem:[#allocation4 + $0x60] sm:$0xff]
          %v2503 = vld [vmem:[#allocation4 + $0x68] sm:$0xff]
          %v2504 = vld [vmem:[#allocation4 + $0x70] sm:$0xff]
          %v2505 = vld [vmem:[#allocation4 + $0x78] sm:$0xff]
          %2506 = vmatprep.subr.mxu0 0.0
          %2507 = vmatpush1.msra.mxu0 %v2490
          %2508 = vmatprep.subr.mxu0 0.0
          %2509 = vmatpush1.msra.mxu0 %v2491
          %2510 = vmatprep.subr.mxu0 0.0
          %2511 = vmatpush1.msra.mxu0 %v2492
          %2512 = vmatprep.subr.mxu0 0.0
          %2513 = vmatpush1.msra.mxu0 %v2493
          %2514 = vmatprep.subr.mxu0 0.0
          %2515 = vmatpush1.msra.mxu0 %v2494
          %2516 = vmatprep.subr.mxu0 0.0
          %2517 = vmatpush1.msra.mxu0 %v2495
          %2518 = vmatprep.subr.mxu0 0.0
          %2519 = vmatpush1.msra.mxu0 %v2496
          %2520 = vmatprep.subr.mxu0 0.0
          %2521 = vmatpush1.msra.mxu0 %v2497
          %2522 = vmatprep.subr.mxu0 0.0
          %2523 = vmatpush1.msra.mxu0 %v2498
          %2524 = vmatprep.subr.mxu0 0.0
          %2525 = vmatpush1.msra.mxu0 %v2499
          %2526 = vmatprep.subr.mxu0 0.0
          %2527 = vmatpush1.msra.mxu0 %v2500
          %2528 = vmatprep.subr.mxu0 0.0
          %2529 = vmatpush1.msra.mxu0 %v2501
          %2530 = vmatprep.subr.mxu0 0.0
          %2531 = vmatpush1.msra.mxu0 %v2502
          %2532 = vmatprep.subr.mxu0 0.0
          %2533 = vmatpush1.msra.mxu0 %v2503
          %2534 = vmatprep.subr.mxu0 0.0
          %2535 = vmatpush1.msra.mxu0 %v2504
          %2536 = vmatprep.subr.mxu0 0.0
          %2537 = vmatpush1.msra.mxu0 %v2505
          %2538 = vmatprep.subr.mxu0 0.0
          %2539 = vmatpush1.msra.mxu0 0.0
          %2540 = vmatprep.subr.mxu0 0.0
          %2541 = vmatpush1.msra.mxu0 0.0
          %2542 = vmatprep.subr.mxu0 0.0
          %2543 = vmatpush1.msra.mxu0 0.0
          %2544 = vmatprep.subr.mxu0 0.0
          %2545 = vmatpush1.msra.mxu0 0.0
          %2546 = vmatprep.subr.mxu0 0.0
          %2547 = vmatpush1.msra.mxu0 0.0
          %2548 = vmatprep.subr.mxu0 0.0
          %2549 = vmatpush1.msra.mxu0 0.0
          %2550 = vmatprep.subr.mxu0 0.0
          %2551 = vmatpush1.msra.mxu0 0.0
          %2552 = vmatprep.subr.mxu0 0.0
          %2553 = vmatpush1.msra.mxu0 0.0
          %2554 = vmatprep.subr.mxu0 0.0
          %2555 = vmatpush1.msra.mxu0 0.0
          %2556 = vmatprep.subr.mxu0 0.0
          %2557 = vmatpush1.msra.mxu0 0.0
          %2558 = vmatprep.subr.mxu0 0.0
          %2559 = vmatpush1.msra.mxu0 0.0
          %2560 = vmatprep.subr.mxu0 0.0
          %2561 = vmatpush1.msra.mxu0 0.0
          %2562 = vmatprep.subr.mxu0 0.0
          %2563 = vmatpush1.msra.mxu0 0.0
          %2564 = vmatprep.subr.mxu0 0.0
          %2565 = vmatpush1.msra.mxu0 0.0
          %2566 = vmatprep.subr.mxu0 0.0
          %2567 = vmatpush1.msra.mxu0 0.0
          %2568 = vmatprep.subr.mxu0 0.0
          %2569 = vmatpush1.msra.mxu0 0.0
          %2570 = vmatprep.mubr.f32.mxu0 0.0
          %2571 = vmatmul.mubr.f32.gmra.mrb[0].mxu0 %v2486
          %v2572 = vpop.f32.mrb[0].mxu0
          %v2573 = vadd.f32 0.0, %v2572
          %v2574 = vpop.f32.mrb[0].mxu0
          %2575 = vmatprep.mubr.f32.mxu0 0.0
          %2576 = vmatmul.mubr.f32.gmra.mrb[0].mxu0 %v2487
          %v2577 = vpop.f32.mrb[0].mxu0
          %v2578 = vadd.f32 0.0, %v2577
          %v2579 = vpop.f32.mrb[0].mxu0
          %2580 = vmatprep.mubr.f32.mxu0 0.0
          %2581 = vmatmul.mubr.f32.gmra.mrb[0].mxu0 %v2488
          %v2582 = vpop.f32.mrb[0].mxu0
          %v2583 = vadd.f32 0.0, %v2582
          %v2584 = vpop.f32.mrb[0].mxu0
          %2585 = vmatprep.mubr.f32.mxu0 0.0
          %2586 = vmatmul.mubr.f32.gmra.mrb[0].mxu0 %v2489
          %v2587 = vpop.f32.mrb[0].mxu0
          %v2588 = vadd.f32 0.0, %v2587
          %v2589 = vpop.f32.mrb[0].mxu0
          %2590 = vdwg.mxu0
          %v2591 = vld [vmem:[%s1529] sm:$0xff]
          %v2592 = vld [vmem:[%s1529 + $0x8] sm:$0xff]
          %v2593 = vld [vmem:[%s1529 + $0x10] sm:$0xff]
          %v2594 = vld [vmem:[%s1529 + $0x18] sm:$0xff]
          %v2595 = vld [vmem:[%s1529 + $0x20] sm:$0xff]
          %v2596 = vld [vmem:[%s1529 + $0x28] sm:$0xff]
          %v2597 = vld [vmem:[%s1529 + $0x30] sm:$0xff]
          %v2598 = vld [vmem:[%s1529 + $0x38] sm:$0xff]
          %v2599 = vld [vmem:[%s1529 + $0x40] sm:$0xff]
          %v2600 = vld [vmem:[%s1529 + $0x48] sm:$0xff]
          %v2601 = vld [vmem:[%s1529 + $0x50] sm:$0xff]
          %v2602 = vld [vmem:[%s1529 + $0x58] sm:$0xff]
          %v2603 = vld [vmem:[%s1529 + $0x60] sm:$0xff]
          %v2604 = vld [vmem:[%s1529 + $0x68] sm:$0xff]
          %v2605 = vld [vmem:[%s1529 + $0x70] sm:$0xff]
          %v2606 = vld [vmem:[%s1529 + $0x78] sm:$0xff]
          %2607 = vmatprep.subr.mxu0 0.0
          %2608 = vmatpush1.msra.mxu0 %v2591
          %2609 = vmatprep.subr.mxu0 0.0
          %2610 = vmatpush1.msra.mxu0 %v2592
          %2611 = vmatprep.subr.mxu0 0.0
          %2612 = vmatpush1.msra.mxu0 %v2593
          %2613 = vmatprep.subr.mxu0 0.0
          %2614 = vmatpush1.msra.mxu0 %v2594
          %2615 = vmatprep.subr.mxu0 0.0
          %2616 = vmatpush1.msra.mxu0 %v2595
          %2617 = vmatprep.subr.mxu0 0.0
          %2618 = vmatpush1.msra.mxu0 %v2596
          %2619 = vmatprep.subr.mxu0 0.0
          %2620 = vmatpush1.msra.mxu0 %v2597
          %2621 = vmatprep.subr.mxu0 0.0
          %2622 = vmatpush1.msra.mxu0 %v2598
          %2623 = vmatprep.subr.mxu0 0.0
          %2624 = vmatpush1.msra.mxu0 %v2599
          %2625 = vmatprep.subr.mxu0 0.0
          %2626 = vmatpush1.msra.mxu0 %v2600
          %2627 = vmatprep.subr.mxu0 0.0
          %2628 = vmatpush1.msra.mxu0 %v2601
          %2629 = vmatprep.subr.mxu0 0.0
          %2630 = vmatpush1.msra.mxu0 %v2602
          %2631 = vmatprep.subr.mxu0 0.0
          %2632 = vmatpush1.msra.mxu0 %v2603
          %2633 = vmatprep.subr.mxu0 0.0
          %2634 = vmatpush1.msra.mxu0 %v2604
          %2635 = vmatprep.subr.mxu0 0.0
          %2636 = vmatpush1.msra.mxu0 %v2605
          %2637 = vmatprep.subr.mxu0 0.0
          %2638 = vmatpush1.msra.mxu0 %v2606
          %2639 = vmatprep.subr.mxu0 0.0
          %2640 = vmatpush1.msra.mxu0 0.0
          %2641 = vmatprep.subr.mxu0 0.0
          %2642 = vmatpush1.msra.mxu0 0.0
          %2643 = vmatprep.subr.mxu0 0.0
          %2644 = vmatpush1.msra.mxu0 0.0
          %2645 = vmatprep.subr.mxu0 0.0
          %2646 = vmatpush1.msra.mxu0 0.0
          %2647 = vmatprep.subr.mxu0 0.0
          %2648 = vmatpush1.msra.mxu0 0.0
          %2649 = vmatprep.subr.mxu0 0.0
          %2650 = vmatpush1.msra.mxu0 0.0
          %2651 = vmatprep.subr.mxu0 0.0
          %2652 = vmatpush1.msra.mxu0 0.0
          %2653 = vmatprep.subr.mxu0 0.0
          %2654 = vmatpush1.msra.mxu0 0.0
          %2655 = vmatprep.subr.mxu0 0.0
          %2656 = vmatpush1.msra.mxu0 0.0
          %2657 = vmatprep.subr.mxu0 0.0
          %2658 = vmatpush1.msra.mxu0 0.0
          %2659 = vmatprep.subr.mxu0 0.0
          %2660 = vmatpush1.msra.mxu0 0.0
          %2661 = vmatprep.subr.mxu0 0.0
          %2662 = vmatpush1.msra.mxu0 0.0
          %2663 = vmatprep.subr.mxu0 0.0
          %2664 = vmatpush1.msra.mxu0 0.0
          %2665 = vmatprep.subr.mxu0 0.0
          %2666 = vmatpush1.msra.mxu0 0.0
          %2667 = vmatprep.subr.mxu0 0.0
          %2668 = vmatpush1.msra.mxu0 0.0
          %2669 = vmatprep.subr.mxu0 0.0
          %2670 = vmatpush1.msra.mxu0 0.0
          %2671 = vmatprep.mubr.f32.mxu0 0.0
          %2672 = vmatmul.mubr.f32.gmra.mrb[0].mxu0 %v2486
          %v2673 = vpop.f32.mrb[0].mxu0
          %v2674 = vadd.f32 0.0, %v2673
          %v2675 = vpop.f32.mrb[0].mxu0
          %2676 = vmatprep.mubr.f32.mxu0 0.0
          %2677 = vmatmul.mubr.f32.gmra.mrb[0].mxu0 %v2487
          %v2678 = vpop.f32.mrb[0].mxu0
          %v2679 = vadd.f32 0.0, %v2678
          %v2680 = vpop.f32.mrb[0].mxu0
          %2681 = vmatprep.mubr.f32.mxu0 0.0
          %2682 = vmatmul.mubr.f32.gmra.mrb[0].mxu0 %v2488
          %v2683 = vpop.f32.mrb[0].mxu0
          %v2684 = vadd.f32 0.0, %v2683
          %v2685 = vpop.f32.mrb[0].mxu0
          %2686 = vmatprep.mubr.f32.mxu0 0.0
          %2687 = vmatmul.mubr.f32.gmra.mrb[0].mxu0 %v2489
          %v2688 = vpop.f32.mrb[0].mxu0
          %v2689 = vadd.f32 0.0, %v2688
          %v2690 = vpop.f32.mrb[0].mxu0
          %2691 = vdwg.mxu0
          %v2692 = vmax.f32 %v2573, %v2674
          %v2693 = vmax.f32 %v2578, %v2679
          %v2694 = vmax.f32 %v2583, %v2684
          %v2695 = vmax.f32 %v2588, %v2689
          %v2696 = vld [vmem:[#allocation2 + $0x40] sm:$0xff]
          %v2697 = vld [vmem:[#allocation2 + $0x48] sm:$0xff]
          %v2698 = vld [vmem:[#allocation2 + $0x50] sm:$0xff]
          %v2699 = vld [vmem:[#allocation2 + $0x58] sm:$0xff]
          %v2700 = vld [vmem:[#allocation2 + $0x60] sm:$0xff]
          %v2701 = vld [vmem:[#allocation2 + $0x68] sm:$0xff]
          %v2702 = vld [vmem:[#allocation2 + $0x70] sm:$0xff]
          %v2703 = vld [vmem:[#allocation2 + $0x78] sm:$0xff]
          %v2704 = vld [vmem:[%s195 + $0x40] sm:$0xff]
          %v2705 = vld [vmem:[%s195 + $0x48] sm:$0xff]
          %v2706 = vld [vmem:[%s195 + $0x50] sm:$0xff]
          %v2707 = vld [vmem:[%s195 + $0x58] sm:$0xff]
          %v2708 = vld [vmem:[%s195 + $0x60] sm:$0xff]
          %v2709 = vld [vmem:[%s195 + $0x68] sm:$0xff]
          %v2710 = vld [vmem:[%s195 + $0x70] sm:$0xff]
          %v2711 = vld [vmem:[%s195 + $0x78] sm:$0xff]
          %v2712 = vld [vmem:[%s647 + $0x40] sm:$0xff]
          %v2713 = vld [vmem:[%s647 + $0x48] sm:$0xff]
          %v2714 = vld [vmem:[%s647 + $0x50] sm:$0xff]
          %v2715 = vld [vmem:[%s647 + $0x58] sm:$0xff]
          %v2716 = vld [vmem:[%s647 + $0x60] sm:$0xff]
          %v2717 = vld [vmem:[%s647 + $0x68] sm:$0xff]
          %v2718 = vld [vmem:[%s647 + $0x70] sm:$0xff]
          %v2719 = vld [vmem:[%s647 + $0x78] sm:$0xff]
          %v2720 = vmul.f32 %v1578, %v2696
          %v2721 = vmul.f32 %v1578, %v2697
          %v2722 = vmul.f32 %v1578, %v2698
          %v2723 = vmul.f32 %v1578, %v2699
          %v2724 = vmul.f32 %v1578, %v2700
          %v2725 = vmul.f32 %v1578, %v2701
          %v2726 = vmul.f32 %v1578, %v2702
          %v2727 = vmul.f32 %v1578, %v2703
          %v2728 = vadd.f32 %v2720, 0.0
          %v2729 = vadd.f32 %v2721, 0.0
          %v2730 = vadd.f32 %v2722, 0.0
          %v2731 = vadd.f32 %v2723, 0.0
          %v2732 = vadd.f32 %v2724, 0.0
          %v2733 = vadd.f32 %v2725, 0.0
          %v2734 = vadd.f32 %v2726, 0.0
          %v2735 = vadd.f32 %v2727, 0.0
          %v2736 = vmul.f32 %v1597, %v2704
          %v2737 = vmul.f32 %v1597, %v2705
          %v2738 = vmul.f32 %v1597, %v2706
          %v2739 = vmul.f32 %v1597, %v2707
          %v2740 = vmul.f32 %v1597, %v2708
          %v2741 = vmul.f32 %v1597, %v2709
          %v2742 = vmul.f32 %v1597, %v2710
          %v2743 = vmul.f32 %v1597, %v2711
          %v2744 = vadd.f32 %v2728, %v2736
          %v2745 = vadd.f32 %v2729, %v2737
          %v2746 = vadd.f32 %v2730, %v2738
          %v2747 = vadd.f32 %v2731, %v2739
          %v2748 = vadd.f32 %v2732, %v2740
          %v2749 = vadd.f32 %v2733, %v2741
          %v2750 = vadd.f32 %v2734, %v2742
          %v2751 = vadd.f32 %v2735, %v2743
          %v2752 = vmul.f32 %v1616, %v2712
          %v2753 = vmul.f32 %v1616, %v2713
          %v2754 = vmul.f32 %v1616, %v2714
          %v2755 = vmul.f32 %v1616, %v2715
          %v2756 = vmul.f32 %v1616, %v2716
          %v2757 = vmul.f32 %v1616, %v2717
          %v2758 = vmul.f32 %v1616, %v2718
          %v2759 = vmul.f32 %v1616, %v2719
          %v2760 = vadd.f32 %v2744, %v2752
          %v2761 = vadd.f32 %v2745, %v2753
          %v2762 = vadd.f32 %v2746, %v2754
          %v2763 = vadd.f32 %v2747, %v2755
          %v2764 = vadd.f32 %v2748, %v2756
          %v2765 = vadd.f32 %v2749, %v2757
          %v2766 = vadd.f32 %v2750, %v2758
          %v2767 = vadd.f32 %v2751, %v2759
          %v2768 = vld [vmem:[#allocation2 + $0x41] sm:$0xff]
          %v2769 = vld [vmem:[#allocation2 + $0x49] sm:$0xff]
          %v2770 = vld [vmem:[#allocation2 + $0x51] sm:$0xff]
          %v2771 = vld [vmem:[#allocation2 + $0x59] sm:$0xff]
          %v2772 = vld [vmem:[#allocation2 + $0x61] sm:$0xff]
          %v2773 = vld [vmem:[#allocation2 + $0x69] sm:$0xff]
          %v2774 = vld [vmem:[#allocation2 + $0x71] sm:$0xff]
          %v2775 = vld [vmem:[#allocation2 + $0x79] sm:$0xff]
          %v2776 = vld [vmem:[%s195 + $0x41] sm:$0xff]
          %v2777 = vld [vmem:[%s195 + $0x49] sm:$0xff]
          %v2778 = vld [vmem:[%s195 + $0x51] sm:$0xff]
          %v2779 = vld [vmem:[%s195 + $0x59] sm:$0xff]
          %v2780 = vld [vmem:[%s195 + $0x61] sm:$0xff]
          %v2781 = vld [vmem:[%s195 + $0x69] sm:$0xff]
          %v2782 = vld [vmem:[%s195 + $0x71] sm:$0xff]
          %v2783 = vld [vmem:[%s195 + $0x79] sm:$0xff]
          %v2784 = vld [vmem:[%s647 + $0x41] sm:$0xff]
          %v2785 = vld [vmem:[%s647 + $0x49] sm:$0xff]
          %v2786 = vld [vmem:[%s647 + $0x51] sm:$0xff]
          %v2787 = vld [vmem:[%s647 + $0x59] sm:$0xff]
          %v2788 = vld [vmem:[%s647 + $0x61] sm:$0xff]
          %v2789 = vld [vmem:[%s647 + $0x69] sm:$0xff]
          %v2790 = vld [vmem:[%s647 + $0x71] sm:$0xff]
          %v2791 = vld [vmem:[%s647 + $0x79] sm:$0xff]
          %v2792 = vmul.f32 %v1659, %v2768
          %v2793 = vmul.f32 %v1659, %v2769
          %v2794 = vmul.f32 %v1659, %v2770
          %v2795 = vmul.f32 %v1659, %v2771
          %v2796 = vmul.f32 %v1659, %v2772
          %v2797 = vmul.f32 %v1659, %v2773
          %v2798 = vmul.f32 %v1659, %v2774
          %v2799 = vmul.f32 %v1659, %v2775
          %v2800 = vadd.f32 %v2760, %v2792
          %v2801 = vadd.f32 %v2761, %v2793
          %v2802 = vadd.f32 %v2762, %v2794
          %v2803 = vadd.f32 %v2763, %v2795
          %v2804 = vadd.f32 %v2764, %v2796
          %v2805 = vadd.f32 %v2765, %v2797
          %v2806 = vadd.f32 %v2766, %v2798
          %v2807 = vadd.f32 %v2767, %v2799
          %v2808 = vmul.f32 %v1678, %v2776
          %v2809 = vmul.f32 %v1678, %v2777
          %v2810 = vmul.f32 %v1678, %v2778
          %v2811 = vmul.f32 %v1678, %v2779
          %v2812 = vmul.f32 %v1678, %v2780
          %v2813 = vmul.f32 %v1678, %v2781
          %v2814 = vmul.f32 %v1678, %v2782
          %v2815 = vmul.f32 %v1678, %v2783
          %v2816 = vadd.f32 %v2800, %v2808
          %v2817 = vadd.f32 %v2801, %v2809
          %v2818 = vadd.f32 %v2802, %v2810
          %v2819 = vadd.f32 %v2803, %v2811
          %v2820 = vadd.f32 %v2804, %v2812
          %v2821 = vadd.f32 %v2805, %v2813
          %v2822 = vadd.f32 %v2806, %v2814
          %v2823 = vadd.f32 %v2807, %v2815
          %v2824 = vmul.f32 %v1697, %v2784
          %v2825 = vmul.f32 %v1697, %v2785
          %v2826 = vmul.f32 %v1697, %v2786
          %v2827 = vmul.f32 %v1697, %v2787
          %v2828 = vmul.f32 %v1697, %v2788
          %v2829 = vmul.f32 %v1697, %v2789
          %v2830 = vmul.f32 %v1697, %v2790
          %v2831 = vmul.f32 %v1697, %v2791
          %v2832 = vadd.f32 %v2816, %v2824
          %v2833 = vadd.f32 %v2817, %v2825
          %v2834 = vadd.f32 %v2818, %v2826
          %v2835 = vadd.f32 %v2819, %v2827
          %v2836 = vadd.f32 %v2820, %v2828
          %v2837 = vadd.f32 %v2821, %v2829
          %v2838 = vadd.f32 %v2822, %v2830
          %v2839 = vadd.f32 %v2823, %v2831
          %v2840 = vld [vmem:[#allocation2 + $0x42] sm:$0xff]
          %v2841 = vld [vmem:[#allocation2 + $0x4a] sm:$0xff]
          %v2842 = vld [vmem:[#allocation2 + $0x52] sm:$0xff]
          %v2843 = vld [vmem:[#allocation2 + $0x5a] sm:$0xff]
          %v2844 = vld [vmem:[#allocation2 + $0x62] sm:$0xff]
          %v2845 = vld [vmem:[#allocation2 + $0x6a] sm:$0xff]
          %v2846 = vld [vmem:[#allocation2 + $0x72] sm:$0xff]
          %v2847 = vld [vmem:[#allocation2 + $0x7a] sm:$0xff]
          %v2848 = vld [vmem:[%s195 + $0x42] sm:$0xff]
          %v2849 = vld [vmem:[%s195 + $0x4a] sm:$0xff]
          %v2850 = vld [vmem:[%s195 + $0x52] sm:$0xff]
          %v2851 = vld [vmem:[%s195 + $0x5a] sm:$0xff]
          %v2852 = vld [vmem:[%s195 + $0x62] sm:$0xff]
          %v2853 = vld [vmem:[%s195 + $0x6a] sm:$0xff]
          %v2854 = vld [vmem:[%s195 + $0x72] sm:$0xff]
          %v2855 = vld [vmem:[%s195 + $0x7a] sm:$0xff]
          %v2856 = vld [vmem:[%s647 + $0x42] sm:$0xff]
          %v2857 = vld [vmem:[%s647 + $0x4a] sm:$0xff]
          %v2858 = vld [vmem:[%s647 + $0x52] sm:$0xff]
          %v2859 = vld [vmem:[%s647 + $0x5a] sm:$0xff]
          %v2860 = vld [vmem:[%s647 + $0x62] sm:$0xff]
          %v2861 = vld [vmem:[%s647 + $0x6a] sm:$0xff]
          %v2862 = vld [vmem:[%s647 + $0x72] sm:$0xff]
          %v2863 = vld [vmem:[%s647 + $0x7a] sm:$0xff]
          %v2864 = vmul.f32 %v1740, %v2840
          %v2865 = vmul.f32 %v1740, %v2841
          %v2866 = vmul.f32 %v1740, %v2842
          %v2867 = vmul.f32 %v1740, %v2843
          %v2868 = vmul.f32 %v1740, %v2844
          %v2869 = vmul.f32 %v1740, %v2845
          %v2870 = vmul.f32 %v1740, %v2846
          %v2871 = vmul.f32 %v1740, %v2847
          %v2872 = vadd.f32 %v2832, %v2864
          %v2873 = vadd.f32 %v2833, %v2865
          %v2874 = vadd.f32 %v2834, %v2866
          %v2875 = vadd.f32 %v2835, %v2867
          %v2876 = vadd.f32 %v2836, %v2868
          %v2877 = vadd.f32 %v2837, %v2869
          %v2878 = vadd.f32 %v2838, %v2870
          %v2879 = vadd.f32 %v2839, %v2871
          %v2880 = vmul.f32 %v1759, %v2848
          %v2881 = vmul.f32 %v1759, %v2849
          %v2882 = vmul.f32 %v1759, %v2850
          %v2883 = vmul.f32 %v1759, %v2851
          %v2884 = vmul.f32 %v1759, %v2852
          %v2885 = vmul.f32 %v1759, %v2853
          %v2886 = vmul.f32 %v1759, %v2854
          %v2887 = vmul.f32 %v1759, %v2855
          %v2888 = vadd.f32 %v2872, %v2880
          %v2889 = vadd.f32 %v2873, %v2881
          %v2890 = vadd.f32 %v2874, %v2882
          %v2891 = vadd.f32 %v2875, %v2883
          %v2892 = vadd.f32 %v2876, %v2884
          %v2893 = vadd.f32 %v2877, %v2885
          %v2894 = vadd.f32 %v2878, %v2886
          %v2895 = vadd.f32 %v2879, %v2887
          %v2896 = vmul.f32 %v1778, %v2856
          %v2897 = vmul.f32 %v1778, %v2857
          %v2898 = vmul.f32 %v1778, %v2858
          %v2899 = vmul.f32 %v1778, %v2859
          %v2900 = vmul.f32 %v1778, %v2860
          %v2901 = vmul.f32 %v1778, %v2861
          %v2902 = vmul.f32 %v1778, %v2862
          %v2903 = vmul.f32 %v1778, %v2863
          %v2904 = vadd.f32 %v2888, %v2896
          %v2905 = vadd.f32 %v2889, %v2897
          %v2906 = vadd.f32 %v2890, %v2898
          %v2907 = vadd.f32 %v2891, %v2899
          %v2908 = vadd.f32 %v2892, %v2900
          %v2909 = vadd.f32 %v2893, %v2901
          %v2910 = vadd.f32 %v2894, %v2902
          %v2911 = vadd.f32 %v2895, %v2903
          %v2912 = vld [vmem:[%s833 + $0x40] sm:$0xff]
          %v2913 = vld [vmem:[%s833 + $0x48] sm:$0xff]
          %v2914 = vld [vmem:[%s833 + $0x50] sm:$0xff]
          %v2915 = vld [vmem:[%s833 + $0x58] sm:$0xff]
          %v2916 = vld [vmem:[%s833 + $0x60] sm:$0xff]
          %v2917 = vld [vmem:[%s833 + $0x68] sm:$0xff]
          %v2918 = vld [vmem:[%s833 + $0x70] sm:$0xff]
          %v2919 = vld [vmem:[%s833 + $0x78] sm:$0xff]
          %v2920 = vld [vmem:[%s665 + $0x40] sm:$0xff]
          %v2921 = vld [vmem:[%s665 + $0x48] sm:$0xff]
          %v2922 = vld [vmem:[%s665 + $0x50] sm:$0xff]
          %v2923 = vld [vmem:[%s665 + $0x58] sm:$0xff]
          %v2924 = vld [vmem:[%s665 + $0x60] sm:$0xff]
          %v2925 = vld [vmem:[%s665 + $0x68] sm:$0xff]
          %v2926 = vld [vmem:[%s665 + $0x70] sm:$0xff]
          %v2927 = vld [vmem:[%s665 + $0x78] sm:$0xff]
          %v2928 = vld [vmem:[%s1001 + $0x40] sm:$0xff]
          %v2929 = vld [vmem:[%s1001 + $0x48] sm:$0xff]
          %v2930 = vld [vmem:[%s1001 + $0x50] sm:$0xff]
          %v2931 = vld [vmem:[%s1001 + $0x58] sm:$0xff]
          %v2932 = vld [vmem:[%s1001 + $0x60] sm:$0xff]
          %v2933 = vld [vmem:[%s1001 + $0x68] sm:$0xff]
          %v2934 = vld [vmem:[%s1001 + $0x70] sm:$0xff]
          %v2935 = vld [vmem:[%s1001 + $0x78] sm:$0xff]
          %v2936 = vmul.f32 %v1823, %v2912
          %v2937 = vmul.f32 %v1823, %v2913
          %v2938 = vmul.f32 %v1823, %v2914
          %v2939 = vmul.f32 %v1823, %v2915
          %v2940 = vmul.f32 %v1823, %v2916
          %v2941 = vmul.f32 %v1823, %v2917
          %v2942 = vmul.f32 %v1823, %v2918
          %v2943 = vmul.f32 %v1823, %v2919
          %v2944 = vadd.f32 %v2904, %v2936
          %v2945 = vadd.f32 %v2905, %v2937
          %v2946 = vadd.f32 %v2906, %v2938
          %v2947 = vadd.f32 %v2907, %v2939
          %v2948 = vadd.f32 %v2908, %v2940
          %v2949 = vadd.f32 %v2909, %v2941
          %v2950 = vadd.f32 %v2910, %v2942
          %v2951 = vadd.f32 %v2911, %v2943
          %v2952 = vmul.f32 %v1842, %v2920
          %v2953 = vmul.f32 %v1842, %v2921
          %v2954 = vmul.f32 %v1842, %v2922
          %v2955 = vmul.f32 %v1842, %v2923
          %v2956 = vmul.f32 %v1842, %v2924
          %v2957 = vmul.f32 %v1842, %v2925
          %v2958 = vmul.f32 %v1842, %v2926
          %v2959 = vmul.f32 %v1842, %v2927
          %v2960 = vadd.f32 %v2944, %v2952
          %v2961 = vadd.f32 %v2945, %v2953
          %v2962 = vadd.f32 %v2946, %v2954
          %v2963 = vadd.f32 %v2947, %v2955
          %v2964 = vadd.f32 %v2948, %v2956
          %v2965 = vadd.f32 %v2949, %v2957
          %v2966 = vadd.f32 %v2950, %v2958
          %v2967 = vadd.f32 %v2951, %v2959
          %v2968 = vmul.f32 %v1861, %v2928
          %v2969 = vmul.f32 %v1861, %v2929
          %v2970 = vmul.f32 %v1861, %v2930
          %v2971 = vmul.f32 %v1861, %v2931
          %v2972 = vmul.f32 %v1861, %v2932
          %v2973 = vmul.f32 %v1861, %v2933
          %v2974 = vmul.f32 %v1861, %v2934
          %v2975 = vmul.f32 %v1861, %v2935
          %v2976 = vadd.f32 %v2960, %v2968
          %v2977 = vadd.f32 %v2961, %v2969
          %v2978 = vadd.f32 %v2962, %v2970
          %v2979 = vadd.f32 %v2963, %v2971
          %v2980 = vadd.f32 %v2964, %v2972
          %v2981 = vadd.f32 %v2965, %v2973
          %v2982 = vadd.f32 %v2966, %v2974
          %v2983 = vadd.f32 %v2967, %v2975
          %v2984 = vld [vmem:[%s833 + $0x41] sm:$0xff]
          %v2985 = vld [vmem:[%s833 + $0x49] sm:$0xff]
          %v2986 = vld [vmem:[%s833 + $0x51] sm:$0xff]
          %v2987 = vld [vmem:[%s833 + $0x59] sm:$0xff]
          %v2988 = vld [vmem:[%s833 + $0x61] sm:$0xff]
          %v2989 = vld [vmem:[%s833 + $0x69] sm:$0xff]
          %v2990 = vld [vmem:[%s833 + $0x71] sm:$0xff]
          %v2991 = vld [vmem:[%s833 + $0x79] sm:$0xff]
          %v2992 = vld [vmem:[%s665 + $0x41] sm:$0xff]
          %v2993 = vld [vmem:[%s665 + $0x49] sm:$0xff]
          %v2994 = vld [vmem:[%s665 + $0x51] sm:$0xff]
          %v2995 = vld [vmem:[%s665 + $0x59] sm:$0xff]
          %v2996 = vld [vmem:[%s665 + $0x61] sm:$0xff]
          %v2997 = vld [vmem:[%s665 + $0x69] sm:$0xff]
          %v2998 = vld [vmem:[%s665 + $0x71] sm:$0xff]
          %v2999 = vld [vmem:[%s665 + $0x79] sm:$0xff]
          %v3000 = vld [vmem:[%s1001 + $0x41] sm:$0xff]
          %v3001 = vld [vmem:[%s1001 + $0x49] sm:$0xff]
          %v3002 = vld [vmem:[%s1001 + $0x51] sm:$0xff]
          %v3003 = vld [vmem:[%s1001 + $0x59] sm:$0xff]
          %v3004 = vld [vmem:[%s1001 + $0x61] sm:$0xff]
          %v3005 = vld [vmem:[%s1001 + $0x69] sm:$0xff]
          %v3006 = vld [vmem:[%s1001 + $0x71] sm:$0xff]
          %v3007 = vld [vmem:[%s1001 + $0x79] sm:$0xff]
          %v3008 = vmul.f32 %v1904, %v2984
          %v3009 = vmul.f32 %v1904, %v2985
          %v3010 = vmul.f32 %v1904, %v2986
          %v3011 = vmul.f32 %v1904, %v2987
          %v3012 = vmul.f32 %v1904, %v2988
          %v3013 = vmul.f32 %v1904, %v2989
          %v3014 = vmul.f32 %v1904, %v2990
          %v3015 = vmul.f32 %v1904, %v2991
          %v3016 = vadd.f32 %v2976, %v3008
          %v3017 = vadd.f32 %v2977, %v3009
          %v3018 = vadd.f32 %v2978, %v3010
          %v3019 = vadd.f32 %v2979, %v3011
          %v3020 = vadd.f32 %v2980, %v3012
          %v3021 = vadd.f32 %v2981, %v3013
          %v3022 = vadd.f32 %v2982, %v3014
          %v3023 = vadd.f32 %v2983, %v3015
          %v3024 = vmul.f32 %v1923, %v2992
          %v3025 = vmul.f32 %v1923, %v2993
          %v3026 = vmul.f32 %v1923, %v2994
          %v3027 = vmul.f32 %v1923, %v2995
          %v3028 = vmul.f32 %v1923, %v2996
          %v3029 = vmul.f32 %v1923, %v2997
          %v3030 = vmul.f32 %v1923, %v2998
          %v3031 = vmul.f32 %v1923, %v2999
          %v3032 = vadd.f32 %v3016, %v3024
          %v3033 = vadd.f32 %v3017, %v3025
          %v3034 = vadd.f32 %v3018, %v3026
          %v3035 = vadd.f32 %v3019, %v3027
          %v3036 = vadd.f32 %v3020, %v3028
          %v3037 = vadd.f32 %v3021, %v3029
          %v3038 = vadd.f32 %v3022, %v3030
          %v3039 = vadd.f32 %v3023, %v3031
          %v3040 = vmul.f32 %v1942, %v3000
          %v3041 = vmul.f32 %v1942, %v3001
          %v3042 = vmul.f32 %v1942, %v3002
          %v3043 = vmul.f32 %v1942, %v3003
          %v3044 = vmul.f32 %v1942, %v3004
          %v3045 = vmul.f32 %v1942, %v3005
          %v3046 = vmul.f32 %v1942, %v3006
          %v3047 = vmul.f32 %v1942, %v3007
          %v3048 = vadd.f32 %v3032, %v3040
          %v3049 = vadd.f32 %v3033, %v3041
          %v3050 = vadd.f32 %v3034, %v3042
          %v3051 = vadd.f32 %v3035, %v3043
          %v3052 = vadd.f32 %v3036, %v3044
          %v3053 = vadd.f32 %v3037, %v3045
          %v3054 = vadd.f32 %v3038, %v3046
          %v3055 = vadd.f32 %v3039, %v3047
          %v3056 = vld [vmem:[%s833 + $0x42] sm:$0xff]
          %v3057 = vld [vmem:[%s833 + $0x4a] sm:$0xff]
          %v3058 = vld [vmem:[%s833 + $0x52] sm:$0xff]
          %v3059 = vld [vmem:[%s833 + $0x5a] sm:$0xff]
          %v3060 = vld [vmem:[%s833 + $0x62] sm:$0xff]
          %v3061 = vld [vmem:[%s833 + $0x6a] sm:$0xff]
          %v3062 = vld [vmem:[%s833 + $0x72] sm:$0xff]
          %v3063 = vld [vmem:[%s833 + $0x7a] sm:$0xff]
          %v3064 = vld [vmem:[%s665 + $0x42] sm:$0xff]
          %v3065 = vld [vmem:[%s665 + $0x4a] sm:$0xff]
          %v3066 = vld [vmem:[%s665 + $0x52] sm:$0xff]
          %v3067 = vld [vmem:[%s665 + $0x5a] sm:$0xff]
          %v3068 = vld [vmem:[%s665 + $0x62] sm:$0xff]
          %v3069 = vld [vmem:[%s665 + $0x6a] sm:$0xff]
          %v3070 = vld [vmem:[%s665 + $0x72] sm:$0xff]
          %v3071 = vld [vmem:[%s665 + $0x7a] sm:$0xff]
          %v3072 = vld [vmem:[%s1001 + $0x42] sm:$0xff]
          %v3073 = vld [vmem:[%s1001 + $0x4a] sm:$0xff]
          %v3074 = vld [vmem:[%s1001 + $0x52] sm:$0xff]
          %v3075 = vld [vmem:[%s1001 + $0x5a] sm:$0xff]
          %v3076 = vld [vmem:[%s1001 + $0x62] sm:$0xff]
          %v3077 = vld [vmem:[%s1001 + $0x6a] sm:$0xff]
          %v3078 = vld [vmem:[%s1001 + $0x72] sm:$0xff]
          %v3079 = vld [vmem:[%s1001 + $0x7a] sm:$0xff]
          %v3080 = vmul.f32 %v1985, %v3056
          %v3081 = vmul.f32 %v1985, %v3057
          %v3082 = vmul.f32 %v1985, %v3058
          %v3083 = vmul.f32 %v1985, %v3059
          %v3084 = vmul.f32 %v1985, %v3060
          %v3085 = vmul.f32 %v1985, %v3061
          %v3086 = vmul.f32 %v1985, %v3062
          %v3087 = vmul.f32 %v1985, %v3063
          %v3088 = vadd.f32 %v3048, %v3080
          %v3089 = vadd.f32 %v3049, %v3081
          %v3090 = vadd.f32 %v3050, %v3082
          %v3091 = vadd.f32 %v3051, %v3083
          %v3092 = vadd.f32 %v3052, %v3084
          %v3093 = vadd.f32 %v3053, %v3085
          %v3094 = vadd.f32 %v3054, %v3086
          %v3095 = vadd.f32 %v3055, %v3087
          %v3096 = vmul.f32 %v2004, %v3064
          %v3097 = vmul.f32 %v2004, %v3065
          %v3098 = vmul.f32 %v2004, %v3066
          %v3099 = vmul.f32 %v2004, %v3067
          %v3100 = vmul.f32 %v2004, %v3068
          %v3101 = vmul.f32 %v2004, %v3069
          %v3102 = vmul.f32 %v2004, %v3070
          %v3103 = vmul.f32 %v2004, %v3071
          %v3104 = vadd.f32 %v3088, %v3096
          %v3105 = vadd.f32 %v3089, %v3097
          %v3106 = vadd.f32 %v3090, %v3098
          %v3107 = vadd.f32 %v3091, %v3099
          %v3108 = vadd.f32 %v3092, %v3100
          %v3109 = vadd.f32 %v3093, %v3101
          %v3110 = vadd.f32 %v3094, %v3102
          %v3111 = vadd.f32 %v3095, %v3103
          %v3112 = vmul.f32 %v2023, %v3072
          %v3113 = vmul.f32 %v2023, %v3073
          %v3114 = vmul.f32 %v2023, %v3074
          %v3115 = vmul.f32 %v2023, %v3075
          %v3116 = vmul.f32 %v2023, %v3076
          %v3117 = vmul.f32 %v2023, %v3077
          %v3118 = vmul.f32 %v2023, %v3078
          %v3119 = vmul.f32 %v2023, %v3079
          %v3120 = vadd.f32 %v3104, %v3112
          %v3121 = vadd.f32 %v3105, %v3113
          %v3122 = vadd.f32 %v3106, %v3114
          %v3123 = vadd.f32 %v3107, %v3115
          %v3124 = vadd.f32 %v3108, %v3116
          %v3125 = vadd.f32 %v3109, %v3117
          %v3126 = vadd.f32 %v3110, %v3118
          %v3127 = vadd.f32 %v3111, %v3119
          %v3128 = vld [vmem:[%s1187 + $0x40] sm:$0xff]
          %v3129 = vld [vmem:[%s1187 + $0x48] sm:$0xff]
          %v3130 = vld [vmem:[%s1187 + $0x50] sm:$0xff]
          %v3131 = vld [vmem:[%s1187 + $0x58] sm:$0xff]
          %v3132 = vld [vmem:[%s1187 + $0x60] sm:$0xff]
          %v3133 = vld [vmem:[%s1187 + $0x68] sm:$0xff]
          %v3134 = vld [vmem:[%s1187 + $0x70] sm:$0xff]
          %v3135 = vld [vmem:[%s1187 + $0x78] sm:$0xff]
          %v3136 = vld [vmem:[%s1019 + $0x40] sm:$0xff]
          %v3137 = vld [vmem:[%s1019 + $0x48] sm:$0xff]
          %v3138 = vld [vmem:[%s1019 + $0x50] sm:$0xff]
          %v3139 = vld [vmem:[%s1019 + $0x58] sm:$0xff]
          %v3140 = vld [vmem:[%s1019 + $0x60] sm:$0xff]
          %v3141 = vld [vmem:[%s1019 + $0x68] sm:$0xff]
          %v3142 = vld [vmem:[%s1019 + $0x70] sm:$0xff]
          %v3143 = vld [vmem:[%s1019 + $0x78] sm:$0xff]
          %v3144 = vld [vmem:[%s1355 + $0x40] sm:$0xff]
          %v3145 = vld [vmem:[%s1355 + $0x48] sm:$0xff]
          %v3146 = vld [vmem:[%s1355 + $0x50] sm:$0xff]
          %v3147 = vld [vmem:[%s1355 + $0x58] sm:$0xff]
          %v3148 = vld [vmem:[%s1355 + $0x60] sm:$0xff]
          %v3149 = vld [vmem:[%s1355 + $0x68] sm:$0xff]
          %v3150 = vld [vmem:[%s1355 + $0x70] sm:$0xff]
          %v3151 = vld [vmem:[%s1355 + $0x78] sm:$0xff]
          %v3152 = vmul.f32 %v2067, %v3128
          %v3153 = vmul.f32 %v2067, %v3129
          %v3154 = vmul.f32 %v2067, %v3130
          %v3155 = vmul.f32 %v2067, %v3131
          %v3156 = vmul.f32 %v2067, %v3132
          %v3157 = vmul.f32 %v2067, %v3133
          %v3158 = vmul.f32 %v2067, %v3134
          %v3159 = vmul.f32 %v2067, %v3135
          %v3160 = vadd.f32 %v3120, %v3152
          %v3161 = vadd.f32 %v3121, %v3153
          %v3162 = vadd.f32 %v3122, %v3154
          %v3163 = vadd.f32 %v3123, %v3155
          %v3164 = vadd.f32 %v3124, %v3156
          %v3165 = vadd.f32 %v3125, %v3157
          %v3166 = vadd.f32 %v3126, %v3158
          %v3167 = vadd.f32 %v3127, %v3159
          %v3168 = vmul.f32 %v2086, %v3136
          %v3169 = vmul.f32 %v2086, %v3137
          %v3170 = vmul.f32 %v2086, %v3138
          %v3171 = vmul.f32 %v2086, %v3139
          %v3172 = vmul.f32 %v2086, %v3140
          %v3173 = vmul.f32 %v2086, %v3141
          %v3174 = vmul.f32 %v2086, %v3142
          %v3175 = vmul.f32 %v2086, %v3143
          %v3176 = vadd.f32 %v3160, %v3168
          %v3177 = vadd.f32 %v3161, %v3169
          %v3178 = vadd.f32 %v3162, %v3170
          %v3179 = vadd.f32 %v3163, %v3171
          %v3180 = vadd.f32 %v3164, %v3172
          %v3181 = vadd.f32 %v3165, %v3173
          %v3182 = vadd.f32 %v3166, %v3174
          %v3183 = vadd.f32 %v3167, %v3175
          %v3184 = vmul.f32 %v2105, %v3144
          %v3185 = vmul.f32 %v2105, %v3145
          %v3186 = vmul.f32 %v2105, %v3146
          %v3187 = vmul.f32 %v2105, %v3147
          %v3188 = vmul.f32 %v2105, %v3148
          %v3189 = vmul.f32 %v2105, %v3149
          %v3190 = vmul.f32 %v2105, %v3150
          %v3191 = vmul.f32 %v2105, %v3151
          %v3192 = vadd.f32 %v3176, %v3184
          %v3193 = vadd.f32 %v3177, %v3185
          %v3194 = vadd.f32 %v3178, %v3186
          %v3195 = vadd.f32 %v3179, %v3187
          %v3196 = vadd.f32 %v3180, %v3188
          %v3197 = vadd.f32 %v3181, %v3189
          %v3198 = vadd.f32 %v3182, %v3190
          %v3199 = vadd.f32 %v3183, %v3191
          %v3200 = vld [vmem:[%s1187 + $0x41] sm:$0xff]
          %v3201 = vld [vmem:[%s1187 + $0x49] sm:$0xff]
          %v3202 = vld [vmem:[%s1187 + $0x51] sm:$0xff]
          %v3203 = vld [vmem:[%s1187 + $0x59] sm:$0xff]
          %v3204 = vld [vmem:[%s1187 + $0x61] sm:$0xff]
          %v3205 = vld [vmem:[%s1187 + $0x69] sm:$0xff]
          %v3206 = vld [vmem:[%s1187 + $0x71] sm:$0xff]
          %v3207 = vld [vmem:[%s1187 + $0x79] sm:$0xff]
          %v3208 = vld [vmem:[%s1019 + $0x41] sm:$0xff]
          %v3209 = vld [vmem:[%s1019 + $0x49] sm:$0xff]
          %v3210 = vld [vmem:[%s1019 + $0x51] sm:$0xff]
          %v3211 = vld [vmem:[%s1019 + $0x59] sm:$0xff]
          %v3212 = vld [vmem:[%s1019 + $0x61] sm:$0xff]
          %v3213 = vld [vmem:[%s1019 + $0x69] sm:$0xff]
          %v3214 = vld [vmem:[%s1019 + $0x71] sm:$0xff]
          %v3215 = vld [vmem:[%s1019 + $0x79] sm:$0xff]
          %v3216 = vld [vmem:[%s1355 + $0x41] sm:$0xff]
          %v3217 = vld [vmem:[%s1355 + $0x49] sm:$0xff]
          %v3218 = vld [vmem:[%s1355 + $0x51] sm:$0xff]
          %v3219 = vld [vmem:[%s1355 + $0x59] sm:$0xff]
          %v3220 = vld [vmem:[%s1355 + $0x61] sm:$0xff]
          %v3221 = vld [vmem:[%s1355 + $0x69] sm:$0xff]
          %v3222 = vld [vmem:[%s1355 + $0x71] sm:$0xff]
          %v3223 = vld [vmem:[%s1355 + $0x79] sm:$0xff]
          %v3224 = vmul.f32 %v2148, %v3200
          %v3225 = vmul.f32 %v2148, %v3201
          %v3226 = vmul.f32 %v2148, %v3202
          %v3227 = vmul.f32 %v2148, %v3203
          %v3228 = vmul.f32 %v2148, %v3204
          %v3229 = vmul.f32 %v2148, %v3205
          %v3230 = vmul.f32 %v2148, %v3206
          %v3231 = vmul.f32 %v2148, %v3207
          %v3232 = vadd.f32 %v3192, %v3224
          %v3233 = vadd.f32 %v3193, %v3225
          %v3234 = vadd.f32 %v3194, %v3226
          %v3235 = vadd.f32 %v3195, %v3227
          %v3236 = vadd.f32 %v3196, %v3228
          %v3237 = vadd.f32 %v3197, %v3229
          %v3238 = vadd.f32 %v3198, %v3230
          %v3239 = vadd.f32 %v3199, %v3231
          %v3240 = vmul.f32 %v2167, %v3208
          %v3241 = vmul.f32 %v2167, %v3209
          %v3242 = vmul.f32 %v2167, %v3210
          %v3243 = vmul.f32 %v2167, %v3211
          %v3244 = vmul.f32 %v2167, %v3212
          %v3245 = vmul.f32 %v2167, %v3213
          %v3246 = vmul.f32 %v2167, %v3214
          %v3247 = vmul.f32 %v2167, %v3215
          %v3248 = vadd.f32 %v3232, %v3240
          %v3249 = vadd.f32 %v3233, %v3241
          %v3250 = vadd.f32 %v3234, %v3242
          %v3251 = vadd.f32 %v3235, %v3243
          %v3252 = vadd.f32 %v3236, %v3244
          %v3253 = vadd.f32 %v3237, %v3245
          %v3254 = vadd.f32 %v3238, %v3246
          %v3255 = vadd.f32 %v3239, %v3247
          %v3256 = vmul.f32 %v2186, %v3216
          %v3257 = vmul.f32 %v2186, %v3217
          %v3258 = vmul.f32 %v2186, %v3218
          %v3259 = vmul.f32 %v2186, %v3219
          %v3260 = vmul.f32 %v2186, %v3220
          %v3261 = vmul.f32 %v2186, %v3221
          %v3262 = vmul.f32 %v2186, %v3222
          %v3263 = vmul.f32 %v2186, %v3223
          %v3264 = vadd.f32 %v3248, %v3256
          %v3265 = vadd.f32 %v3249, %v3257
          %v3266 = vadd.f32 %v3250, %v3258
          %v3267 = vadd.f32 %v3251, %v3259
          %v3268 = vadd.f32 %v3252, %v3260
          %v3269 = vadd.f32 %v3253, %v3261
          %v3270 = vadd.f32 %v3254, %v3262
          %v3271 = vadd.f32 %v3255, %v3263
          %v3272 = vld [vmem:[%s1187 + $0x42] sm:$0xff]
          %v3273 = vld [vmem:[%s1187 + $0x4a] sm:$0xff]
          %v3274 = vld [vmem:[%s1187 + $0x52] sm:$0xff]
          %v3275 = vld [vmem:[%s1187 + $0x5a] sm:$0xff]
          %v3276 = vld [vmem:[%s1187 + $0x62] sm:$0xff]
          %v3277 = vld [vmem:[%s1187 + $0x6a] sm:$0xff]
          %v3278 = vld [vmem:[%s1187 + $0x72] sm:$0xff]
          %v3279 = vld [vmem:[%s1187 + $0x7a] sm:$0xff]
          %v3280 = vld [vmem:[%s1019 + $0x42] sm:$0xff]
          %v3281 = vld [vmem:[%s1019 + $0x4a] sm:$0xff]
          %v3282 = vld [vmem:[%s1019 + $0x52] sm:$0xff]
          %v3283 = vld [vmem:[%s1019 + $0x5a] sm:$0xff]
          %v3284 = vld [vmem:[%s1019 + $0x62] sm:$0xff]
          %v3285 = vld [vmem:[%s1019 + $0x6a] sm:$0xff]
          %v3286 = vld [vmem:[%s1019 + $0x72] sm:$0xff]
          %v3287 = vld [vmem:[%s1019 + $0x7a] sm:$0xff]
          %v3288 = vld [vmem:[%s1355 + $0x42] sm:$0xff]
          %v3289 = vld [vmem:[%s1355 + $0x4a] sm:$0xff]
          %v3290 = vld [vmem:[%s1355 + $0x52] sm:$0xff]
          %v3291 = vld [vmem:[%s1355 + $0x5a] sm:$0xff]
          %v3292 = vld [vmem:[%s1355 + $0x62] sm:$0xff]
          %v3293 = vld [vmem:[%s1355 + $0x6a] sm:$0xff]
          %v3294 = vld [vmem:[%s1355 + $0x72] sm:$0xff]
          %v3295 = vld [vmem:[%s1355 + $0x7a] sm:$0xff]
          %v3296 = vmul.f32 %v2229, %v3272
          %v3297 = vmul.f32 %v2229, %v3273
          %v3298 = vmul.f32 %v2229, %v3274
          %v3299 = vmul.f32 %v2229, %v3275
          %v3300 = vmul.f32 %v2229, %v3276
          %v3301 = vmul.f32 %v2229, %v3277
          %v3302 = vmul.f32 %v2229, %v3278
          %v3303 = vmul.f32 %v2229, %v3279
          %v3304 = vadd.f32 %v3264, %v3296
          %v3305 = vadd.f32 %v3265, %v3297
          %v3306 = vadd.f32 %v3266, %v3298
          %v3307 = vadd.f32 %v3267, %v3299
          %v3308 = vadd.f32 %v3268, %v3300
          %v3309 = vadd.f32 %v3269, %v3301
          %v3310 = vadd.f32 %v3270, %v3302
          %v3311 = vadd.f32 %v3271, %v3303
          %v3312 = vmul.f32 %v2248, %v3280
          %v3313 = vmul.f32 %v2248, %v3281
          %v3314 = vmul.f32 %v2248, %v3282
          %v3315 = vmul.f32 %v2248, %v3283
          %v3316 = vmul.f32 %v2248, %v3284
          %v3317 = vmul.f32 %v2248, %v3285
          %v3318 = vmul.f32 %v2248, %v3286
          %v3319 = vmul.f32 %v2248, %v3287
          %v3320 = vadd.f32 %v3304, %v3312
          %v3321 = vadd.f32 %v3305, %v3313
          %v3322 = vadd.f32 %v3306, %v3314
          %v3323 = vadd.f32 %v3307, %v3315
          %v3324 = vadd.f32 %v3308, %v3316
          %v3325 = vadd.f32 %v3309, %v3317
          %v3326 = vadd.f32 %v3310, %v3318
          %v3327 = vadd.f32 %v3311, %v3319
          %v3328 = vmul.f32 %v2267, %v3288
          %v3329 = vmul.f32 %v2267, %v3289
          %v3330 = vmul.f32 %v2267, %v3290
          %v3331 = vmul.f32 %v2267, %v3291
          %v3332 = vmul.f32 %v2267, %v3292
          %v3333 = vmul.f32 %v2267, %v3293
          %v3334 = vmul.f32 %v2267, %v3294
          %v3335 = vmul.f32 %v2267, %v3295
          %v3336 = vadd.f32 %v3320, %v3328
          %v3337 = vadd.f32 %v3321, %v3329
          %v3338 = vadd.f32 %v3322, %v3330
          %v3339 = vadd.f32 %v3323, %v3331
          %v3340 = vadd.f32 %v3324, %v3332
          %v3341 = vadd.f32 %v3325, %v3333
          %v3342 = vadd.f32 %v3326, %v3334
          %v3343 = vadd.f32 %v3327, %v3335
          %3344 = vmatprep.subr.mxu0 0.0
          %3345 = vmatpush1.msra.mxu0 %v3336
          %3346 = vmatprep.subr.mxu0 0.0
          %3347 = vmatpush1.msra.mxu0 %v3337
          %3348 = vmatprep.subr.mxu0 0.0
          %3349 = vmatpush1.msra.mxu0 %v3338
          %3350 = vmatprep.subr.mxu0 0.0
          %3351 = vmatpush1.msra.mxu0 %v3339
          %3352 = vmatprep.subr.mxu0 0.0
          %3353 = vmatpush1.msra.mxu0 %v3340
          %3354 = vmatprep.subr.mxu0 0.0
          %3355 = vmatpush1.msra.mxu0 %v3341
          %3356 = vmatprep.subr.mxu0 0.0
          %3357 = vmatpush1.msra.mxu0 %v3342
          %3358 = vmatprep.subr.mxu0 0.0
          %3359 = vmatpush1.msra.mxu0 %v3343
          %3360 = vmatprep.subr.mxu0 0.0
          %3361 = vmatpush1.msra.mxu0 0.0
          %3362 = vmatprep.subr.mxu0 0.0
          %3363 = vmatpush1.msra.mxu0 0.0
          %3364 = vmatprep.subr.mxu0 0.0
          %3365 = vmatpush1.msra.mxu0 0.0
          %3366 = vmatprep.subr.mxu0 0.0
          %3367 = vmatpush1.msra.mxu0 0.0
          %3368 = vmatprep.subr.mxu0 0.0
          %3369 = vmatpush1.msra.mxu0 0.0
          %3370 = vmatprep.subr.mxu0 0.0
          %3371 = vmatpush1.msra.mxu0 0.0
          %3372 = vmatprep.subr.mxu0 0.0
          %3373 = vmatpush1.msra.mxu0 0.0
          %3374 = vmatprep.subr.mxu0 0.0
          %3375 = vmatpush1.msra.mxu0 0.0
          %3376 = vmatprep.subr.mxu0 0.0
          %3377 = vmatpush1.msra.mxu0 0.0
          %3378 = vmatprep.subr.mxu0 0.0
          %3379 = vmatpush1.msra.mxu0 0.0
          %3380 = vmatprep.subr.mxu0 0.0
          %3381 = vmatpush1.msra.mxu0 0.0
          %3382 = vmatprep.subr.mxu0 0.0
          %3383 = vmatpush1.msra.mxu0 0.0
          %3384 = vmatprep.subr.mxu0 0.0
          %3385 = vmatpush1.msra.mxu0 0.0
          %3386 = vmatprep.subr.mxu0 0.0
          %3387 = vmatpush1.msra.mxu0 0.0
          %3388 = vmatprep.subr.mxu0 0.0
          %3389 = vmatpush1.msra.mxu0 0.0
          %3390 = vmatprep.subr.mxu0 0.0
          %3391 = vmatpush1.msra.mxu0 0.0
          %3392 = vmatprep.subr.mxu0 0.0
          %3393 = vmatpush1.msra.mxu0 0.0
          %3394 = vmatprep.subr.mxu0 0.0
          %3395 = vmatpush1.msra.mxu0 0.0
          %3396 = vmatprep.subr.mxu0 0.0
          %3397 = vmatpush1.msra.mxu0 0.0
          %3398 = vmatprep.subr.mxu0 0.0
          %3399 = vmatpush1.msra.mxu0 0.0
          %3400 = vmatprep.subr.mxu0 0.0
          %3401 = vmatpush1.msra.mxu0 0.0
          %3402 = vmatprep.subr.mxu0 0.0
          %3403 = vmatpush1.msra.mxu0 0.0
          %3404 = vmatprep.subr.mxu0 0.0
          %3405 = vmatpush1.msra.mxu0 0.0
          %3406 = vmatprep.subr.mxu0 0.0
          %3407 = vmatpush1.msra.mxu0 0.0
          %3408 = vmatprep.mubr.f32.mxu0 0.0
          %3409 = vmatmul.mubr.f32.gmra.mrb[0].mxu0 %v2289
          %v3410 = vpop.f32.mrb[0].mxu0
          %v3411 = vadd.f32 0.0, %v3410
          %v3412 = vpop.f32.mrb[0].mxu0
          %3413 = vmatprep.mubr.f32.mxu0 0.0
          %3414 = vmatmul.mubr.f32.gmra.mrb[0].mxu0 %v2292
          %v3415 = vpop.f32.mrb[0].mxu0
          %v3416 = vadd.f32 0.0, %v3415
          %v3417 = vpop.f32.mrb[0].mxu0
          %3418 = vmatprep.mubr.f32.mxu0 0.0
          %3419 = vmatmul.mubr.f32.gmra.mrb[0].mxu0 %v2295
          %v3420 = vpop.f32.mrb[0].mxu0
          %v3421 = vadd.f32 0.0, %v3420
          %v3422 = vpop.f32.mrb[0].mxu0
          %3423 = vmatprep.mubr.f32.mxu0 0.0
          %3424 = vmatmul.mubr.f32.gmra.mrb[0].mxu0 %v2298
          %v3425 = vpop.f32.mrb[0].mxu0
          %v3426 = vadd.f32 0.0, %v3425
          %v3427 = vpop.f32.mrb[0].mxu0
          %3428 = vdwg.mxu0
          %3429 = vmatprep.subr.mxu0 0.0
          %3430 = vmatpush1.msra.mxu0 %v3336
          %3431 = vmatprep.subr.mxu0 0.0
          %3432 = vmatpush1.msra.mxu0 %v3337
          %3433 = vmatprep.subr.mxu0 0.0
          %3434 = vmatpush1.msra.mxu0 %v3338
          %3435 = vmatprep.subr.mxu0 0.0
          %3436 = vmatpush1.msra.mxu0 %v3339
          %3437 = vmatprep.subr.mxu0 0.0
          %3438 = vmatpush1.msra.mxu0 %v3340
          %3439 = vmatprep.subr.mxu0 0.0
          %3440 = vmatpush1.msra.mxu0 %v3341
          %3441 = vmatprep.subr.mxu0 0.0
          %3442 = vmatpush1.msra.mxu0 %v3342
          %3443 = vmatprep.subr.mxu0 0.0
          %3444 = vmatpush1.msra.mxu0 %v3343
          %3445 = vmatprep.subr.mxu0 0.0
          %3446 = vmatpush1.msra.mxu0 0.0
          %3447 = vmatprep.subr.mxu0 0.0
          %3448 = vmatpush1.msra.mxu0 0.0
          %3449 = vmatprep.subr.mxu0 0.0
          %3450 = vmatpush1.msra.mxu0 0.0
          %3451 = vmatprep.subr.mxu0 0.0
          %3452 = vmatpush1.msra.mxu0 0.0
          %3453 = vmatprep.subr.mxu0 0.0
          %3454 = vmatpush1.msra.mxu0 0.0
          %3455 = vmatprep.subr.mxu0 0.0
          %3456 = vmatpush1.msra.mxu0 0.0
          %3457 = vmatprep.subr.mxu0 0.0
          %3458 = vmatpush1.msra.mxu0 0.0
          %3459 = vmatprep.subr.mxu0 0.0
          %3460 = vmatpush1.msra.mxu0 0.0
          %3461 = vmatprep.subr.mxu0 0.0
          %3462 = vmatpush1.msra.mxu0 0.0
          %3463 = vmatprep.subr.mxu0 0.0
          %3464 = vmatpush1.msra.mxu0 0.0
          %3465 = vmatprep.subr.mxu0 0.0
          %3466 = vmatpush1.msra.mxu0 0.0
          %3467 = vmatprep.subr.mxu0 0.0
          %3468 = vmatpush1.msra.mxu0 0.0
          %3469 = vmatprep.subr.mxu0 0.0
          %3470 = vmatpush1.msra.mxu0 0.0
          %3471 = vmatprep.subr.mxu0 0.0
          %3472 = vmatpush1.msra.mxu0 0.0
          %3473 = vmatprep.subr.mxu0 0.0
          %3474 = vmatpush1.msra.mxu0 0.0
          %3475 = vmatprep.subr.mxu0 0.0
          %3476 = vmatpush1.msra.mxu0 0.0
          %3477 = vmatprep.subr.mxu0 0.0
          %3478 = vmatpush1.msra.mxu0 0.0
          %3479 = vmatprep.subr.mxu0 0.0
          %3480 = vmatpush1.msra.mxu0 0.0
          %3481 = vmatprep.subr.mxu0 0.0
          %3482 = vmatpush1.msra.mxu0 0.0
          %3483 = vmatprep.subr.mxu0 0.0
          %3484 = vmatpush1.msra.mxu0 0.0
          %3485 = vmatprep.subr.mxu0 0.0
          %3486 = vmatpush1.msra.mxu0 0.0
          %3487 = vmatprep.subr.mxu0 0.0
          %3488 = vmatpush1.msra.mxu0 0.0
          %3489 = vmatprep.subr.mxu0 0.0
          %3490 = vmatpush1.msra.mxu0 0.0
          %3491 = vmatprep.subr.mxu0 0.0
          %3492 = vmatpush1.msra.mxu0 0.0
          %3493 = vmatprep.mubr.f32.mxu0 0.0
          %3494 = vmatmul.mubr.f32.gmra.mrb[0].mxu0 %v2390
          %v3495 = vpop.f32.mrb[0].mxu0
          %v3496 = vadd.f32 0.0, %v3495
          %v3497 = vpop.f32.mrb[0].mxu0
          %3498 = vmatprep.mubr.f32.mxu0 0.0
          %3499 = vmatmul.mubr.f32.gmra.mrb[0].mxu0 %v2393
          %v3500 = vpop.f32.mrb[0].mxu0
          %v3501 = vadd.f32 0.0, %v3500
          %v3502 = vpop.f32.mrb[0].mxu0
          %3503 = vmatprep.mubr.f32.mxu0 0.0
          %3504 = vmatmul.mubr.f32.gmra.mrb[0].mxu0 %v2396
          %v3505 = vpop.f32.mrb[0].mxu0
          %v3506 = vadd.f32 0.0, %v3505
          %v3507 = vpop.f32.mrb[0].mxu0
          %3508 = vmatprep.mubr.f32.mxu0 0.0
          %3509 = vmatmul.mubr.f32.gmra.mrb[0].mxu0 %v2399
          %v3510 = vpop.f32.mrb[0].mxu0
          %v3511 = vadd.f32 0.0, %v3510
          %v3512 = vpop.f32.mrb[0].mxu0
          %3513 = vdwg.mxu0
          %v3514 = vmax.f32 %v3411, %v3496
          %v3515 = vmax.f32 %v3416, %v3501
          %v3516 = vmax.f32 %v3421, %v3506
          %v3517 = vmax.f32 %v3426, %v3511
          %3518 = vmatprep.subr.mxu0 0.0
          %3519 = vmatpush1.msra.mxu0 %v2490
          %3520 = vmatprep.subr.mxu0 0.0
          %3521 = vmatpush1.msra.mxu0 %v2491
          %3522 = vmatprep.subr.mxu0 0.0
          %3523 = vmatpush1.msra.mxu0 %v2492
          %3524 = vmatprep.subr.mxu0 0.0
          %3525 = vmatpush1.msra.mxu0 %v2493
          %3526 = vmatprep.subr.mxu0 0.0
          %3527 = vmatpush1.msra.mxu0 %v2494
          %3528 = vmatprep.subr.mxu0 0.0
          %3529 = vmatpush1.msra.mxu0 %v2495
          %3530 = vmatprep.subr.mxu0 0.0
          %3531 = vmatpush1.msra.mxu0 %v2496
          %3532 = vmatprep.subr.mxu0 0.0
          %3533 = vmatpush1.msra.mxu0 %v2497
          %3534 = vmatprep.subr.mxu0 0.0
          %3535 = vmatpush1.msra.mxu0 %v2498
          %3536 = vmatprep.subr.mxu0 0.0
          %3537 = vmatpush1.msra.mxu0 %v2499
          %3538 = vmatprep.subr.mxu0 0.0
          %3539 = vmatpush1.msra.mxu0 %v2500
          %3540 = vmatprep.subr.mxu0 0.0
          %3541 = vmatpush1.msra.mxu0 %v2501
          %3542 = vmatprep.subr.mxu0 0.0
          %3543 = vmatpush1.msra.mxu0 %v2502
          %3544 = vmatprep.subr.mxu0 0.0
          %3545 = vmatpush1.msra.mxu0 %v2503
          %3546 = vmatprep.subr.mxu0 0.0
          %3547 = vmatpush1.msra.mxu0 %v2504
          %3548 = vmatprep.subr.mxu0 0.0
          %3549 = vmatpush1.msra.mxu0 %v2505
          %3550 = vmatprep.subr.mxu0 0.0
          %3551 = vmatpush1.msra.mxu0 0.0
          %3552 = vmatprep.subr.mxu0 0.0
          %3553 = vmatpush1.msra.mxu0 0.0
          %3554 = vmatprep.subr.mxu0 0.0
          %3555 = vmatpush1.msra.mxu0 0.0
          %3556 = vmatprep.subr.mxu0 0.0
          %3557 = vmatpush1.msra.mxu0 0.0
          %3558 = vmatprep.subr.mxu0 0.0
          %3559 = vmatpush1.msra.mxu0 0.0
          %3560 = vmatprep.subr.mxu0 0.0
          %3561 = vmatpush1.msra.mxu0 0.0
          %3562 = vmatprep.subr.mxu0 0.0
          %3563 = vmatpush1.msra.mxu0 0.0
          %3564 = vmatprep.subr.mxu0 0.0
          %3565 = vmatpush1.msra.mxu0 0.0
          %3566 = vmatprep.subr.mxu0 0.0
          %3567 = vmatpush1.msra.mxu0 0.0
          %3568 = vmatprep.subr.mxu0 0.0
          %3569 = vmatpush1.msra.mxu0 0.0
          %3570 = vmatprep.subr.mxu0 0.0
          %3571 = vmatpush1.msra.mxu0 0.0
          %3572 = vmatprep.subr.mxu0 0.0
          %3573 = vmatpush1.msra.mxu0 0.0
          %3574 = vmatprep.subr.mxu0 0.0
          %3575 = vmatpush1.msra.mxu0 0.0
          %3576 = vmatprep.subr.mxu0 0.0
          %3577 = vmatpush1.msra.mxu0 0.0
          %3578 = vmatprep.subr.mxu0 0.0
          %3579 = vmatpush1.msra.mxu0 0.0
          %3580 = vmatprep.subr.mxu0 0.0
          %3581 = vmatpush1.msra.mxu0 0.0
          %3582 = vmatprep.mubr.f32.mxu0 0.0
          %3583 = vmatmul.mubr.f32.gmra.mrb[0].mxu0 %v3514
          %v3584 = vpop.f32.mrb[0].mxu0
          %v3585 = vadd.f32 0.0, %v3584
          %v3586 = vpop.f32.mrb[0].mxu0
          %3587 = vmatprep.mubr.f32.mxu0 0.0
          %3588 = vmatmul.mubr.f32.gmra.mrb[0].mxu0 %v3515
          %v3589 = vpop.f32.mrb[0].mxu0
          %v3590 = vadd.f32 0.0, %v3589
          %v3591 = vpop.f32.mrb[0].mxu0
          %3592 = vmatprep.mubr.f32.mxu0 0.0
          %3593 = vmatmul.mubr.f32.gmra.mrb[0].mxu0 %v3516
          %v3594 = vpop.f32.mrb[0].mxu0
          %v3595 = vadd.f32 0.0, %v3594
          %v3596 = vpop.f32.mrb[0].mxu0
          %3597 = vmatprep.mubr.f32.mxu0 0.0
          %3598 = vmatmul.mubr.f32.gmra.mrb[0].mxu0 %v3517
          %v3599 = vpop.f32.mrb[0].mxu0
          %v3600 = vadd.f32 0.0, %v3599
          %v3601 = vpop.f32.mrb[0].mxu0
          %3602 = vdwg.mxu0
          %3603 = vmatprep.subr.mxu0 0.0
          %3604 = vmatpush1.msra.mxu0 %v2591
          %3605 = vmatprep.subr.mxu0 0.0
          %3606 = vmatpush1.msra.mxu0 %v2592
          %3607 = vmatprep.subr.mxu0 0.0
          %3608 = vmatpush1.msra.mxu0 %v2593
          %3609 = vmatprep.subr.mxu0 0.0
          %3610 = vmatpush1.msra.mxu0 %v2594
          %3611 = vmatprep.subr.mxu0 0.0
          %3612 = vmatpush1.msra.mxu0 %v2595
          %3613 = vmatprep.subr.mxu0 0.0
          %3614 = vmatpush1.msra.mxu0 %v2596
          %3615 = vmatprep.subr.mxu0 0.0
          %3616 = vmatpush1.msra.mxu0 %v2597
          %3617 = vmatprep.subr.mxu0 0.0
          %3618 = vmatpush1.msra.mxu0 %v2598
          %3619 = vmatprep.subr.mxu0 0.0
          %3620 = vmatpush1.msra.mxu0 %v2599
          %3621 = vmatprep.subr.mxu0 0.0
          %3622 = vmatpush1.msra.mxu0 %v2600
          %3623 = vmatprep.subr.mxu0 0.0
          %3624 = vmatpush1.msra.mxu0 %v2601
          %3625 = vmatprep.subr.mxu0 0.0
          %3626 = vmatpush1.msra.mxu0 %v2602
          %3627 = vmatprep.subr.mxu0 0.0
          %3628 = vmatpush1.msra.mxu0 %v2603
          %3629 = vmatprep.subr.mxu0 0.0
          %3630 = vmatpush1.msra.mxu0 %v2604
          %3631 = vmatprep.subr.mxu0 0.0
          %3632 = vmatpush1.msra.mxu0 %v2605
          %3633 = vmatprep.subr.mxu0 0.0
          %3634 = vmatpush1.msra.mxu0 %v2606
          %3635 = vmatprep.subr.mxu0 0.0
          %3636 = vmatpush1.msra.mxu0 0.0
          %3637 = vmatprep.subr.mxu0 0.0
          %3638 = vmatpush1.msra.mxu0 0.0
          %3639 = vmatprep.subr.mxu0 0.0
          %3640 = vmatpush1.msra.mxu0 0.0
          %3641 = vmatprep.subr.mxu0 0.0
          %3642 = vmatpush1.msra.mxu0 0.0
          %3643 = vmatprep.subr.mxu0 0.0
          %3644 = vmatpush1.msra.mxu0 0.0
          %3645 = vmatprep.subr.mxu0 0.0
          %3646 = vmatpush1.msra.mxu0 0.0
          %3647 = vmatprep.subr.mxu0 0.0
          %3648 = vmatpush1.msra.mxu0 0.0
          %3649 = vmatprep.subr.mxu0 0.0
          %3650 = vmatpush1.msra.mxu0 0.0
          %3651 = vmatprep.subr.mxu0 0.0
          %3652 = vmatpush1.msra.mxu0 0.0
          %3653 = vmatprep.subr.mxu0 0.0
          %3654 = vmatpush1.msra.mxu0 0.0
          %3655 = vmatprep.subr.mxu0 0.0
          %3656 = vmatpush1.msra.mxu0 0.0
          %3657 = vmatprep.subr.mxu0 0.0
          %3658 = vmatpush1.msra.mxu0 0.0
          %3659 = vmatprep.subr.mxu0 0.0
          %3660 = vmatpush1.msra.mxu0 0.0
          %3661 = vmatprep.subr.mxu0 0.0
          %3662 = vmatpush1.msra.mxu0 0.0
          %3663 = vmatprep.subr.mxu0 0.0
          %3664 = vmatpush1.msra.mxu0 0.0
          %3665 = vmatprep.subr.mxu0 0.0
          %3666 = vmatpush1.msra.mxu0 0.0
          %3667 = vmatprep.mubr.f32.mxu0 0.0
          %3668 = vmatmul.mubr.f32.gmra.mrb[0].mxu0 %v3514
          %v3669 = vpop.f32.mrb[0].mxu0
          %v3670 = vadd.f32 0.0, %v3669
          %v3671 = vpop.f32.mrb[0].mxu0
          %3672 = vmatprep.mubr.f32.mxu0 0.0
          %3673 = vmatmul.mubr.f32.gmra.mrb[0].mxu0 %v3515
          %v3674 = vpop.f32.mrb[0].mxu0
          %v3675 = vadd.f32 0.0, %v3674
          %v3676 = vpop.f32.mrb[0].mxu0
          %3677 = vmatprep.mubr.f32.mxu0 0.0
          %3678 = vmatmul.mubr.f32.gmra.mrb[0].mxu0 %v3516
          %v3679 = vpop.f32.mrb[0].mxu0
          %v3680 = vadd.f32 0.0, %v3679
          %v3681 = vpop.f32.mrb[0].mxu0
          %3682 = vmatprep.mubr.f32.mxu0 0.0
          %3683 = vmatmul.mubr.f32.gmra.mrb[0].mxu0 %v3517
          %v3684 = vpop.f32.mrb[0].mxu0
          %v3685 = vadd.f32 0.0, %v3684
          %v3686 = vpop.f32.mrb[0].mxu0
          %3687 = vdwg.mxu0
          %v3688 = vmax.f32 %v3585, %v3670
          %v3689 = vmax.f32 %v3590, %v3675
          %v3690 = vmax.f32 %v3595, %v3680
          %v3691 = vmax.f32 %v3600, %v3685
          %s3692 = sld [smem:[#allocation8 + %s1547]]
          %v3693 = vstv %s3692
          %v3694 = vadd.f32 %v2692, %v3693
          %v3695 = vadd.f32 %v2693, %v3693
          %v3696 = vadd.f32 %v2694, %v3693
          %v3697 = vadd.f32 %v2695, %v3693
          %v3698 = vadd.f32 %v3688, %v3693
          %v3699 = vadd.f32 %v3689, %v3693
          %v3700 = vadd.f32 %v3690, %v3693
          %v3701 = vadd.f32 %v3691, %v3693
          %v3702 = vmax.f32 %v3694, 0.0
          %v3703 = vmax.f32 %v3695, 0.0
          %v3704 = vmax.f32 %v3696, 0.0
          %v3705 = vmax.f32 %v3697, 0.0
          %v3706 = vmax.f32 %v3698, 0.0
          %v3707 = vmax.f32 %v3699, 0.0
          %v3708 = vmax.f32 %v3700, 0.0
          %v3709 = vmax.f32 %v3701, 0.0
          %s3710 = smul.u32 %s1547, 64
          %s3711 = scalar_lea.vmem %s190, %s3710 [#allocation10]
          %3712 = vst.msk [vmem:[%s3711] sm:$0xff] %vm1389, %v3702
          %3713 = vst.msk [vmem:[%s3711 + $0x8] sm:$0xff] %vm1389, %v3703
          %3714 = vst.msk [vmem:[%s3711 + $0x10] sm:$0xff] %vm1389, %v3704
          %3715 = vst.msk [vmem:[%s3711 + $0x18] sm:$0xff] %vm1389, %v3705
          %3716 = vst.msk [vmem:[%s3711 + $0x20] sm:$0xff] %vm1389, %v3706
          %3717 = vst.msk [vmem:[%s3711 + $0x28] sm:$0xff] %vm1389, %v3707
          %3718 = vst.msk [vmem:[%s3711 + $0x30] sm:$0xff] %vm1389, %v3708
          %3719 = vst.msk [vmem:[%s3711 + $0x38] sm:$0xff] %vm1389, %v3709
        $region45: #{tpu_custom_call.1} parent=31 // loop_footer
          %s1551 = sadd.s32 1, %s1547
        $region46: #{tpu_custom_call.1} parent=31 // loop_footer_branch
          %1546 = sbr.rel target = $region42
        $region47: #{tpu_custom_call.1} parent=31 // loop_exit
          _
        %s3720 = sand.u32 %s95, 1
        %s3721 = scalar_lea.sflag [#allocation6], %s3720
        %s3722 = sand.u32 %s95, 1
        %s3723 = smul.addr %s3722, 768
        %s3724 = scalar_lea.vmem [#allocation10], %s3723
        // Predicated region
        $region48: #{tpu_custom_call.1} parent=31 // pred_check
          %p3725 = pneg %p105
        $region49: #{tpu_custom_call.1} parent=31 // pred_check_branch
          %3727 = sbr.rel (%p3725) target = $region51
        $region50: #{tpu_custom_call.1} parent=31 // pred_region
          %s3729 = ssub.s32 12288, 12288
          %3730 = vsyncadd %s3721, %s3729
          %s3731 = smul.addr %s19, 96
          %s3732 = smul.addr %s3731, 128
          %s3733 = scalar_lea.hbm %s3, %s3732
          %s3734 = sshll.u32 %s3724, 4
          %s3735 = int_to_ptr.vmem [resolvable:$true] %s3734
          %3740 = dma.vmem_to_hbm [thread:$0]  %s3735, 12288, %s3733, %s3721, 128, 128, 8
        $region51: #{tpu_custom_call.1} parent=31 // pred_fallthru
          _
      $region32: #{tpu_custom_call.1} parent=5 // pred_fallthru
        _
      %p3741 = scmp.le.s32.totalorder 2, %s14
      // Predicated region
      $region52: #{tpu_custom_call.1} parent=5 // pred_check
        %p3742 = pneg %p3741
      $region53: #{tpu_custom_call.1} parent=5 // pred_check_branch
        %3744 = sbr.rel (%p3742) target = $region55
      $region54: #{tpu_custom_call.1} parent=5 // pred_region
        %s3745 = ssub.s32 %s14, 2
        // Predicated region
        $region56: #{tpu_custom_call.1} parent=54 // pred_check
          %p3746 = pneg %p111
        $region57: #{tpu_custom_call.1} parent=54 // pred_check_branch
          %3748 = sbr.rel (%p3746) target = $region59
        $region58: #{tpu_custom_call.1} parent=54 // pred_region
          %s3749 = sand.u32 %s96, 1
          %s3750 = scalar_lea.sflag [#allocation6], %s3749
          %s3751 = sand.u32 %s96, 1
          %s3752 = smul.addr %s3751, 768
          %s3753 = scalar_lea.vmem [#allocation10], %s3752
          %3754 = dma.done %s3750, 12288
        $region59: #{tpu_custom_call.1} parent=54 // pred_fallthru
          _
      $region55: #{tpu_custom_call.1} parent=5 // pred_fallthru
        _
    $region6: #{tpu_custom_call.1} parent=1 // loop_footer
      %s18 = sadd.s32 1, %s14
    $region7: #{tpu_custom_call.1} parent=1 // loop_footer_branch
      %13 = sbr.rel target = $region3
    $region8: #{tpu_custom_call.1} parent=1 // loop_exit
      _
    %3755 = vsyncpa [#allocation6], 1
    %s3756 = scalar_lea.sflag [#allocation6], 1
    %3757 = vsyncpa %s3756, 1
    %3758 = vsyncpa [#allocation7], 1
    %s3759 = scalar_lea.sflag [#allocation7], 1
    %3760 = vsyncpa %s3759, 1
    %3761 = vsyncpa [#allocation9], 1

</llo_original>
